<compile_context>
chip_gen: v6e
topology: v6e:2x2x1
jax: 0.10.0
libtpu: 0.0.40
codegen_flags: <defaults>
</compile_context>

<pallas_src>
import functools

import jax
import jax.numpy as jnp
from jax import lax
from jax.experimental import pallas as pl
from jax.experimental.pallas import tpu as pltpu

_F32 = jnp.float32
_BF16 = jnp.bfloat16


# ----------------------------- in-kernel helpers -----------------------------
def _lstm_recurrence(gx_ref, whh_ref):
    """LSTM recurrence over precomputed input gates.

    gx_ref : (T, R, 4H) f32 ref, gx[t, r] = x[t, r] @ W_ih + b   (time-major)
    whh_ref: (H, 4H) bf16 ref
    Returns the final hidden state (R, H) f32.  PyTorch gate order i, f, g, o.
    """
    T, R, _ = gx_ref.shape
    H = whh_ref.shape[0]

    def step(t, carry):
        h, c = carry
        gates = gx_ref[t] + jnp.dot(h.astype(_BF16), whh_ref[...],
                                    preferred_element_type=_F32)   # (R, 4H)
        # whole-vreg nonlinearities + one lane select (avoids four 32-lane
        # sliced EUP calls per step)
        lane = lax.broadcasted_iota(jnp.int32, gates.shape, 1)
        act = jnp.where((lane >= 2 * H) & (lane < 3 * H),
                        jnp.tanh(gates), jax.nn.sigmoid(gates))
        i_g = act[:, 0 * H:1 * H]
        f_g = act[:, 1 * H:2 * H]
        g_g = act[:, 2 * H:3 * H]
        o_g = act[:, 3 * H:4 * H]
        c_new = f_g * c + i_g * g_g
        h_new = o_g * jnp.tanh(c_new)
        return h_new, c_new

    init = (jnp.zeros((R, H), _F32), jnp.zeros((R, H), _F32))
    h_fin, _ = lax.fori_loop(0, T, step, init, unroll=True)
    return h_fin


def _mm(x, w_ref):
    """bf16 MXU matmul with f32 accumulation."""
    return jnp.dot(x.astype(_BF16), w_ref[...], preferred_element_type=_F32)


# ------------------------------ fused kernel --------------------------------
def _relnet_kernel(s_gx_ref, q_gx_ref, s_whh_ref, q_whh_ref,
                   w1_s_ref, w1_t_ref, w1_q_ref, b1_ref,
                   w2_ref, b2_ref, w3_ref, b3_ref, w4_ref, b4_ref,
                   wf1_ref, bf1_ref, wf2_ref, bf2_ref, wf3_ref, bf3_ref,
                   out_ref):
    L = w1_t_ref.shape[0]             # story_len
    bt = q_gx_ref.shape[1]            # batch rows handled by this grid step
    G = w1_q_ref.shape[1]             # 256

    # ---- LSTM recurrences (serial, fully unrolled) --------------------------
    h_s = _lstm_recurrence(s_gx_ref, s_whh_ref)        # (bt*L, H)
    h_q = _lstm_recurrence(q_gx_ref, q_whh_ref)        # (bt, Q)

    # ---- g_theta layer 1, decomposed over the (i, j) pair structure ---------
    # z[b,i,j] = [h_s[b,i]@W_si + W_ti[i] + h_q[b]@W_q + b1]   (row term)
    #          + [h_s[b,j]@W_sj + W_tj[j]]                     (col term)
    # One wide matmul computes both W_si and W_sj contributions; the one-hot
    # tag contribution is just an (L, 512) row add.
    a = _mm(h_s, w1_s_ref).reshape(bt, L, 2 * G) + w1_t_ref[...][None]
    a_i = a[..., :G]                                            # (bt, L, G)
    a_j = a[..., G:]                                            # (bt, L, G)
    c_q = _mm(h_q, w1_q_ref) + b1_ref[...]                      # (bt, G)
    row = a_i + c_q[:, None, :]                                 # fold q + bias
    z = (jnp.broadcast_to(row[:, :, None, :], (bt, L, L, G))
         + jnp.broadcast_to(a_j[:, None, :, :], (bt, L, L, G)))
    h1 = jnp.maximum(z, 0.0).reshape(bt * L * L, G)

    def lin_relu(x, w_ref, b_ref):
        return jnp.maximum(_mm(x, w_ref) + b_ref[...], 0.0)

    # ---- g_theta layers 2-4 over all pair rows -------------------------------
    h2 = lin_relu(h1, w2_ref, b2_ref)
    h3 = lin_relu(h2, w3_ref, b3_ref)
    h4 = lin_relu(h3, w4_ref, b4_ref)                           # (bt*L*L, G)

    # ---- sum over the L*L ordered pairs (plain reduction) --------------------
    g_sum = jnp.sum(h4.reshape(bt, L * L, G), axis=1)           # (bt, G)

    # ---- f head; output is lane-padded to a multiple of 128 ------------------
    f1 = lin_relu(g_sum, wf1_ref, bf1_ref)
    f2 = lin_relu(f1, wf2_ref, bf2_ref)
    out_ref[...] = _mm(f2, wf3_ref) + bf3_ref[...]


# ------------------------------ full forward --------------------------------
def relation_net_forward(params, story, question, *, story_len, max_s_len,
                         story_hsz, question_hsz, answer_size):
    B = story.shape[0]
    L = story_len
    H = story_hsz
    Q = question_hsz
    T_s = max_s_len
    T_q = question.shape[1]
    emb = params["emb"]
    E = emb.shape[1]

    # batch tiling: up to 8 batch rows (=> up to 8*L*L g_theta pair rows) per
    # grid step; the grid axis is "parallel" so v7x can shard it over 2 TCs.
    BT = B if B <= 8 else 8
    B_pad = ((B + BT - 1) // BT) * BT
    grid = (B_pad // BT,)
    OUT_PAD = ((answer_size + 127) // 128) * 128

    # ---- XLA glue: embedding gather + hoisted LSTM input projections --------
    s_emb = jnp.take(emb, story.reshape(B * L, T_s), axis=0)   # (B*L, T_s, E)
    q_emb = jnp.take(emb, question, axis=0)                    # (B, T_q, E)

    # one big matmul per RNN instead of T tiny ones inside the recurrence
    s_gx = jnp.dot(s_emb.reshape(B * L * T_s, E), params["s_wih"]) + params["s_b"]
    q_gx = jnp.dot(q_emb.reshape(B * T_q, E), params["q_wih"]) + params["q_b"]

    # pad batch to the tile size, go time-major for the kernel
    s_gx = s_gx.reshape(B, L, T_s, 4 * H)
    s_gx = jnp.pad(s_gx, ((0, B_pad - B), (0, 0), (0, 0), (0, 0)))
    s_gx = jnp.transpose(s_gx.reshape(B_pad * L, T_s, 4 * H), (1, 0, 2))
    q_gx = q_gx.reshape(B, T_q, 4 * Q)
    q_gx = jnp.pad(q_gx, ((0, B_pad - B), (0, 0), (0, 0)))
    q_gx = jnp.transpose(q_gx, (1, 0, 2))

    # ---- weight prep: bf16 matmul operands, f32 biases/tags, split g1 -------
    cast = lambda w: w.astype(_BF16)
    wg1 = params["wg1"]                                        # (2H+2L+Q, 256)
    w1_si = wg1[0:H]
    w1_ti = wg1[H:H + L]
    w1_sj = wg1[H + L:2 * H + L]
    w1_tj = wg1[2 * H + L:2 * H + 2 * L]
    w1_q = wg1[2 * H + 2 * L:]
    # fuse the i / j column blocks: one (H, 512) MXU operand, one (L, 512) add
    w1_s = cast(jnp.concatenate([w1_si, w1_sj], axis=1))       # (H, 512) bf16
    w1_t = jnp.concatenate([w1_ti, w1_tj], axis=1)             # (L, 512) f32
    wf3_p = cast(jnp.pad(params["wf3"], ((0, 0), (0, OUT_PAD - answer_size))))
    bf3_p = jnp.pad(params["bf3"], ((0, 0), (0, OUT_PAD - answer_size)))

    args = (s_gx, q_gx, cast(params["s_whh"]), cast(params["q_whh"]),
            w1_s, w1_t, cast(w1_q), params["bg1"],
            cast(params["wg2"]), params["bg2"],
            cast(params["wg3"]), params["bg3"],
            cast(params["wg4"]), params["bg4"],
            cast(params["wf1"]), params["bf1"],
            cast(params["wf2"]), params["bf2"],
            wf3_p, bf3_p)

    def _full(x):
        # whole-array block, constant index map -> stays resident in VMEM
        return pl.BlockSpec(x.shape, lambda i: (0,) * x.ndim)

    in_specs = [
        pl.BlockSpec((T_s, BT * L, 4 * H), lambda i: (0, i, 0)),
        pl.BlockSpec((T_q, BT, 4 * Q), lambda i: (0, i, 0)),
    ] + [_full(a) for a in args[2:]]

    out = pl.pallas_call(
        _relnet_kernel,
        out_shape=jax.ShapeDtypeStruct((B_pad, OUT_PAD), _F32),
        grid=grid,
        in_specs=in_specs,
        out_specs=pl.BlockSpec((BT, OUT_PAD), lambda i: (i, 0)),
        compiler_params=pltpu.CompilerParams(
            dimension_semantics=("parallel",)),
    )(*args)
    return out[:B, :answer_size]


# ------------------------------ parameters ----------------------------------
def init_params(key, *, word_size, answer_size, story_len, emb_dim,
                story_hsz, question_hsz, stddev=0.1):
    ks = jax.random.split(key, 12)

    def normal(k, shape):
        return stddev * jax.random.normal(k, shape, dtype=jnp.float32)

    din_g = 2 * story_len + 2 * story_hsz + question_hsz
    z = lambda n: jnp.zeros((1, n), jnp.float32)
    # NOTE: s_b / q_b are the pre-summed PyTorch (b_ih + b_hh).
    return {
        "emb": normal(ks[0], (word_size, emb_dim)),
        "s_wih": normal(ks[1], (emb_dim, 4 * story_hsz)),
        "s_whh": normal(ks[2], (story_hsz, 4 * story_hsz)),
        "s_b": z(4 * story_hsz),
        "q_wih": normal(ks[3], (emb_dim, 4 * question_hsz)),
        "q_whh": normal(ks[4], (question_hsz, 4 * question_hsz)),
        "q_b": z(4 * question_hsz),
        "wg1": normal(ks[5], (din_g, 256)), "bg1": z(256),
        "wg2": normal(ks[6], (256, 256)), "bg2": z(256),
        "wg3": normal(ks[7], (256, 256)), "bg3": z(256),
        "wg4": normal(ks[8], (256, 256)), "bg4": z(256),
        "wf1": normal(ks[9], (256, 256)), "bf1": z(256),
        "wf2": normal(ks[10], (256, 512)), "bf2": z(512),
        "wf3": normal(ks[11], (512, answer_size)), "bf3": z(answer_size),
    }


if __name__ == "__main__":
    word_size = 50
    answer_size = 16
    max_s_len = 6
    max_q_len = 5
    story_len = 8
    emb_dim = 32
    story_hsz = 32
    question_hsz = 32
    bsz = 2

    key = jax.random.PRNGKey(0)
    pkey, skey, qkey = jax.random.split(key, 3)

    params = init_params(pkey, word_size=word_size, answer_size=answer_size,
                         story_len=story_len, emb_dim=emb_dim,
                         story_hsz=story_hsz, question_hsz=question_hsz)

    story = jax.random.randint(skey, (bsz, story_len, max_s_len), 0, word_size,
                               dtype=jnp.int32)
    question = jax.random.randint(qkey, (bsz, max_q_len), 0, word_size,
                                  dtype=jnp.int32)

    fwd = jax.jit(functools.partial(
        relation_net_forward, story_len=story_len, max_s_len=max_s_len,
        story_hsz=story_hsz, question_hsz=question_hsz,
        answer_size=answer_size))

    out = jax.block_until_ready(fwd(params, story, question))
    assert out.shape == (bsz, answer_size), out.shape
    assert out.dtype == jnp.float32
    assert bool(jnp.all(jnp.isfinite(out)))
    print("KERNEL_OK")
</pallas_src>

<mosaic_0001>
module attributes {stable_mosaic.version = 11 : i64} {
  func.func @_relnet_kernel(%arg0: i32, %arg1: memref<6x16x128xf32, #tpu.memory_space<vmem>>, %arg2: memref<5x2x128xf32, #tpu.memory_space<vmem>>, %arg3: memref<32x128xbf16, #tpu.memory_space<vmem>>, %arg4: memref<32x128xbf16, #tpu.memory_space<vmem>>, %arg5: memref<32x512xbf16, #tpu.memory_space<vmem>>, %arg6: memref<8x512xf32, #tpu.memory_space<vmem>>, %arg7: memref<32x256xbf16, #tpu.memory_space<vmem>>, %arg8: memref<1x256xf32, #tpu.memory_space<vmem>>, %arg9: memref<256x256xbf16, #tpu.memory_space<vmem>>, %arg10: memref<1x256xf32, #tpu.memory_space<vmem>>, %arg11: memref<256x256xbf16, #tpu.memory_space<vmem>>, %arg12: memref<1x256xf32, #tpu.memory_space<vmem>>, %arg13: memref<256x256xbf16, #tpu.memory_space<vmem>>, %arg14: memref<1x256xf32, #tpu.memory_space<vmem>>, %arg15: memref<256x256xbf16, #tpu.memory_space<vmem>>, %arg16: memref<1x256xf32, #tpu.memory_space<vmem>>, %arg17: memref<256x512xbf16, #tpu.memory_space<vmem>>, %arg18: memref<1x512xf32, #tpu.memory_space<vmem>>, %arg19: memref<512x128xbf16, #tpu.memory_space<vmem>>, %arg20: memref<1x128xf32, #tpu.memory_space<vmem>>, %arg21: memref<2x128xf32, #tpu.memory_space<vmem>>) attributes {dimension_semantics = [#tpu.dimension_semantics<parallel>], iteration_bounds = array<i64: 1>, scalar_prefetch = 0 : i64, scratch_operands = 0 : i64, tpu.core_type = #tpu.core_type<tc>, window_params = [{transform_indices = @transform_0, window_bounds = array<i64: 6, 16, 128>}, {transform_indices = @transform_1, window_bounds = array<i64: 5, 2, 128>}, {pipeline_mode = #tpu.pipeline_mode<synchronous>, transform_indices = @transform_2, window_bounds = array<i64: 32, 128>}, {pipeline_mode = #tpu.pipeline_mode<synchronous>, transform_indices = @transform_3, window_bounds = array<i64: 32, 128>}, {pipeline_mode = #tpu.pipeline_mode<synchronous>, transform_indices = @transform_4, window_bounds = array<i64: 32, 512>}, {pipeline_mode = #tpu.pipeline_mode<synchronous>, transform_indices = @transform_5, window_bounds = array<i64: 8, 512>}, {pipeline_mode = #tpu.pipeline_mode<synchronous>, transform_indices = @transform_6, window_bounds = array<i64: 32, 256>}, {pipeline_mode = #tpu.pipeline_mode<synchronous>, transform_indices = @transform_7, window_bounds = array<i64: 1, 256>}, {pipeline_mode = #tpu.pipeline_mode<synchronous>, transform_indices = @transform_8, window_bounds = array<i64: 256, 256>}, {pipeline_mode = #tpu.pipeline_mode<synchronous>, transform_indices = @transform_9, window_bounds = array<i64: 1, 256>}, {pipeline_mode = #tpu.pipeline_mode<synchronous>, transform_indices = @transform_10, window_bounds = array<i64: 256, 256>}, {pipeline_mode = #tpu.pipeline_mode<synchronous>, transform_indices = @transform_11, window_bounds = array<i64: 1, 256>}, {pipeline_mode = #tpu.pipeline_mode<synchronous>, transform_indices = @transform_12, window_bounds = array<i64: 256, 256>}, {pipeline_mode = #tpu.pipeline_mode<synchronous>, transform_indices = @transform_13, window_bounds = array<i64: 1, 256>}, {pipeline_mode = #tpu.pipeline_mode<synchronous>, transform_indices = @transform_14, window_bounds = array<i64: 256, 256>}, {pipeline_mode = #tpu.pipeline_mode<synchronous>, transform_indices = @transform_15, window_bounds = array<i64: 1, 256>}, {pipeline_mode = #tpu.pipeline_mode<synchronous>, transform_indices = @transform_16, window_bounds = array<i64: 256, 512>}, {pipeline_mode = #tpu.pipeline_mode<synchronous>, transform_indices = @transform_17, window_bounds = array<i64: 1, 512>}, {pipeline_mode = #tpu.pipeline_mode<synchronous>, transform_indices = @transform_18, window_bounds = array<i64: 512, 128>}, {pipeline_mode = #tpu.pipeline_mode<synchronous>, transform_indices = @transform_19, window_bounds = array<i64: 1, 128>}, {transform_indices = @transform_20, window_bounds = array<i64: 2, 128>}]} {
    %cst = arith.constant 0.000000e+00 : f32
    %0 = vector.broadcast %cst : f32 to vector<16x32xf32>
    %cst_0 = arith.constant 0.000000e+00 : f32
    %1 = vector.broadcast %cst_0 : f32 to vector<16x32xf32>
    %c0_i32 = arith.constant 0 : i32
    %2 = arith.index_cast %c0_i32 : i32 to index
    %c0 = arith.constant 0 : index
    %c0_1 = arith.constant 0 : index
    %3 = vector.load %arg1[%2, %c0, %c0_1] : memref<6x16x128xf32, #tpu.memory_space<vmem>>, vector<1x16x128xf32>
    %4 = vector.shape_cast %3 : vector<1x16x128xf32> to vector<16x128xf32>
    %5 = arith.truncf %0 : vector<16x32xf32> to vector<16x32xbf16>
    %c0_2 = arith.constant 0 : index
    %c0_3 = arith.constant 0 : index
    %6 = vector.load %arg3[%c0_2, %c0_3] : memref<32x128xbf16, #tpu.memory_space<vmem>>, vector<32x128xbf16>
    %cst_4 = arith.constant dense<0.000000e+00> : vector<16x128xf32>
    %7 = tpu.matmul %5, %6, %cst_4 {dimension_numbers = #tpu.dot_dimension_numbers<[1], [0], [0], [1], [0, 0, 1, 1], [], []>} : vector<16x32xbf16>, vector<32x128xbf16>, vector<16x128xf32> -> vector<16x128xf32>
    %8 = arith.addf %4, %7 : vector<16x128xf32>
    %9 = tpu.iota {dimensions = array<i32: 1>} : vector<16x128xi32>
    %c64_i32 = arith.constant 64 : i32
    %10 = vector.broadcast %c64_i32 : i32 to vector<16x128xi32>
    %11 = arith.cmpi sge, %9, %10 : vector<16x128xi32>
    %c96_i32 = arith.constant 96 : i32
    %12 = vector.broadcast %c96_i32 : i32 to vector<16x128xi32>
    %13 = arith.cmpi slt, %9, %12 : vector<16x128xi32>
    %14 = arith.andi %11, %13 : vector<16x128xi1>
    %15 = math.tanh %8 : vector<16x128xf32>
    %16 = arith.negf %8 : vector<16x128xf32>
    %17 = math.exp %16 : vector<16x128xf32>
    %cst_5 = arith.constant 1.000000e+00 : f32
    %18 = vector.broadcast %cst_5 : f32 to vector<16x128xf32>
    %19 = arith.addf %18, %17 : vector<16x128xf32>
    %20 = arith.divf %18, %19 : vector<16x128xf32>
    %21 = arith.select %14, %15, %20 : vector<16x128xi1>, vector<16x128xf32>
    %22 = vector.extract_strided_slice %21 {offsets = [0, 0], sizes = [16, 32], strides = [1, 1]} : vector<16x128xf32> to vector<16x32xf32>
    %23 = vector.extract_strided_slice %21 {offsets = [0, 32], sizes = [16, 32], strides = [1, 1]} : vector<16x128xf32> to vector<16x32xf32>
    %24 = vector.extract_strided_slice %21 {offsets = [0, 64], sizes = [16, 32], strides = [1, 1]} : vector<16x128xf32> to vector<16x32xf32>
    %25 = vector.extract_strided_slice %21 {offsets = [0, 96], sizes = [16, 32], strides = [1, 1]} : vector<16x128xf32> to vector<16x32xf32>
    %26 = arith.mulf %23, %1 : vector<16x32xf32>
    %27 = arith.mulf %22, %24 : vector<16x32xf32>
    %28 = arith.addf %26, %27 : vector<16x32xf32>
    %29 = math.tanh %28 : vector<16x32xf32>
    %30 = arith.mulf %25, %29 : vector<16x32xf32>
    %c1_i32 = arith.constant 1 : i32
    %31 = arith.index_cast %c1_i32 : i32 to index
    %c0_6 = arith.constant 0 : index
    %c0_7 = arith.constant 0 : index
    %32 = vector.load %arg1[%31, %c0_6, %c0_7] : memref<6x16x128xf32, #tpu.memory_space<vmem>>, vector<1x16x128xf32>
    %33 = vector.shape_cast %32 : vector<1x16x128xf32> to vector<16x128xf32>
    %34 = arith.truncf %30 : vector<16x32xf32> to vector<16x32xbf16>
    %c0_8 = arith.constant 0 : index
    %c0_9 = arith.constant 0 : index
    %35 = vector.load %arg3[%c0_8, %c0_9] : memref<32x128xbf16, #tpu.memory_space<vmem>>, vector<32x128xbf16>
    %cst_10 = arith.constant dense<0.000000e+00> : vector<16x128xf32>
    %36 = tpu.matmul %34, %35, %cst_10 {dimension_numbers = #tpu.dot_dimension_numbers<[1], [0], [0], [1], [0, 0, 1, 1], [], []>} : vector<16x32xbf16>, vector<32x128xbf16>, vector<16x128xf32> -> vector<16x128xf32>
    %37 = arith.addf %33, %36 : vector<16x128xf32>
    %38 = tpu.iota {dimensions = array<i32: 1>} : vector<16x128xi32>
    %c64_i32_11 = arith.constant 64 : i32
    %39 = vector.broadcast %c64_i32_11 : i32 to vector<16x128xi32>
    %40 = arith.cmpi sge, %38, %39 : vector<16x128xi32>
    %c96_i32_12 = arith.constant 96 : i32
    %41 = vector.broadcast %c96_i32_12 : i32 to vector<16x128xi32>
    %42 = arith.cmpi slt, %38, %41 : vector<16x128xi32>
    %43 = arith.andi %40, %42 : vector<16x128xi1>
    %44 = math.tanh %37 : vector<16x128xf32>
    %45 = arith.negf %37 : vector<16x128xf32>
    %46 = math.exp %45 : vector<16x128xf32>
    %cst_13 = arith.constant 1.000000e+00 : f32
    %47 = vector.broadcast %cst_13 : f32 to vector<16x128xf32>
    %48 = arith.addf %47, %46 : vector<16x128xf32>
    %49 = arith.divf %47, %48 : vector<16x128xf32>
    %50 = arith.select %43, %44, %49 : vector<16x128xi1>, vector<16x128xf32>
    %51 = vector.extract_strided_slice %50 {offsets = [0, 0], sizes = [16, 32], strides = [1, 1]} : vector<16x128xf32> to vector<16x32xf32>
    %52 = vector.extract_strided_slice %50 {offsets = [0, 32], sizes = [16, 32], strides = [1, 1]} : vector<16x128xf32> to vector<16x32xf32>
    %53 = vector.extract_strided_slice %50 {offsets = [0, 64], sizes = [16, 32], strides = [1, 1]} : vector<16x128xf32> to vector<16x32xf32>
    %54 = vector.extract_strided_slice %50 {offsets = [0, 96], sizes = [16, 32], strides = [1, 1]} : vector<16x128xf32> to vector<16x32xf32>
    %55 = arith.mulf %52, %28 : vector<16x32xf32>
    %56 = arith.mulf %51, %53 : vector<16x32xf32>
    %57 = arith.addf %55, %56 : vector<16x32xf32>
    %58 = math.tanh %57 : vector<16x32xf32>
    %59 = arith.mulf %54, %58 : vector<16x32xf32>
    %c2_i32 = arith.constant 2 : i32
    %60 = arith.index_cast %c2_i32 : i32 to index
    %c0_14 = arith.constant 0 : index
    %c0_15 = arith.constant 0 : index
    %61 = vector.load %arg1[%60, %c0_14, %c0_15] : memref<6x16x128xf32, #tpu.memory_space<vmem>>, vector<1x16x128xf32>
    %62 = vector.shape_cast %61 : vector<1x16x128xf32> to vector<16x128xf32>
    %63 = arith.truncf %59 : vector<16x32xf32> to vector<16x32xbf16>
    %c0_16 = arith.constant 0 : index
    %c0_17 = arith.constant 0 : index
    %64 = vector.load %arg3[%c0_16, %c0_17] : memref<32x128xbf16, #tpu.memory_space<vmem>>, vector<32x128xbf16>
    %cst_18 = arith.constant dense<0.000000e+00> : vector<16x128xf32>
    %65 = tpu.matmul %63, %64, %cst_18 {dimension_numbers = #tpu.dot_dimension_numbers<[1], [0], [0], [1], [0, 0, 1, 1], [], []>} : vector<16x32xbf16>, vector<32x128xbf16>, vector<16x128xf32> -> vector<16x128xf32>
    %66 = arith.addf %62, %65 : vector<16x128xf32>
    %67 = tpu.iota {dimensions = array<i32: 1>} : vector<16x128xi32>
    %c64_i32_19 = arith.constant 64 : i32
    %68 = vector.broadcast %c64_i32_19 : i32 to vector<16x128xi32>
    %69 = arith.cmpi sge, %67, %68 : vector<16x128xi32>
    %c96_i32_20 = arith.constant 96 : i32
    %70 = vector.broadcast %c96_i32_20 : i32 to vector<16x128xi32>
    %71 = arith.cmpi slt, %67, %70 : vector<16x128xi32>
    %72 = arith.andi %69, %71 : vector<16x128xi1>
    %73 = math.tanh %66 : vector<16x128xf32>
    %74 = arith.negf %66 : vector<16x128xf32>
    %75 = math.exp %74 : vector<16x128xf32>
    %cst_21 = arith.constant 1.000000e+00 : f32
    %76 = vector.broadcast %cst_21 : f32 to vector<16x128xf32>
    %77 = arith.addf %76, %75 : vector<16x128xf32>
    %78 = arith.divf %76, %77 : vector<16x128xf32>
    %79 = arith.select %72, %73, %78 : vector<16x128xi1>, vector<16x128xf32>
    %80 = vector.extract_strided_slice %79 {offsets = [0, 0], sizes = [16, 32], strides = [1, 1]} : vector<16x128xf32> to vector<16x32xf32>
    %81 = vector.extract_strided_slice %79 {offsets = [0, 32], sizes = [16, 32], strides = [1, 1]} : vector<16x128xf32> to vector<16x32xf32>
    %82 = vector.extract_strided_slice %79 {offsets = [0, 64], sizes = [16, 32], strides = [1, 1]} : vector<16x128xf32> to vector<16x32xf32>
    %83 = vector.extract_strided_slice %79 {offsets = [0, 96], sizes = [16, 32], strides = [1, 1]} : vector<16x128xf32> to vector<16x32xf32>
    %84 = arith.mulf %81, %57 : vector<16x32xf32>
    %85 = arith.mulf %80, %82 : vector<16x32xf32>
    %86 = arith.addf %84, %85 : vector<16x32xf32>
    %87 = math.tanh %86 : vector<16x32xf32>
    %88 = arith.mulf %83, %87 : vector<16x32xf32>
    %c3_i32 = arith.constant 3 : i32
    %89 = arith.index_cast %c3_i32 : i32 to index
    %c0_22 = arith.constant 0 : index
    %c0_23 = arith.constant 0 : index
    %90 = vector.load %arg1[%89, %c0_22, %c0_23] : memref<6x16x128xf32, #tpu.memory_space<vmem>>, vector<1x16x128xf32>
    %91 = vector.shape_cast %90 : vector<1x16x128xf32> to vector<16x128xf32>
    %92 = arith.truncf %88 : vector<16x32xf32> to vector<16x32xbf16>
    %c0_24 = arith.constant 0 : index
    %c0_25 = arith.constant 0 : index
    %93 = vector.load %arg3[%c0_24, %c0_25] : memref<32x128xbf16, #tpu.memory_space<vmem>>, vector<32x128xbf16>
    %cst_26 = arith.constant dense<0.000000e+00> : vector<16x128xf32>
    %94 = tpu.matmul %92, %93, %cst_26 {dimension_numbers = #tpu.dot_dimension_numbers<[1], [0], [0], [1], [0, 0, 1, 1], [], []>} : vector<16x32xbf16>, vector<32x128xbf16>, vector<16x128xf32> -> vector<16x128xf32>
    %95 = arith.addf %91, %94 : vector<16x128xf32>
    %96 = tpu.iota {dimensions = array<i32: 1>} : vector<16x128xi32>
    %c64_i32_27 = arith.constant 64 : i32
    %97 = vector.broadcast %c64_i32_27 : i32 to vector<16x128xi32>
    %98 = arith.cmpi sge, %96, %97 : vector<16x128xi32>
    %c96_i32_28 = arith.constant 96 : i32
    %99 = vector.broadcast %c96_i32_28 : i32 to vector<16x128xi32>
    %100 = arith.cmpi slt, %96, %99 : vector<16x128xi32>
    %101 = arith.andi %98, %100 : vector<16x128xi1>
    %102 = math.tanh %95 : vector<16x128xf32>
    %103 = arith.negf %95 : vector<16x128xf32>
    %104 = math.exp %103 : vector<16x128xf32>
    %cst_29 = arith.constant 1.000000e+00 : f32
    %105 = vector.broadcast %cst_29 : f32 to vector<16x128xf32>
    %106 = arith.addf %105, %104 : vector<16x128xf32>
    %107 = arith.divf %105, %106 : vector<16x128xf32>
    %108 = arith.select %101, %102, %107 : vector<16x128xi1>, vector<16x128xf32>
    %109 = vector.extract_strided_slice %108 {offsets = [0, 0], sizes = [16, 32], strides = [1, 1]} : vector<16x128xf32> to vector<16x32xf32>
    %110 = vector.extract_strided_slice %108 {offsets = [0, 32], sizes = [16, 32], strides = [1, 1]} : vector<16x128xf32> to vector<16x32xf32>
    %111 = vector.extract_strided_slice %108 {offsets = [0, 64], sizes = [16, 32], strides = [1, 1]} : vector<16x128xf32> to vector<16x32xf32>
    %112 = vector.extract_strided_slice %108 {offsets = [0, 96], sizes = [16, 32], strides = [1, 1]} : vector<16x128xf32> to vector<16x32xf32>
    %113 = arith.mulf %110, %86 : vector<16x32xf32>
    %114 = arith.mulf %109, %111 : vector<16x32xf32>
    %115 = arith.addf %113, %114 : vector<16x32xf32>
    %116 = math.tanh %115 : vector<16x32xf32>
    %117 = arith.mulf %112, %116 : vector<16x32xf32>
    %c4_i32 = arith.constant 4 : i32
    %118 = arith.index_cast %c4_i32 : i32 to index
    %c0_30 = arith.constant 0 : index
    %c0_31 = arith.constant 0 : index
    %119 = vector.load %arg1[%118, %c0_30, %c0_31] : memref<6x16x128xf32, #tpu.memory_space<vmem>>, vector<1x16x128xf32>
    %120 = vector.shape_cast %119 : vector<1x16x128xf32> to vector<16x128xf32>
    %121 = arith.truncf %117 : vector<16x32xf32> to vector<16x32xbf16>
    %c0_32 = arith.constant 0 : index
    %c0_33 = arith.constant 0 : index
    %122 = vector.load %arg3[%c0_32, %c0_33] : memref<32x128xbf16, #tpu.memory_space<vmem>>, vector<32x128xbf16>
    %cst_34 = arith.constant dense<0.000000e+00> : vector<16x128xf32>
    %123 = tpu.matmul %121, %122, %cst_34 {dimension_numbers = #tpu.dot_dimension_numbers<[1], [0], [0], [1], [0, 0, 1, 1], [], []>} : vector<16x32xbf16>, vector<32x128xbf16>, vector<16x128xf32> -> vector<16x128xf32>
    %124 = arith.addf %120, %123 : vector<16x128xf32>
    %125 = tpu.iota {dimensions = array<i32: 1>} : vector<16x128xi32>
    %c64_i32_35 = arith.constant 64 : i32
    %126 = vector.broadcast %c64_i32_35 : i32 to vector<16x128xi32>
    %127 = arith.cmpi sge, %125, %126 : vector<16x128xi32>
    %c96_i32_36 = arith.constant 96 : i32
    %128 = vector.broadcast %c96_i32_36 : i32 to vector<16x128xi32>
    %129 = arith.cmpi slt, %125, %128 : vector<16x128xi32>
    %130 = arith.andi %127, %129 : vector<16x128xi1>
    %131 = math.tanh %124 : vector<16x128xf32>
    %132 = arith.negf %124 : vector<16x128xf32>
    %133 = math.exp %132 : vector<16x128xf32>
    %cst_37 = arith.constant 1.000000e+00 : f32
    %134 = vector.broadcast %cst_37 : f32 to vector<16x128xf32>
    %135 = arith.addf %134, %133 : vector<16x128xf32>
    %136 = arith.divf %134, %135 : vector<16x128xf32>
    %137 = arith.select %130, %131, %136 : vector<16x128xi1>, vector<16x128xf32>
    %138 = vector.extract_strided_slice %137 {offsets = [0, 0], sizes = [16, 32], strides = [1, 1]} : vector<16x128xf32> to vector<16x32xf32>
    %139 = vector.extract_strided_slice %137 {offsets = [0, 32], sizes = [16, 32], strides = [1, 1]} : vector<16x128xf32> to vector<16x32xf32>
    %140 = vector.extract_strided_slice %137 {offsets = [0, 64], sizes = [16, 32], strides = [1, 1]} : vector<16x128xf32> to vector<16x32xf32>
    %141 = vector.extract_strided_slice %137 {offsets = [0, 96], sizes = [16, 32], strides = [1, 1]} : vector<16x128xf32> to vector<16x32xf32>
    %142 = arith.mulf %139, %115 : vector<16x32xf32>
    %143 = arith.mulf %138, %140 : vector<16x32xf32>
    %144 = arith.addf %142, %143 : vector<16x32xf32>
    %145 = math.tanh %144 : vector<16x32xf32>
    %146 = arith.mulf %141, %145 : vector<16x32xf32>
    %c5_i32 = arith.constant 5 : i32
    %147 = arith.index_cast %c5_i32 : i32 to index
    %c0_38 = arith.constant 0 : index
    %c0_39 = arith.constant 0 : index
    %148 = vector.load %arg1[%147, %c0_38, %c0_39] : memref<6x16x128xf32, #tpu.memory_space<vmem>>, vector<1x16x128xf32>
    %149 = vector.shape_cast %148 : vector<1x16x128xf32> to vector<16x128xf32>
    %150 = arith.truncf %146 : vector<16x32xf32> to vector<16x32xbf16>
    %c0_40 = arith.constant 0 : index
    %c0_41 = arith.constant 0 : index
    %151 = vector.load %arg3[%c0_40, %c0_41] : memref<32x128xbf16, #tpu.memory_space<vmem>>, vector<32x128xbf16>
    %cst_42 = arith.constant dense<0.000000e+00> : vector<16x128xf32>
    %152 = tpu.matmul %150, %151, %cst_42 {dimension_numbers = #tpu.dot_dimension_numbers<[1], [0], [0], [1], [0, 0, 1, 1], [], []>} : vector<16x32xbf16>, vector<32x128xbf16>, vector<16x128xf32> -> vector<16x128xf32>
    %153 = arith.addf %149, %152 : vector<16x128xf32>
    %154 = tpu.iota {dimensions = array<i32: 1>} : vector<16x128xi32>
    %c64_i32_43 = arith.constant 64 : i32
    %155 = vector.broadcast %c64_i32_43 : i32 to vector<16x128xi32>
    %156 = arith.cmpi sge, %154, %155 : vector<16x128xi32>
    %c96_i32_44 = arith.constant 96 : i32
    %157 = vector.broadcast %c96_i32_44 : i32 to vector<16x128xi32>
    %158 = arith.cmpi slt, %154, %157 : vector<16x128xi32>
    %159 = arith.andi %156, %158 : vector<16x128xi1>
    %160 = math.tanh %153 : vector<16x128xf32>
    %161 = arith.negf %153 : vector<16x128xf32>
    %162 = math.exp %161 : vector<16x128xf32>
    %cst_45 = arith.constant 1.000000e+00 : f32
    %163 = vector.broadcast %cst_45 : f32 to vector<16x128xf32>
    %164 = arith.addf %163, %162 : vector<16x128xf32>
    %165 = arith.divf %163, %164 : vector<16x128xf32>
    %166 = arith.select %159, %160, %165 : vector<16x128xi1>, vector<16x128xf32>
    %167 = vector.extract_strided_slice %166 {offsets = [0, 0], sizes = [16, 32], strides = [1, 1]} : vector<16x128xf32> to vector<16x32xf32>
    %168 = vector.extract_strided_slice %166 {offsets = [0, 32], sizes = [16, 32], strides = [1, 1]} : vector<16x128xf32> to vector<16x32xf32>
    %169 = vector.extract_strided_slice %166 {offsets = [0, 64], sizes = [16, 32], strides = [1, 1]} : vector<16x128xf32> to vector<16x32xf32>
    %170 = vector.extract_strided_slice %166 {offsets = [0, 96], sizes = [16, 32], strides = [1, 1]} : vector<16x128xf32> to vector<16x32xf32>
    %171 = arith.mulf %168, %144 : vector<16x32xf32>
    %172 = arith.mulf %167, %169 : vector<16x32xf32>
    %173 = arith.addf %171, %172 : vector<16x32xf32>
    %174 = math.tanh %173 : vector<16x32xf32>
    %175 = arith.mulf %170, %174 : vector<16x32xf32>
    %c6_i32 = arith.constant 6 : i32
    %cst_46 = arith.constant 0.000000e+00 : f32
    %176 = vector.broadcast %cst_46 : f32 to vector<2x32xf32>
    %cst_47 = arith.constant 0.000000e+00 : f32
    %177 = vector.broadcast %cst_47 : f32 to vector<2x32xf32>
    %c0_i32_48 = arith.constant 0 : i32
    %178 = arith.index_cast %c0_i32_48 : i32 to index
    %c0_49 = arith.constant 0 : index
    %c0_50 = arith.constant 0 : index
    %179 = vector.load %arg2[%178, %c0_49, %c0_50] : memref<5x2x128xf32, #tpu.memory_space<vmem>>, vector<1x2x128xf32>
    %180 = vector.shape_cast %179 : vector<1x2x128xf32> to vector<2x128xf32>
    %181 = arith.truncf %176 : vector<2x32xf32> to vector<2x32xbf16>
    %c0_51 = arith.constant 0 : index
    %c0_52 = arith.constant 0 : index
    %182 = vector.load %arg4[%c0_51, %c0_52] : memref<32x128xbf16, #tpu.memory_space<vmem>>, vector<32x128xbf16>
    %cst_53 = arith.constant dense<0.000000e+00> : vector<2x128xf32>
    %183 = tpu.matmul %181, %182, %cst_53 {dimension_numbers = #tpu.dot_dimension_numbers<[1], [0], [0], [1], [0, 0, 1, 1], [], []>} : vector<2x32xbf16>, vector<32x128xbf16>, vector<2x128xf32> -> vector<2x128xf32>
    %184 = arith.addf %180, %183 : vector<2x128xf32>
    %185 = tpu.iota {dimensions = array<i32: 1>} : vector<2x128xi32>
    %c64_i32_54 = arith.constant 64 : i32
    %186 = vector.broadcast %c64_i32_54 : i32 to vector<2x128xi32>
    %187 = arith.cmpi sge, %185, %186 : vector<2x128xi32>
    %c96_i32_55 = arith.constant 96 : i32
    %188 = vector.broadcast %c96_i32_55 : i32 to vector<2x128xi32>
    %189 = arith.cmpi slt, %185, %188 : vector<2x128xi32>
    %190 = arith.andi %187, %189 : vector<2x128xi1>
    %191 = math.tanh %184 : vector<2x128xf32>
    %192 = arith.negf %184 : vector<2x128xf32>
    %193 = math.exp %192 : vector<2x128xf32>
    %cst_56 = arith.constant 1.000000e+00 : f32
    %194 = vector.broadcast %cst_56 : f32 to vector<2x128xf32>
    %195 = arith.addf %194, %193 : vector<2x128xf32>
    %196 = arith.divf %194, %195 : vector<2x128xf32>
    %197 = arith.select %190, %191, %196 : vector<2x128xi1>, vector<2x128xf32>
    %198 = vector.extract_strided_slice %197 {offsets = [0, 0], sizes = [2, 32], strides = [1, 1]} : vector<2x128xf32> to vector<2x32xf32>
    %199 = vector.extract_strided_slice %197 {offsets = [0, 32], sizes = [2, 32], strides = [1, 1]} : vector<2x128xf32> to vector<2x32xf32>
    %200 = vector.extract_strided_slice %197 {offsets = [0, 64], sizes = [2, 32], strides = [1, 1]} : vector<2x128xf32> to vector<2x32xf32>
    %201 = vector.extract_strided_slice %197 {offsets = [0, 96], sizes = [2, 32], strides = [1, 1]} : vector<2x128xf32> to vector<2x32xf32>
    %202 = arith.mulf %199, %177 : vector<2x32xf32>
    %203 = arith.mulf %198, %200 : vector<2x32xf32>
    %204 = arith.addf %202, %203 : vector<2x32xf32>
    %205 = math.tanh %204 : vector<2x32xf32>
    %206 = arith.mulf %201, %205 : vector<2x32xf32>
    %c1_i32_57 = arith.constant 1 : i32
    %207 = arith.index_cast %c1_i32_57 : i32 to index
    %c0_58 = arith.constant 0 : index
    %c0_59 = arith.constant 0 : index
    %208 = vector.load %arg2[%207, %c0_58, %c0_59] : memref<5x2x128xf32, #tpu.memory_space<vmem>>, vector<1x2x128xf32>
    %209 = vector.shape_cast %208 : vector<1x2x128xf32> to vector<2x128xf32>
    %210 = arith.truncf %206 : vector<2x32xf32> to vector<2x32xbf16>
    %c0_60 = arith.constant 0 : index
    %c0_61 = arith.constant 0 : index
    %211 = vector.load %arg4[%c0_60, %c0_61] : memref<32x128xbf16, #tpu.memory_space<vmem>>, vector<32x128xbf16>
    %cst_62 = arith.constant dense<0.000000e+00> : vector<2x128xf32>
    %212 = tpu.matmul %210, %211, %cst_62 {dimension_numbers = #tpu.dot_dimension_numbers<[1], [0], [0], [1], [0, 0, 1, 1], [], []>} : vector<2x32xbf16>, vector<32x128xbf16>, vector<2x128xf32> -> vector<2x128xf32>
    %213 = arith.addf %209, %212 : vector<2x128xf32>
    %214 = tpu.iota {dimensions = array<i32: 1>} : vector<2x128xi32>
    %c64_i32_63 = arith.constant 64 : i32
    %215 = vector.broadcast %c64_i32_63 : i32 to vector<2x128xi32>
    %216 = arith.cmpi sge, %214, %215 : vector<2x128xi32>
    %c96_i32_64 = arith.constant 96 : i32
    %217 = vector.broadcast %c96_i32_64 : i32 to vector<2x128xi32>
    %218 = arith.cmpi slt, %214, %217 : vector<2x128xi32>
    %219 = arith.andi %216, %218 : vector<2x128xi1>
    %220 = math.tanh %213 : vector<2x128xf32>
    %221 = arith.negf %213 : vector<2x128xf32>
    %222 = math.exp %221 : vector<2x128xf32>
    %cst_65 = arith.constant 1.000000e+00 : f32
    %223 = vector.broadcast %cst_65 : f32 to vector<2x128xf32>
    %224 = arith.addf %223, %222 : vector<2x128xf32>
    %225 = arith.divf %223, %224 : vector<2x128xf32>
    %226 = arith.select %219, %220, %225 : vector<2x128xi1>, vector<2x128xf32>
    %227 = vector.extract_strided_slice %226 {offsets = [0, 0], sizes = [2, 32], strides = [1, 1]} : vector<2x128xf32> to vector<2x32xf32>
    %228 = vector.extract_strided_slice %226 {offsets = [0, 32], sizes = [2, 32], strides = [1, 1]} : vector<2x128xf32> to vector<2x32xf32>
    %229 = vector.extract_strided_slice %226 {offsets = [0, 64], sizes = [2, 32], strides = [1, 1]} : vector<2x128xf32> to vector<2x32xf32>
    %230 = vector.extract_strided_slice %226 {offsets = [0, 96], sizes = [2, 32], strides = [1, 1]} : vector<2x128xf32> to vector<2x32xf32>
    %231 = arith.mulf %228, %204 : vector<2x32xf32>
    %232 = arith.mulf %227, %229 : vector<2x32xf32>
    %233 = arith.addf %231, %232 : vector<2x32xf32>
    %234 = math.tanh %233 : vector<2x32xf32>
    %235 = arith.mulf %230, %234 : vector<2x32xf32>
    %c2_i32_66 = arith.constant 2 : i32
    %236 = arith.index_cast %c2_i32_66 : i32 to index
    %c0_67 = arith.constant 0 : index
    %c0_68 = arith.constant 0 : index
    %237 = vector.load %arg2[%236, %c0_67, %c0_68] : memref<5x2x128xf32, #tpu.memory_space<vmem>>, vector<1x2x128xf32>
    %238 = vector.shape_cast %237 : vector<1x2x128xf32> to vector<2x128xf32>
    %239 = arith.truncf %235 : vector<2x32xf32> to vector<2x32xbf16>
    %c0_69 = arith.constant 0 : index
    %c0_70 = arith.constant 0 : index
    %240 = vector.load %arg4[%c0_69, %c0_70] : memref<32x128xbf16, #tpu.memory_space<vmem>>, vector<32x128xbf16>
    %cst_71 = arith.constant dense<0.000000e+00> : vector<2x128xf32>
    %241 = tpu.matmul %239, %240, %cst_71 {dimension_numbers = #tpu.dot_dimension_numbers<[1], [0], [0], [1], [0, 0, 1, 1], [], []>} : vector<2x32xbf16>, vector<32x128xbf16>, vector<2x128xf32> -> vector<2x128xf32>
    %242 = arith.addf %238, %241 : vector<2x128xf32>
    %243 = tpu.iota {dimensions = array<i32: 1>} : vector<2x128xi32>
    %c64_i32_72 = arith.constant 64 : i32
    %244 = vector.broadcast %c64_i32_72 : i32 to vector<2x128xi32>
    %245 = arith.cmpi sge, %243, %244 : vector<2x128xi32>
    %c96_i32_73 = arith.constant 96 : i32
    %246 = vector.broadcast %c96_i32_73 : i32 to vector<2x128xi32>
    %247 = arith.cmpi slt, %243, %246 : vector<2x128xi32>
    %248 = arith.andi %245, %247 : vector<2x128xi1>
    %249 = math.tanh %242 : vector<2x128xf32>
    %250 = arith.negf %242 : vector<2x128xf32>
    %251 = math.exp %250 : vector<2x128xf32>
    %cst_74 = arith.constant 1.000000e+00 : f32
    %252 = vector.broadcast %cst_74 : f32 to vector<2x128xf32>
    %253 = arith.addf %252, %251 : vector<2x128xf32>
    %254 = arith.divf %252, %253 : vector<2x128xf32>
    %255 = arith.select %248, %249, %254 : vector<2x128xi1>, vector<2x128xf32>
    %256 = vector.extract_strided_slice %255 {offsets = [0, 0], sizes = [2, 32], strides = [1, 1]} : vector<2x128xf32> to vector<2x32xf32>
    %257 = vector.extract_strided_slice %255 {offsets = [0, 32], sizes = [2, 32], strides = [1, 1]} : vector<2x128xf32> to vector<2x32xf32>
    %258 = vector.extract_strided_slice %255 {offsets = [0, 64], sizes = [2, 32], strides = [1, 1]} : vector<2x128xf32> to vector<2x32xf32>
    %259 = vector.extract_strided_slice %255 {offsets = [0, 96], sizes = [2, 32], strides = [1, 1]} : vector<2x128xf32> to vector<2x32xf32>
    %260 = arith.mulf %257, %233 : vector<2x32xf32>
    %261 = arith.mulf %256, %258 : vector<2x32xf32>
    %262 = arith.addf %260, %261 : vector<2x32xf32>
    %263 = math.tanh %262 : vector<2x32xf32>
    %264 = arith.mulf %259, %263 : vector<2x32xf32>
    %c3_i32_75 = arith.constant 3 : i32
    %265 = arith.index_cast %c3_i32_75 : i32 to index
    %c0_76 = arith.constant 0 : index
    %c0_77 = arith.constant 0 : index
    %266 = vector.load %arg2[%265, %c0_76, %c0_77] : memref<5x2x128xf32, #tpu.memory_space<vmem>>, vector<1x2x128xf32>
    %267 = vector.shape_cast %266 : vector<1x2x128xf32> to vector<2x128xf32>
    %268 = arith.truncf %264 : vector<2x32xf32> to vector<2x32xbf16>
    %c0_78 = arith.constant 0 : index
    %c0_79 = arith.constant 0 : index
    %269 = vector.load %arg4[%c0_78, %c0_79] : memref<32x128xbf16, #tpu.memory_space<vmem>>, vector<32x128xbf16>
    %cst_80 = arith.constant dense<0.000000e+00> : vector<2x128xf32>
    %270 = tpu.matmul %268, %269, %cst_80 {dimension_numbers = #tpu.dot_dimension_numbers<[1], [0], [0], [1], [0, 0, 1, 1], [], []>} : vector<2x32xbf16>, vector<32x128xbf16>, vector<2x128xf32> -> vector<2x128xf32>
    %271 = arith.addf %267, %270 : vector<2x128xf32>
    %272 = tpu.iota {dimensions = array<i32: 1>} : vector<2x128xi32>
    %c64_i32_81 = arith.constant 64 : i32
    %273 = vector.broadcast %c64_i32_81 : i32 to vector<2x128xi32>
    %274 = arith.cmpi sge, %272, %273 : vector<2x128xi32>
    %c96_i32_82 = arith.constant 96 : i32
    %275 = vector.broadcast %c96_i32_82 : i32 to vector<2x128xi32>
    %276 = arith.cmpi slt, %272, %275 : vector<2x128xi32>
    %277 = arith.andi %274, %276 : vector<2x128xi1>
    %278 = math.tanh %271 : vector<2x128xf32>
    %279 = arith.negf %271 : vector<2x128xf32>
    %280 = math.exp %279 : vector<2x128xf32>
    %cst_83 = arith.constant 1.000000e+00 : f32
    %281 = vector.broadcast %cst_83 : f32 to vector<2x128xf32>
    %282 = arith.addf %281, %280 : vector<2x128xf32>
    %283 = arith.divf %281, %282 : vector<2x128xf32>
    %284 = arith.select %277, %278, %283 : vector<2x128xi1>, vector<2x128xf32>
    %285 = vector.extract_strided_slice %284 {offsets = [0, 0], sizes = [2, 32], strides = [1, 1]} : vector<2x128xf32> to vector<2x32xf32>
    %286 = vector.extract_strided_slice %284 {offsets = [0, 32], sizes = [2, 32], strides = [1, 1]} : vector<2x128xf32> to vector<2x32xf32>
    %287 = vector.extract_strided_slice %284 {offsets = [0, 64], sizes = [2, 32], strides = [1, 1]} : vector<2x128xf32> to vector<2x32xf32>
    %288 = vector.extract_strided_slice %284 {offsets = [0, 96], sizes = [2, 32], strides = [1, 1]} : vector<2x128xf32> to vector<2x32xf32>
    %289 = arith.mulf %286, %262 : vector<2x32xf32>
    %290 = arith.mulf %285, %287 : vector<2x32xf32>
    %291 = arith.addf %289, %290 : vector<2x32xf32>
    %292 = math.tanh %291 : vector<2x32xf32>
    %293 = arith.mulf %288, %292 : vector<2x32xf32>
    %c4_i32_84 = arith.constant 4 : i32
    %294 = arith.index_cast %c4_i32_84 : i32 to index
    %c0_85 = arith.constant 0 : index
    %c0_86 = arith.constant 0 : index
    %295 = vector.load %arg2[%294, %c0_85, %c0_86] : memref<5x2x128xf32, #tpu.memory_space<vmem>>, vector<1x2x128xf32>
    %296 = vector.shape_cast %295 : vector<1x2x128xf32> to vector<2x128xf32>
    %297 = arith.truncf %293 : vector<2x32xf32> to vector<2x32xbf16>
    %c0_87 = arith.constant 0 : index
    %c0_88 = arith.constant 0 : index
    %298 = vector.load %arg4[%c0_87, %c0_88] : memref<32x128xbf16, #tpu.memory_space<vmem>>, vector<32x128xbf16>
    %cst_89 = arith.constant dense<0.000000e+00> : vector<2x128xf32>
    %299 = tpu.matmul %297, %298, %cst_89 {dimension_numbers = #tpu.dot_dimension_numbers<[1], [0], [0], [1], [0, 0, 1, 1], [], []>} : vector<2x32xbf16>, vector<32x128xbf16>, vector<2x128xf32> -> vector<2x128xf32>
    %300 = arith.addf %296, %299 : vector<2x128xf32>
    %301 = tpu.iota {dimensions = array<i32: 1>} : vector<2x128xi32>
    %c64_i32_90 = arith.constant 64 : i32
    %302 = vector.broadcast %c64_i32_90 : i32 to vector<2x128xi32>
    %303 = arith.cmpi sge, %301, %302 : vector<2x128xi32>
    %c96_i32_91 = arith.constant 96 : i32
    %304 = vector.broadcast %c96_i32_91 : i32 to vector<2x128xi32>
    %305 = arith.cmpi slt, %301, %304 : vector<2x128xi32>
    %306 = arith.andi %303, %305 : vector<2x128xi1>
    %307 = math.tanh %300 : vector<2x128xf32>
    %308 = arith.negf %300 : vector<2x128xf32>
    %309 = math.exp %308 : vector<2x128xf32>
    %cst_92 = arith.constant 1.000000e+00 : f32
    %310 = vector.broadcast %cst_92 : f32 to vector<2x128xf32>
    %311 = arith.addf %310, %309 : vector<2x128xf32>
    %312 = arith.divf %310, %311 : vector<2x128xf32>
    %313 = arith.select %306, %307, %312 : vector<2x128xi1>, vector<2x128xf32>
    %314 = vector.extract_strided_slice %313 {offsets = [0, 0], sizes = [2, 32], strides = [1, 1]} : vector<2x128xf32> to vector<2x32xf32>
    %315 = vector.extract_strided_slice %313 {offsets = [0, 32], sizes = [2, 32], strides = [1, 1]} : vector<2x128xf32> to vector<2x32xf32>
    %316 = vector.extract_strided_slice %313 {offsets = [0, 64], sizes = [2, 32], strides = [1, 1]} : vector<2x128xf32> to vector<2x32xf32>
    %317 = vector.extract_strided_slice %313 {offsets = [0, 96], sizes = [2, 32], strides = [1, 1]} : vector<2x128xf32> to vector<2x32xf32>
    %318 = arith.mulf %315, %291 : vector<2x32xf32>
    %319 = arith.mulf %314, %316 : vector<2x32xf32>
    %320 = arith.addf %318, %319 : vector<2x32xf32>
    %321 = math.tanh %320 : vector<2x32xf32>
    %322 = arith.mulf %317, %321 : vector<2x32xf32>
    %c5_i32_93 = arith.constant 5 : i32
    %323 = arith.truncf %175 : vector<16x32xf32> to vector<16x32xbf16>
    %c0_94 = arith.constant 0 : index
    %c0_95 = arith.constant 0 : index
    %324 = vector.load %arg5[%c0_94, %c0_95] : memref<32x512xbf16, #tpu.memory_space<vmem>>, vector<32x512xbf16>
    %cst_96 = arith.constant dense<0.000000e+00> : vector<16x512xf32>
    %325 = tpu.matmul %323, %324, %cst_96 {dimension_numbers = #tpu.dot_dimension_numbers<[1], [0], [0], [1], [0, 0, 1, 1], [], []>} : vector<16x32xbf16>, vector<32x512xbf16>, vector<16x512xf32> -> vector<16x512xf32>
    %326 = vector.shape_cast %325 : vector<16x512xf32> to vector<2x8x512xf32>
    %c0_97 = arith.constant 0 : index
    %c0_98 = arith.constant 0 : index
    %327 = vector.load %arg6[%c0_97, %c0_98] : memref<8x512xf32, #tpu.memory_space<vmem>>, vector<8x512xf32>
    %328 = vector.shape_cast %327 : vector<8x512xf32> to vector<1x8x512xf32>
    %329 = vector.broadcast %328 : vector<1x8x512xf32> to vector<2x8x512xf32>
    %330 = arith.addf %326, %329 : vector<2x8x512xf32>
    %331 = vector.extract_strided_slice %330 {offsets = [0, 0, 0], sizes = [2, 8, 256], strides = [1, 1, 1]} : vector<2x8x512xf32> to vector<2x8x256xf32>
    %332 = vector.extract_strided_slice %330 {offsets = [0, 0, 256], sizes = [2, 8, 256], strides = [1, 1, 1]} : vector<2x8x512xf32> to vector<2x8x256xf32>
    %333 = arith.truncf %322 : vector<2x32xf32> to vector<2x32xbf16>
    %c0_99 = arith.constant 0 : index
    %c0_100 = arith.constant 0 : index
    %334 = vector.load %arg7[%c0_99, %c0_100] : memref<32x256xbf16, #tpu.memory_space<vmem>>, vector<32x256xbf16>
    %cst_101 = arith.constant dense<0.000000e+00> : vector<2x256xf32>
    %335 = tpu.matmul %333, %334, %cst_101 {dimension_numbers = #tpu.dot_dimension_numbers<[1], [0], [0], [1], [0, 0, 1, 1], [], []>} : vector<2x32xbf16>, vector<32x256xbf16>, vector<2x256xf32> -> vector<2x256xf32>
    %c0_102 = arith.constant 0 : index
    %c0_103 = arith.constant 0 : index
    %336 = vector.load %arg8[%c0_102, %c0_103] : memref<1x256xf32, #tpu.memory_space<vmem>>, vector<1x256xf32>
    %337 = vector.broadcast %336 : vector<1x256xf32> to vector<2x256xf32>
    %338 = arith.addf %335, %337 : vector<2x256xf32>
    %339 = vector.shape_cast %338 : vector<2x256xf32> to vector<2x1x256xf32>
    %340 = vector.broadcast %339 : vector<2x1x256xf32> to vector<2x8x256xf32>
    %341 = arith.addf %331, %340 : vector<2x8x256xf32>
    %342 = vector.shape_cast %341 : vector<2x8x256xf32> to vector<2x8x1x256xf32>
    %343 = vector.shape_cast %342 : vector<2x8x1x256xf32> to vector<2x8x1x256xf32>
    %344 = vector.broadcast %343 : vector<2x8x1x256xf32> to vector<2x8x8x256xf32>
    %345 = vector.shape_cast %332 : vector<2x8x256xf32> to vector<2x1x8x256xf32>
    %346 = vector.shape_cast %345 : vector<2x1x8x256xf32> to vector<2x1x8x256xf32>
    %347 = vector.broadcast %346 : vector<2x1x8x256xf32> to vector<2x8x8x256xf32>
    %348 = arith.addf %344, %347 : vector<2x8x8x256xf32>
    %cst_104 = arith.constant 0.000000e+00 : f32
    %349 = vector.broadcast %cst_104 : f32 to vector<2x8x8x256xf32>
    %350 = arith.maximumf %348, %349 : vector<2x8x8x256xf32>
    %351 = vector.shape_cast %350 : vector<2x8x8x256xf32> to vector<128x256xf32>
    %352 = arith.truncf %351 : vector<128x256xf32> to vector<128x256xbf16>
    %c0_105 = arith.constant 0 : index
    %c0_106 = arith.constant 0 : index
    %353 = vector.load %arg9[%c0_105, %c0_106] : memref<256x256xbf16, #tpu.memory_space<vmem>>, vector<256x256xbf16>
    %cst_107 = arith.constant dense<0.000000e+00> : vector<128x256xf32>
    %354 = tpu.matmul %352, %353, %cst_107 {dimension_numbers = #tpu.dot_dimension_numbers<[1], [0], [0], [1], [0, 0, 1, 1], [], []>} : vector<128x256xbf16>, vector<256x256xbf16>, vector<128x256xf32> -> vector<128x256xf32>
    %c0_108 = arith.constant 0 : index
    %c0_109 = arith.constant 0 : index
    %355 = vector.load %arg10[%c0_108, %c0_109] : memref<1x256xf32, #tpu.memory_space<vmem>>, vector<1x256xf32>
    %356 = vector.broadcast %355 : vector<1x256xf32> to vector<128x256xf32>
    %357 = arith.addf %354, %356 : vector<128x256xf32>
    %cst_110 = arith.constant 0.000000e+00 : f32
    %358 = vector.broadcast %cst_110 : f32 to vector<128x256xf32>
    %359 = arith.maximumf %357, %358 : vector<128x256xf32>
    %360 = arith.truncf %359 : vector<128x256xf32> to vector<128x256xbf16>
    %c0_111 = arith.constant 0 : index
    %c0_112 = arith.constant 0 : index
    %361 = vector.load %arg11[%c0_111, %c0_112] : memref<256x256xbf16, #tpu.memory_space<vmem>>, vector<256x256xbf16>
    %cst_113 = arith.constant dense<0.000000e+00> : vector<128x256xf32>
    %362 = tpu.matmul %360, %361, %cst_113 {dimension_numbers = #tpu.dot_dimension_numbers<[1], [0], [0], [1], [0, 0, 1, 1], [], []>} : vector<128x256xbf16>, vector<256x256xbf16>, vector<128x256xf32> -> vector<128x256xf32>
    %c0_114 = arith.constant 0 : index
    %c0_115 = arith.constant 0 : index
    %363 = vector.load %arg12[%c0_114, %c0_115] : memref<1x256xf32, #tpu.memory_space<vmem>>, vector<1x256xf32>
    %364 = vector.broadcast %363 : vector<1x256xf32> to vector<128x256xf32>
    %365 = arith.addf %362, %364 : vector<128x256xf32>
    %cst_116 = arith.constant 0.000000e+00 : f32
    %366 = vector.broadcast %cst_116 : f32 to vector<128x256xf32>
    %367 = arith.maximumf %365, %366 : vector<128x256xf32>
    %368 = arith.truncf %367 : vector<128x256xf32> to vector<128x256xbf16>
    %c0_117 = arith.constant 0 : index
    %c0_118 = arith.constant 0 : index
    %369 = vector.load %arg13[%c0_117, %c0_118] : memref<256x256xbf16, #tpu.memory_space<vmem>>, vector<256x256xbf16>
    %cst_119 = arith.constant dense<0.000000e+00> : vector<128x256xf32>
    %370 = tpu.matmul %368, %369, %cst_119 {dimension_numbers = #tpu.dot_dimension_numbers<[1], [0], [0], [1], [0, 0, 1, 1], [], []>} : vector<128x256xbf16>, vector<256x256xbf16>, vector<128x256xf32> -> vector<128x256xf32>
    %c0_120 = arith.constant 0 : index
    %c0_121 = arith.constant 0 : index
    %371 = vector.load %arg14[%c0_120, %c0_121] : memref<1x256xf32, #tpu.memory_space<vmem>>, vector<1x256xf32>
    %372 = vector.broadcast %371 : vector<1x256xf32> to vector<128x256xf32>
    %373 = arith.addf %370, %372 : vector<128x256xf32>
    %cst_122 = arith.constant 0.000000e+00 : f32
    %374 = vector.broadcast %cst_122 : f32 to vector<128x256xf32>
    %375 = arith.maximumf %373, %374 : vector<128x256xf32>
    %376 = vector.shape_cast %375 : vector<128x256xf32> to vector<2x64x256xf32>
    %cst_123 = arith.constant dense<0.000000e+00> : vector<2x256xf32>
    %377 = vector.multi_reduction <add>, %376, %cst_123 [1] : vector<2x64x256xf32> to vector<2x256xf32>
    %378 = arith.truncf %377 : vector<2x256xf32> to vector<2x256xbf16>
    %c0_124 = arith.constant 0 : index
    %c0_125 = arith.constant 0 : index
    %379 = vector.load %arg15[%c0_124, %c0_125] : memref<256x256xbf16, #tpu.memory_space<vmem>>, vector<256x256xbf16>
    %cst_126 = arith.constant dense<0.000000e+00> : vector<2x256xf32>
    %380 = tpu.matmul %378, %379, %cst_126 {dimension_numbers = #tpu.dot_dimension_numbers<[1], [0], [0], [1], [0, 0, 1, 1], [], []>} : vector<2x256xbf16>, vector<256x256xbf16>, vector<2x256xf32> -> vector<2x256xf32>
    %c0_127 = arith.constant 0 : index
    %c0_128 = arith.constant 0 : index
    %381 = vector.load %arg16[%c0_127, %c0_128] : memref<1x256xf32, #tpu.memory_space<vmem>>, vector<1x256xf32>
    %382 = vector.broadcast %381 : vector<1x256xf32> to vector<2x256xf32>
    %383 = arith.addf %380, %382 : vector<2x256xf32>
    %cst_129 = arith.constant 0.000000e+00 : f32
    %384 = vector.broadcast %cst_129 : f32 to vector<2x256xf32>
    %385 = arith.maximumf %383, %384 : vector<2x256xf32>
    %386 = arith.truncf %385 : vector<2x256xf32> to vector<2x256xbf16>
    %c0_130 = arith.constant 0 : index
    %c0_131 = arith.constant 0 : index
    %387 = vector.load %arg17[%c0_130, %c0_131] : memref<256x512xbf16, #tpu.memory_space<vmem>>, vector<256x512xbf16>
    %cst_132 = arith.constant dense<0.000000e+00> : vector<2x512xf32>
    %388 = tpu.matmul %386, %387, %cst_132 {dimension_numbers = #tpu.dot_dimension_numbers<[1], [0], [0], [1], [0, 0, 1, 1], [], []>} : vector<2x256xbf16>, vector<256x512xbf16>, vector<2x512xf32> -> vector<2x512xf32>
    %c0_133 = arith.constant 0 : index
    %c0_134 = arith.constant 0 : index
    %389 = vector.load %arg18[%c0_133, %c0_134] : memref<1x512xf32, #tpu.memory_space<vmem>>, vector<1x512xf32>
    %390 = vector.broadcast %389 : vector<1x512xf32> to vector<2x512xf32>
    %391 = arith.addf %388, %390 : vector<2x512xf32>
    %cst_135 = arith.constant 0.000000e+00 : f32
    %392 = vector.broadcast %cst_135 : f32 to vector<2x512xf32>
    %393 = arith.maximumf %391, %392 : vector<2x512xf32>
    %394 = arith.truncf %393 : vector<2x512xf32> to vector<2x512xbf16>
    %c0_136 = arith.constant 0 : index
    %c0_137 = arith.constant 0 : index
    %395 = vector.load %arg19[%c0_136, %c0_137] : memref<512x128xbf16, #tpu.memory_space<vmem>>, vector<512x128xbf16>
    %cst_138 = arith.constant dense<0.000000e+00> : vector<2x128xf32>
    %396 = tpu.matmul %394, %395, %cst_138 {dimension_numbers = #tpu.dot_dimension_numbers<[1], [0], [0], [1], [0, 0, 1, 1], [], []>} : vector<2x512xbf16>, vector<512x128xbf16>, vector<2x128xf32> -> vector<2x128xf32>
    %c0_139 = arith.constant 0 : index
    %c0_140 = arith.constant 0 : index
    %397 = vector.load %arg20[%c0_139, %c0_140] : memref<1x128xf32, #tpu.memory_space<vmem>>, vector<1x128xf32>
    %398 = vector.broadcast %397 : vector<1x128xf32> to vector<2x128xf32>
    %399 = arith.addf %396, %398 : vector<2x128xf32>
    %c0_141 = arith.constant 0 : index
    %c0_142 = arith.constant 0 : index
    %400 = vector.load %arg21[%c0_141, %c0_142] : memref<2x128xf32, #tpu.memory_space<vmem>>, vector<2x128xf32>
    tpu.vector_store %arg21[%c0_141, %c0_142], %399 {strides = array<i32>} : memref<2x128xf32, #tpu.memory_space<vmem>>, vector<2x128xf32>,
    return
  }
  func.func @transform_0(%arg0: i32) -> (i32, i32, i32) {
    %c0_i32 = arith.constant 0 : i32
    %c0_i32_0 = arith.constant 0 : i32
    %c0_i32_1 = arith.constant 0 : i32
    return %c0_i32, %arg0, %c0_i32_0 : i32, i32, i32
  }
  func.func @transform_1(%arg0: i32) -> (i32, i32, i32) {
    %c0_i32 = arith.constant 0 : i32
    %c0_i32_0 = arith.constant 0 : i32
    %c0_i32_1 = arith.constant 0 : i32
    return %c0_i32, %arg0, %c0_i32_0 : i32, i32, i32
  }
  func.func @transform_2(%arg0: i32) -> (i32, i32) {
    %c0_i32 = arith.constant 0 : i32
    %c0_i32_0 = arith.constant 0 : i32
    %c0_i32_1 = arith.constant 0 : i32
    return %c0_i32, %c0_i32_0 : i32, i32
  }
  func.func @transform_3(%arg0: i32) -> (i32, i32) {
    %c0_i32 = arith.constant 0 : i32
    %c0_i32_0 = arith.constant 0 : i32
    %c0_i32_1 = arith.constant 0 : i32
    return %c0_i32, %c0_i32_0 : i32, i32
  }
  func.func @transform_4(%arg0: i32) -> (i32, i32) {
    %c0_i32 = arith.constant 0 : i32
    %c0_i32_0 = arith.constant 0 : i32
    %c0_i32_1 = arith.constant 0 : i32
    return %c0_i32, %c0_i32_0 : i32, i32
  }
  func.func @transform_5(%arg0: i32) -> (i32, i32) {
    %c0_i32 = arith.constant 0 : i32
    %c0_i32_0 = arith.constant 0 : i32
    %c0_i32_1 = arith.constant 0 : i32
    return %c0_i32, %c0_i32_0 : i32, i32
  }
  func.func @transform_6(%arg0: i32) -> (i32, i32) {
    %c0_i32 = arith.constant 0 : i32
    %c0_i32_0 = arith.constant 0 : i32
    %c0_i32_1 = arith.constant 0 : i32
    return %c0_i32, %c0_i32_0 : i32, i32
  }
  func.func @transform_7(%arg0: i32) -> (i32, i32) {
    %c0_i32 = arith.constant 0 : i32
    %c0_i32_0 = arith.constant 0 : i32
    %c0_i32_1 = arith.constant 0 : i32
    return %c0_i32, %c0_i32_0 : i32, i32
  }
  func.func @transform_8(%arg0: i32) -> (i32, i32) {
    %c0_i32 = arith.constant 0 : i32
    %c0_i32_0 = arith.constant 0 : i32
    %c0_i32_1 = arith.constant 0 : i32
    return %c0_i32, %c0_i32_0 : i32, i32
  }
  func.func @transform_9(%arg0: i32) -> (i32, i32) {
    %c0_i32 = arith.constant 0 : i32
    %c0_i32_0 = arith.constant 0 : i32
    %c0_i32_1 = arith.constant 0 : i32
    return %c0_i32, %c0_i32_0 : i32, i32
  }
  func.func @transform_10(%arg0: i32) -> (i32, i32) {
    %c0_i32 = arith.constant 0 : i32
    %c0_i32_0 = arith.constant 0 : i32
    %c0_i32_1 = arith.constant 0 : i32
    return %c0_i32, %c0_i32_0 : i32, i32
  }
  func.func @transform_11(%arg0: i32) -> (i32, i32) {
    %c0_i32 = arith.constant 0 : i32
    %c0_i32_0 = arith.constant 0 : i32
    %c0_i32_1 = arith.constant 0 : i32
    return %c0_i32, %c0_i32_0 : i32, i32
  }
  func.func @transform_12(%arg0: i32) -> (i32, i32) {
    %c0_i32 = arith.constant 0 : i32
    %c0_i32_0 = arith.constant 0 : i32
    %c0_i32_1 = arith.constant 0 : i32
    return %c0_i32, %c0_i32_0 : i32, i32
  }
  func.func @transform_13(%arg0: i32) -> (i32, i32) {
    %c0_i32 = arith.constant 0 : i32
    %c0_i32_0 = arith.constant 0 : i32
    %c0_i32_1 = arith.constant 0 : i32
    return %c0_i32, %c0_i32_0 : i32, i32
  }
  func.func @transform_14(%arg0: i32) -> (i32, i32) {
    %c0_i32 = arith.constant 0 : i32
    %c0_i32_0 = arith.constant 0 : i32
    %c0_i32_1 = arith.constant 0 : i32
    return %c0_i32, %c0_i32_0 : i32, i32
  }
  func.func @transform_15(%arg0: i32) -> (i32, i32) {
    %c0_i32 = arith.constant 0 : i32
    %c0_i32_0 = arith.constant 0 : i32
    %c0_i32_1 = arith.constant 0 : i32
    return %c0_i32, %c0_i32_0 : i32, i32
  }
  func.func @transform_16(%arg0: i32) -> (i32, i32) {
    %c0_i32 = arith.constant 0 : i32
    %c0_i32_0 = arith.constant 0 : i32
    %c0_i32_1 = arith.constant 0 : i32
    return %c0_i32, %c0_i32_0 : i32, i32
  }
  func.func @transform_17(%arg0: i32) -> (i32, i32) {
    %c0_i32 = arith.constant 0 : i32
    %c0_i32_0 = arith.constant 0 : i32
    %c0_i32_1 = arith.constant 0 : i32
    return %c0_i32, %c0_i32_0 : i32, i32
  }
  func.func @transform_18(%arg0: i32) -> (i32, i32) {
    %c0_i32 = arith.constant 0 : i32
    %c0_i32_0 = arith.constant 0 : i32
    %c0_i32_1 = arith.constant 0 : i32
    return %c0_i32, %c0_i32_0 : i32, i32
  }
  func.func @transform_19(%arg0: i32) -> (i32, i32) {
    %c0_i32 = arith.constant 0 : i32
    %c0_i32_0 = arith.constant 0 : i32
    %c0_i32_1 = arith.constant 0 : i32
    return %c0_i32, %c0_i32_0 : i32, i32
  }
  func.func @transform_20(%arg0: i32) -> (i32, i32) {
    %c0_i32 = arith.constant 0 : i32
    %c0_i32_0 = arith.constant 0 : i32
    return %arg0, %c0_i32 : i32, i32
  }
}

</mosaic_0001>

<llo_original>
// kernel: relation_net_forward.1
$region0: #{relation_net_forward.1}
  #allocation0 [shape = 'u32[]', space=smem, size = 0x4, offset = 0x4, fixed_abs, tag = 'smem constant byte address 0x4 - core index']
  #allocation1 [shape = 'u32[144,128]{1,0:T(1,128)}', space=vmem, size = 0x12000, scoped, tag = 'internal scratch']
  %s0 = inlined_call_operand.vmem [shape: f32[6,16,128], index: 0, kind: input, shape index: {}]
  %s1 = inlined_call_operand.vmem [shape: f32[5,2,128], index: 1, kind: input, shape index: {}]
  %s2 = inlined_call_operand.vmem [shape: bf16[32,128], index: 2, kind: input, shape index: {}]
  %s3 = inlined_call_operand.vmem [shape: bf16[32,128], index: 3, kind: input, shape index: {}]
  %s4 = inlined_call_operand.vmem [shape: bf16[32,512], index: 4, kind: input, shape index: {}]
  %s5 = inlined_call_operand.vmem [shape: f32[8,512], index: 5, kind: input, shape index: {}]
  %s6 = inlined_call_operand.vmem [shape: bf16[32,256], index: 6, kind: input, shape index: {}]
  %s7 = inlined_call_operand.vmem [shape: f32[1,256], index: 7, kind: input, shape index: {}]
  %s8 = inlined_call_operand.vmem [shape: bf16[256,256], index: 8, kind: input, shape index: {}]
  %s9 = inlined_call_operand.vmem [shape: f32[1,256], index: 9, kind: input, shape index: {}]
  %s10 = inlined_call_operand.vmem [shape: bf16[256,256], index: 10, kind: input, shape index: {}]
  %s11 = inlined_call_operand.vmem [shape: f32[1,256], index: 11, kind: input, shape index: {}]
  %s12 = inlined_call_operand.vmem [shape: bf16[256,256], index: 12, kind: input, shape index: {}]
  %s13 = inlined_call_operand.vmem [shape: f32[1,256], index: 13, kind: input, shape index: {}]
  %s14 = inlined_call_operand.vmem [shape: bf16[256,256], index: 14, kind: input, shape index: {}]
  %s15 = inlined_call_operand.vmem [shape: f32[1,256], index: 15, kind: input, shape index: {}]
  %s16 = inlined_call_operand.vmem [shape: bf16[256,512], index: 16, kind: input, shape index: {}]
  %s17 = inlined_call_operand.vmem [shape: f32[1,512], index: 17, kind: input, shape index: {}]
  %s18 = inlined_call_operand.vmem [shape: bf16[512,128], index: 18, kind: input, shape index: {}]
  %s19 = inlined_call_operand.vmem [shape: f32[1,128], index: 19, kind: input, shape index: {}]
  %s20 = inlined_call_operand.hbm [shape: f32[2,128], index: 20, kind: output, shape index: {}]
  %s21 = sld [smem:[#allocation0]]
  $region90: #{relation_net_forward.1} parent=0
    _
  %s23 = ssub.s32 1, %s21
  %s24 = scalar_select 0, %s23, %s21
  $region1: #{relation_net_forward.1} parent=0
    #allocation2 [shape = 'u8[1024]{0}', space=vmem, size = 0x400, scoped, tag = 'output window, operand 0, single buffered']
    #allocation3 [shape = 's32[1]{0}', space=sflag, size = 0x4, scoped, tag = 'scoped memory for relation_net_forward.1']
    %25 = vsyncpa [#allocation3], 0
    // Predicated region
    $region2: #{relation_net_forward.1} parent=1 // pred_check
      _
    $region3: #{relation_net_forward.1} parent=1 // pred_check_branch
      %27 = sbr.rel (0) target = $region5
    $region4: #{relation_net_forward.1} parent=1 // pred_region
      _
    $region5: #{relation_net_forward.1} parent=1 // pred_fallthru
      _
    // Predicated region
    $region6: #{relation_net_forward.1} parent=1 // pred_check
      _
    $region7: #{relation_net_forward.1} parent=1 // pred_check_branch
      %29 = sbr.rel (0) target = $region9
    $region8: #{relation_net_forward.1} parent=1 // pred_region
      _
    $region9: #{relation_net_forward.1} parent=1 // pred_fallthru
      _
    // Predicated region
    $region10: #{relation_net_forward.1} parent=1 // pred_check
      _
    $region11: #{relation_net_forward.1} parent=1 // pred_check_branch
      %31 = sbr.rel (0) target = $region13
    $region12: #{relation_net_forward.1} parent=1 // pred_region
      _
    $region13: #{relation_net_forward.1} parent=1 // pred_fallthru
      _
    // Predicated region
    $region14: #{relation_net_forward.1} parent=1 // pred_check
      _
    $region15: #{relation_net_forward.1} parent=1 // pred_check_branch
      %33 = sbr.rel (0) target = $region17
    $region16: #{relation_net_forward.1} parent=1 // pred_region
      _
    $region17: #{relation_net_forward.1} parent=1 // pred_fallthru
      _
    // Predicated region
    $region18: #{relation_net_forward.1} parent=1 // pred_check
      _
    $region19: #{relation_net_forward.1} parent=1 // pred_check_branch
      %35 = sbr.rel (0) target = $region21
    $region20: #{relation_net_forward.1} parent=1 // pred_region
      _
    $region21: #{relation_net_forward.1} parent=1 // pred_fallthru
      _
    // Predicated region
    $region22: #{relation_net_forward.1} parent=1 // pred_check
      _
    $region23: #{relation_net_forward.1} parent=1 // pred_check_branch
      %37 = sbr.rel (0) target = $region25
    $region24: #{relation_net_forward.1} parent=1 // pred_region
      _
    $region25: #{relation_net_forward.1} parent=1 // pred_fallthru
      _
    // Predicated region
    $region26: #{relation_net_forward.1} parent=1 // pred_check
      _
    $region27: #{relation_net_forward.1} parent=1 // pred_check_branch
      %39 = sbr.rel (0) target = $region29
    $region28: #{relation_net_forward.1} parent=1 // pred_region
      _
    $region29: #{relation_net_forward.1} parent=1 // pred_fallthru
      _
    // Predicated region
    $region30: #{relation_net_forward.1} parent=1 // pred_check
      _
    $region31: #{relation_net_forward.1} parent=1 // pred_check_branch
      %41 = sbr.rel (0) target = $region33
    $region32: #{relation_net_forward.1} parent=1 // pred_region
      _
    $region33: #{relation_net_forward.1} parent=1 // pred_fallthru
      _
    // Predicated region
    $region34: #{relation_net_forward.1} parent=1 // pred_check
      _
    $region35: #{relation_net_forward.1} parent=1 // pred_check_branch
      %43 = sbr.rel (0) target = $region37
    $region36: #{relation_net_forward.1} parent=1 // pred_region
      _
    $region37: #{relation_net_forward.1} parent=1 // pred_fallthru
      _
    // Predicated region
    $region38: #{relation_net_forward.1} parent=1 // pred_check
      _
    $region39: #{relation_net_forward.1} parent=1 // pred_check_branch
      %45 = sbr.rel (0) target = $region41
    $region40: #{relation_net_forward.1} parent=1 // pred_region
      _
    $region41: #{relation_net_forward.1} parent=1 // pred_fallthru
      _
    // Predicated region
    $region42: #{relation_net_forward.1} parent=1 // pred_check
      _
    $region43: #{relation_net_forward.1} parent=1 // pred_check_branch
      %47 = sbr.rel (0) target = $region45
    $region44: #{relation_net_forward.1} parent=1 // pred_region
      _
    $region45: #{relation_net_forward.1} parent=1 // pred_fallthru
      _
    // Predicated region
    $region46: #{relation_net_forward.1} parent=1 // pred_check
      _
    $region47: #{relation_net_forward.1} parent=1 // pred_check_branch
      %49 = sbr.rel (0) target = $region49
    $region48: #{relation_net_forward.1} parent=1 // pred_region
      _
    $region49: #{relation_net_forward.1} parent=1 // pred_fallthru
      _
    // Predicated region
    $region50: #{relation_net_forward.1} parent=1 // pred_check
      _
    $region51: #{relation_net_forward.1} parent=1 // pred_check_branch
      %51 = sbr.rel (0) target = $region53
    $region52: #{relation_net_forward.1} parent=1 // pred_region
      _
    $region53: #{relation_net_forward.1} parent=1 // pred_fallthru
      _
    // Predicated region
    $region54: #{relation_net_forward.1} parent=1 // pred_check
      _
    $region55: #{relation_net_forward.1} parent=1 // pred_check_branch
      %53 = sbr.rel (0) target = $region57
    $region56: #{relation_net_forward.1} parent=1 // pred_region
      _
    $region57: #{relation_net_forward.1} parent=1 // pred_fallthru
      _
    // Predicated region
    $region58: #{relation_net_forward.1} parent=1 // pred_check
      _
    $region59: #{relation_net_forward.1} parent=1 // pred_check_branch
      %55 = sbr.rel (0) target = $region61
    $region60: #{relation_net_forward.1} parent=1 // pred_region
      _
    $region61: #{relation_net_forward.1} parent=1 // pred_fallthru
      _
    // Predicated region
    $region62: #{relation_net_forward.1} parent=1 // pred_check
      _
    $region63: #{relation_net_forward.1} parent=1 // pred_check_branch
      %57 = sbr.rel (0) target = $region65
    $region64: #{relation_net_forward.1} parent=1 // pred_region
      _
    $region65: #{relation_net_forward.1} parent=1 // pred_fallthru
      _
    // Predicated region
    $region66: #{relation_net_forward.1} parent=1 // pred_check
      _
    $region67: #{relation_net_forward.1} parent=1 // pred_check_branch
      %59 = sbr.rel (0) target = $region69
    $region68: #{relation_net_forward.1} parent=1 // pred_region
      _
    $region69: #{relation_net_forward.1} parent=1 // pred_fallthru
      _
    // Predicated region
    $region70: #{relation_net_forward.1} parent=1 // pred_check
      _
    $region71: #{relation_net_forward.1} parent=1 // pred_check_branch
      %61 = sbr.rel (0) target = $region73
    $region72: #{relation_net_forward.1} parent=1 // pred_region
      _
    $region73: #{relation_net_forward.1} parent=1 // pred_fallthru
      _
    // Predicated region
    $region74: #{relation_net_forward.1} parent=1 // pred_check
      _
    $region75: #{relation_net_forward.1} parent=1 // pred_check_branch
      %63 = sbr.rel (0) target = $region77
    $region76: #{relation_net_forward.1} parent=1 // pred_region
      _
    $region77: #{relation_net_forward.1} parent=1 // pred_fallthru
      _
    // Predicated region
    $region78: #{relation_net_forward.1} parent=1 // pred_check
      _
    $region79: #{relation_net_forward.1} parent=1 // pred_check_branch
      %65 = sbr.rel (0) target = $region81
    $region80: #{relation_net_forward.1} parent=1 // pred_region
      _
    $region81: #{relation_net_forward.1} parent=1 // pred_fallthru
      _
    %v67 = vld [vmem:[%s0] sm:$0xff]
    %v68 = vld [vmem:[%s0 + $0x8] sm:$0xff]
    %v69 = vld [vmem:[%s2] sm:$0xf]
    %v70 = vld [vmem:[%s2 + $0x4] sm:$0xf]
    %v71 = vld [vmem:[%s2 + $0x8] sm:$0xf]
    %v72 = vld [vmem:[%s2 + $0xc] sm:$0xf]
    %v77 = vunpack.c.l.b16 %v69
    %v78 = vunpack.c.l.b16 %v70
    %v79 = vunpack.c.l.b16 %v71
    %v80 = vunpack.c.l.b16 %v72
    %v81 = vpack.c.b16 %v78, %v77
    %v82 = vpack.c.b16 %v80, %v79
    %vm85 = vcmask 261120
    %v87 = vsel %vm85, 0, 0
    %89 = vmatprep.subr.bf16.mxu0 0
    %90 = vmatpush1.bf16.msra.mxu0 0
    %91 = vmatprep.subr.bf16.mxu0 0
    %92 = vmatpush1.bf16.msra.mxu0 0
    %93 = vmatprep.subr.bf16.mxu0 0
    %94 = vmatpush1.bf16.msra.mxu0 0
    %95 = vmatprep.subr.bf16.mxu0 0
    %96 = vmatpush1.bf16.msra.mxu0 0
    %97 = vmatprep.subr.bf16.mxu0 0
    %98 = vmatpush1.bf16.msra.mxu0 0
    %99 = vmatprep.subr.bf16.mxu0 0
    %100 = vmatpush1.bf16.msra.mxu0 0
    %101 = vmatprep.subr.bf16.mxu0 0
    %102 = vmatpush1.bf16.msra.mxu0 %v82
    %103 = vmatprep.subr.bf16.mxu0 0
    %104 = vmatpush1.bf16.msra.mxu0 %v81
    %105 = vmatprep.subr.bf16.mxu0 0
    %106 = vmatpush2.bf16.msra.mxu0 0
    %107 = vmatprep.subr.bf16.mxu0 0
    %108 = vmatpush2.bf16.msra.mxu0 0
    %109 = vmatprep.subr.bf16.mxu0 0
    %110 = vmatpush2.bf16.msra.mxu0 0
    %111 = vmatprep.subr.bf16.mxu0 0
    %112 = vmatpush2.bf16.msra.mxu0 0
    %113 = vmatprep.subr.bf16.mxu0 0
    %114 = vmatpush2.bf16.msra.mxu0 0
    %115 = vmatprep.subr.bf16.mxu0 0
    %116 = vmatpush2.bf16.msra.mxu0 0
    %117 = vmatprep.subr.bf16.mxu0 0
    %118 = vmatpush2.bf16.msra.mxu0 0
    %119 = vmatprep.subr.bf16.mxu0 0
    %120 = vmatpush2.bf16.msra.mxu0 0
    %121 = vmatprep.mubr.bf16.mxu0 0
    %122 = vmatmul.mubr.bf16.gmra.mxu0 %v87
    %v123 = vpop.f32.mrf.mxu0
    %v124 = vadd.f32 0.0, %v123
    %v125 = vpop.f32.mrf.mxu0
    %v126 = vpop.f32.mrf.mxu0
    %v127 = vadd.f32 0.0, %v126
    %v128 = vpop.f32.mrf.mxu0
    %129 = vdwg.mxu0
    %v130 = vadd.f32 %v67, %v124
    %v131 = vadd.f32 %v68, %v127
    %v132 = vlaneseq
    %v133 = vand.u32 %v132, 127
    %vm134 = vcmp.ge.s32.totalorder %v133, 64
    %vm135 = vcmp.lt.s32.totalorder %v133, 96
    %vm136 = vmand %vm134, %vm135
    %v137 = vtanh.pop %v130
    %v138 = vtanh.pop %v131
    %v139 = vxor.u32 %v130, 2147483648
    %v140 = vxor.u32 %v131, 2147483648
    %v141 = vmul.f32 %v139, 1.442695
    %v142 = vpow.pop %v141
    %v143 = vmul.f32 %v140, 1.442695
    %v144 = vpow.pop %v143
    %v145 = vadd.f32 %v142, 1.0
    %v146 = vadd.f32 %v144, 1.0
    %v147 = vrcp.pop %v145
    %v148 = vmul.f32 1.0, %v147
    %v149 = vrcp.pop %v146
    %v150 = vmul.f32 1.0, %v149
    %v151 = vsel %vm136, %v137, %v148
    %v152 = vsel %vm136, %v138, %v150
    %v153 = vmul.f32 %v151, 0.0
    %v154 = vmul.f32 %v152, 0.0
    %157 = vrot.lane.b32.xlu0 %v151, 64
    %v158 = vpop.permute.xlu0 %157
    %159 = vrot.lane.b32.xlu0 %v152, 64
    %v160 = vpop.permute.xlu0 %159
    %v163 = vmul.f32 %v151, %v158
    %v164 = vmul.f32 %v152, %v160
    %167 = vrot.lane.b32.xlu0 %v163, 32
    %v168 = vpop.permute.xlu0 %167
    %169 = vrot.lane.b32.xlu0 %v164, 32
    %v170 = vpop.permute.xlu0 %169
    %v173 = vadd.f32 %v153, %v168
    %v174 = vadd.f32 %v154, %v170
    %v175 = vtanh.pop %v173
    %v176 = vtanh.pop %v174
    %179 = vrot.lane.b32.xlu0 %v175, 64
    %v180 = vpop.permute.xlu0 %179
    %181 = vrot.lane.b32.xlu0 %v176, 64
    %v182 = vpop.permute.xlu0 %181
    %v185 = vmul.f32 %v151, %v180
    %v186 = vmul.f32 %v152, %v182
    %s187 = scalar_lea.vmem %s0, 16
    %v188 = vld [vmem:[%s187] sm:$0xff]
    %v189 = vld [vmem:[%s187 + $0x8] sm:$0xff]
    %v190 = vpack.c.bf16 %v186, %v185
    %192 = vrot.lane.b32.xlu0 %v190, 32
    %v193 = vpop.permute.xlu0 %192
    %v195 = vsel %vm85, %v193, 0
    %197 = vmatprep.subr.bf16.mxu0 0
    %198 = vmatpush1.bf16.msra.mxu0 0
    %199 = vmatprep.subr.bf16.mxu0 0
    %200 = vmatpush1.bf16.msra.mxu0 0
    %201 = vmatprep.subr.bf16.mxu0 0
    %202 = vmatpush1.bf16.msra.mxu0 0
    %203 = vmatprep.subr.bf16.mxu0 0
    %204 = vmatpush1.bf16.msra.mxu0 0
    %205 = vmatprep.subr.bf16.mxu0 0
    %206 = vmatpush1.bf16.msra.mxu0 0
    %207 = vmatprep.subr.bf16.mxu0 0
    %208 = vmatpush1.bf16.msra.mxu0 0
    %209 = vmatprep.subr.bf16.mxu0 0
    %210 = vmatpush1.bf16.msra.mxu0 %v82
    %211 = vmatprep.subr.bf16.mxu0 0
    %212 = vmatpush1.bf16.msra.mxu0 %v81
    %213 = vmatprep.subr.bf16.mxu0 0
    %214 = vmatpush2.bf16.msra.mxu0 0
    %215 = vmatprep.subr.bf16.mxu0 0
    %216 = vmatpush2.bf16.msra.mxu0 0
    %217 = vmatprep.subr.bf16.mxu0 0
    %218 = vmatpush2.bf16.msra.mxu0 0
    %219 = vmatprep.subr.bf16.mxu0 0
    %220 = vmatpush2.bf16.msra.mxu0 0
    %221 = vmatprep.subr.bf16.mxu0 0
    %222 = vmatpush2.bf16.msra.mxu0 0
    %223 = vmatprep.subr.bf16.mxu0 0
    %224 = vmatpush2.bf16.msra.mxu0 0
    %225 = vmatprep.subr.bf16.mxu0 0
    %226 = vmatpush2.bf16.msra.mxu0 0
    %227 = vmatprep.subr.bf16.mxu0 0
    %228 = vmatpush2.bf16.msra.mxu0 0
    %229 = vmatprep.mubr.bf16.mxu0 0
    %230 = vmatmul.mubr.bf16.gmra.mxu0 %v195
    %v231 = vpop.f32.mrf.mxu0
    %v232 = vadd.f32 0.0, %v231
    %v233 = vpop.f32.mrf.mxu0
    %v234 = vpop.f32.mrf.mxu0
    %v235 = vadd.f32 0.0, %v234
    %v236 = vpop.f32.mrf.mxu0
    %237 = vdwg.mxu0
    %v238 = vadd.f32 %v188, %v232
    %v239 = vadd.f32 %v189, %v235
    %v240 = vtanh.pop %v238
    %v241 = vtanh.pop %v239
    %v242 = vxor.u32 %v238, 2147483648
    %v243 = vxor.u32 %v239, 2147483648
    %v244 = vmul.f32 %v242, 1.442695
    %v245 = vpow.pop %v244
    %v246 = vmul.f32 %v243, 1.442695
    %v247 = vpow.pop %v246
    %v248 = vadd.f32 %v245, 1.0
    %v249 = vadd.f32 %v247, 1.0
    %v250 = vrcp.pop %v248
    %v251 = vmul.f32 1.0, %v250
    %v252 = vrcp.pop %v249
    %v253 = vmul.f32 1.0, %v252
    %v254 = vsel %vm136, %v240, %v251
    %v255 = vsel %vm136, %v241, %v253
    %v256 = vmul.f32 %v254, %v173
    %v257 = vmul.f32 %v255, %v174
    %260 = vrot.lane.b32.xlu0 %v254, 64
    %v261 = vpop.permute.xlu0 %260
    %262 = vrot.lane.b32.xlu0 %v255, 64
    %v263 = vpop.permute.xlu0 %262
    %v266 = vmul.f32 %v254, %v261
    %v267 = vmul.f32 %v255, %v263
    %270 = vrot.lane.b32.xlu0 %v266, 32
    %v271 = vpop.permute.xlu0 %270
    %272 = vrot.lane.b32.xlu0 %v267, 32
    %v273 = vpop.permute.xlu0 %272
    %v276 = vadd.f32 %v256, %v271
    %v277 = vadd.f32 %v257, %v273
    %v278 = vtanh.pop %v276
    %v279 = vtanh.pop %v277
    %282 = vrot.lane.b32.xlu0 %v278, 64
    %v283 = vpop.permute.xlu0 %282
    %284 = vrot.lane.b32.xlu0 %v279, 64
    %v285 = vpop.permute.xlu0 %284
    %v288 = vmul.f32 %v254, %v283
    %v289 = vmul.f32 %v255, %v285
    %s290 = scalar_lea.vmem %s0, 32
    %v291 = vld [vmem:[%s290] sm:$0xff]
    %v292 = vld [vmem:[%s290 + $0x8] sm:$0xff]
    %v293 = vpack.c.bf16 %v289, %v288
    %295 = vrot.lane.b32.xlu0 %v293, 32
    %v296 = vpop.permute.xlu0 %295
    %v298 = vsel %vm85, %v296, 0
    %300 = vmatprep.subr.bf16.mxu0 0
    %301 = vmatpush1.bf16.msra.mxu0 0
    %302 = vmatprep.subr.bf16.mxu0 0
    %303 = vmatpush1.bf16.msra.mxu0 0
    %304 = vmatprep.subr.bf16.mxu0 0
    %305 = vmatpush1.bf16.msra.mxu0 0
    %306 = vmatprep.subr.bf16.mxu0 0
    %307 = vmatpush1.bf16.msra.mxu0 0
    %308 = vmatprep.subr.bf16.mxu0 0
    %309 = vmatpush1.bf16.msra.mxu0 0
    %310 = vmatprep.subr.bf16.mxu0 0
    %311 = vmatpush1.bf16.msra.mxu0 0
    %312 = vmatprep.subr.bf16.mxu0 0
    %313 = vmatpush1.bf16.msra.mxu0 %v82
    %314 = vmatprep.subr.bf16.mxu0 0
    %315 = vmatpush1.bf16.msra.mxu0 %v81
    %316 = vmatprep.subr.bf16.mxu0 0
    %317 = vmatpush2.bf16.msra.mxu0 0
    %318 = vmatprep.subr.bf16.mxu0 0
    %319 = vmatpush2.bf16.msra.mxu0 0
    %320 = vmatprep.subr.bf16.mxu0 0
    %321 = vmatpush2.bf16.msra.mxu0 0
    %322 = vmatprep.subr.bf16.mxu0 0
    %323 = vmatpush2.bf16.msra.mxu0 0
    %324 = vmatprep.subr.bf16.mxu0 0
    %325 = vmatpush2.bf16.msra.mxu0 0
    %326 = vmatprep.subr.bf16.mxu0 0
    %327 = vmatpush2.bf16.msra.mxu0 0
    %328 = vmatprep.subr.bf16.mxu0 0
    %329 = vmatpush2.bf16.msra.mxu0 0
    %330 = vmatprep.subr.bf16.mxu0 0
    %331 = vmatpush2.bf16.msra.mxu0 0
    %332 = vmatprep.mubr.bf16.mxu0 0
    %333 = vmatmul.mubr.bf16.gmra.mxu0 %v298
    %v334 = vpop.f32.mrf.mxu0
    %v335 = vadd.f32 0.0, %v334
    %v336 = vpop.f32.mrf.mxu0
    %v337 = vpop.f32.mrf.mxu0
    %v338 = vadd.f32 0.0, %v337
    %v339 = vpop.f32.mrf.mxu0
    %340 = vdwg.mxu0
    %v341 = vadd.f32 %v291, %v335
    %v342 = vadd.f32 %v292, %v338
    %v343 = vtanh.pop %v341
    %v344 = vtanh.pop %v342
    %v345 = vxor.u32 %v341, 2147483648
    %v346 = vxor.u32 %v342, 2147483648
    %v347 = vmul.f32 %v345, 1.442695
    %v348 = vpow.pop %v347
    %v349 = vmul.f32 %v346, 1.442695
    %v350 = vpow.pop %v349
    %v351 = vadd.f32 %v348, 1.0
    %v352 = vadd.f32 %v350, 1.0
    %v353 = vrcp.pop %v351
    %v354 = vmul.f32 1.0, %v353
    %v355 = vrcp.pop %v352
    %v356 = vmul.f32 1.0, %v355
    %v357 = vsel %vm136, %v343, %v354
    %v358 = vsel %vm136, %v344, %v356
    %v359 = vmul.f32 %v357, %v276
    %v360 = vmul.f32 %v358, %v277
    %363 = vrot.lane.b32.xlu0 %v357, 64
    %v364 = vpop.permute.xlu0 %363
    %365 = vrot.lane.b32.xlu0 %v358, 64
    %v366 = vpop.permute.xlu0 %365
    %v369 = vmul.f32 %v357, %v364
    %v370 = vmul.f32 %v358, %v366
    %373 = vrot.lane.b32.xlu0 %v369, 32
    %v374 = vpop.permute.xlu0 %373
    %375 = vrot.lane.b32.xlu0 %v370, 32
    %v376 = vpop.permute.xlu0 %375
    %v379 = vadd.f32 %v359, %v374
    %v380 = vadd.f32 %v360, %v376
    %v381 = vtanh.pop %v379
    %v382 = vtanh.pop %v380
    %385 = vrot.lane.b32.xlu0 %v381, 64
    %v386 = vpop.permute.xlu0 %385
    %387 = vrot.lane.b32.xlu0 %v382, 64
    %v388 = vpop.permute.xlu0 %387
    %v391 = vmul.f32 %v357, %v386
    %v392 = vmul.f32 %v358, %v388
    %s393 = scalar_lea.vmem %s0, 48
    %v394 = vld [vmem:[%s393] sm:$0xff]
    %v395 = vld [vmem:[%s393 + $0x8] sm:$0xff]
    %v396 = vpack.c.bf16 %v392, %v391
    %398 = vrot.lane.b32.xlu0 %v396, 32
    %v399 = vpop.permute.xlu0 %398
    %v401 = vsel %vm85, %v399, 0
    %403 = vmatprep.subr.bf16.mxu0 0
    %404 = vmatpush1.bf16.msra.mxu0 0
    %405 = vmatprep.subr.bf16.mxu0 0
    %406 = vmatpush1.bf16.msra.mxu0 0
    %407 = vmatprep.subr.bf16.mxu0 0
    %408 = vmatpush1.bf16.msra.mxu0 0
    %409 = vmatprep.subr.bf16.mxu0 0
    %410 = vmatpush1.bf16.msra.mxu0 0
    %411 = vmatprep.subr.bf16.mxu0 0
    %412 = vmatpush1.bf16.msra.mxu0 0
    %413 = vmatprep.subr.bf16.mxu0 0
    %414 = vmatpush1.bf16.msra.mxu0 0
    %415 = vmatprep.subr.bf16.mxu0 0
    %416 = vmatpush1.bf16.msra.mxu0 %v82
    %417 = vmatprep.subr.bf16.mxu0 0
    %418 = vmatpush1.bf16.msra.mxu0 %v81
    %419 = vmatprep.subr.bf16.mxu0 0
    %420 = vmatpush2.bf16.msra.mxu0 0
    %421 = vmatprep.subr.bf16.mxu0 0
    %422 = vmatpush2.bf16.msra.mxu0 0
    %423 = vmatprep.subr.bf16.mxu0 0
    %424 = vmatpush2.bf16.msra.mxu0 0
    %425 = vmatprep.subr.bf16.mxu0 0
    %426 = vmatpush2.bf16.msra.mxu0 0
    %427 = vmatprep.subr.bf16.mxu0 0
    %428 = vmatpush2.bf16.msra.mxu0 0
    %429 = vmatprep.subr.bf16.mxu0 0
    %430 = vmatpush2.bf16.msra.mxu0 0
    %431 = vmatprep.subr.bf16.mxu0 0
    %432 = vmatpush2.bf16.msra.mxu0 0
    %433 = vmatprep.subr.bf16.mxu0 0
    %434 = vmatpush2.bf16.msra.mxu0 0
    %435 = vmatprep.mubr.bf16.mxu0 0
    %436 = vmatmul.mubr.bf16.gmra.mxu0 %v401
    %v437 = vpop.f32.mrf.mxu0
    %v438 = vadd.f32 0.0, %v437
    %v439 = vpop.f32.mrf.mxu0
    %v440 = vpop.f32.mrf.mxu0
    %v441 = vadd.f32 0.0, %v440
    %v442 = vpop.f32.mrf.mxu0
    %443 = vdwg.mxu0
    %v444 = vadd.f32 %v394, %v438
    %v445 = vadd.f32 %v395, %v441
    %v446 = vtanh.pop %v444
    %v447 = vtanh.pop %v445
    %v448 = vxor.u32 %v444, 2147483648
    %v449 = vxor.u32 %v445, 2147483648
    %v450 = vmul.f32 %v448, 1.442695
    %v451 = vpow.pop %v450
    %v452 = vmul.f32 %v449, 1.442695
    %v453 = vpow.pop %v452
    %v454 = vadd.f32 %v451, 1.0
    %v455 = vadd.f32 %v453, 1.0
    %v456 = vrcp.pop %v454
    %v457 = vmul.f32 1.0, %v456
    %v458 = vrcp.pop %v455
    %v459 = vmul.f32 1.0, %v458
    %v460 = vsel %vm136, %v446, %v457
    %v461 = vsel %vm136, %v447, %v459
    %v462 = vmul.f32 %v460, %v379
    %v463 = vmul.f32 %v461, %v380
    %466 = vrot.lane.b32.xlu0 %v460, 64
    %v467 = vpop.permute.xlu0 %466
    %468 = vrot.lane.b32.xlu0 %v461, 64
    %v469 = vpop.permute.xlu0 %468
    %v472 = vmul.f32 %v460, %v467
    %v473 = vmul.f32 %v461, %v469
    %476 = vrot.lane.b32.xlu0 %v472, 32
    %v477 = vpop.permute.xlu0 %476
    %478 = vrot.lane.b32.xlu0 %v473, 32
    %v479 = vpop.permute.xlu0 %478
    %v482 = vadd.f32 %v462, %v477
    %v483 = vadd.f32 %v463, %v479
    %v484 = vtanh.pop %v482
    %v485 = vtanh.pop %v483
    %488 = vrot.lane.b32.xlu0 %v484, 64
    %v489 = vpop.permute.xlu0 %488
    %490 = vrot.lane.b32.xlu0 %v485, 64
    %v491 = vpop.permute.xlu0 %490
    %v494 = vmul.f32 %v460, %v489
    %v495 = vmul.f32 %v461, %v491
    %s496 = scalar_lea.vmem %s0, 64
    %v497 = vld [vmem:[%s496] sm:$0xff]
    %v498 = vld [vmem:[%s496 + $0x8] sm:$0xff]
    %v499 = vpack.c.bf16 %v495, %v494
    %501 = vrot.lane.b32.xlu0 %v499, 32
    %v502 = vpop.permute.xlu0 %501
    %v504 = vsel %vm85, %v502, 0
    %506 = vmatprep.subr.bf16.mxu0 0
    %507 = vmatpush1.bf16.msra.mxu0 0
    %508 = vmatprep.subr.bf16.mxu0 0
    %509 = vmatpush1.bf16.msra.mxu0 0
    %510 = vmatprep.subr.bf16.mxu0 0
    %511 = vmatpush1.bf16.msra.mxu0 0
    %512 = vmatprep.subr.bf16.mxu0 0
    %513 = vmatpush1.bf16.msra.mxu0 0
    %514 = vmatprep.subr.bf16.mxu0 0
    %515 = vmatpush1.bf16.msra.mxu0 0
    %516 = vmatprep.subr.bf16.mxu0 0
    %517 = vmatpush1.bf16.msra.mxu0 0
    %518 = vmatprep.subr.bf16.mxu0 0
    %519 = vmatpush1.bf16.msra.mxu0 %v82
    %520 = vmatprep.subr.bf16.mxu0 0
    %521 = vmatpush1.bf16.msra.mxu0 %v81
    %522 = vmatprep.subr.bf16.mxu0 0
    %523 = vmatpush2.bf16.msra.mxu0 0
    %524 = vmatprep.subr.bf16.mxu0 0
    %525 = vmatpush2.bf16.msra.mxu0 0
    %526 = vmatprep.subr.bf16.mxu0 0
    %527 = vmatpush2.bf16.msra.mxu0 0
    %528 = vmatprep.subr.bf16.mxu0 0
    %529 = vmatpush2.bf16.msra.mxu0 0
    %530 = vmatprep.subr.bf16.mxu0 0
    %531 = vmatpush2.bf16.msra.mxu0 0
    %532 = vmatprep.subr.bf16.mxu0 0
    %533 = vmatpush2.bf16.msra.mxu0 0
    %534 = vmatprep.subr.bf16.mxu0 0
    %535 = vmatpush2.bf16.msra.mxu0 0
    %536 = vmatprep.subr.bf16.mxu0 0
    %537 = vmatpush2.bf16.msra.mxu0 0
    %538 = vmatprep.mubr.bf16.mxu0 0
    %539 = vmatmul.mubr.bf16.gmra.mxu0 %v504
    %v540 = vpop.f32.mrf.mxu0
    %v541 = vadd.f32 0.0, %v540
    %v542 = vpop.f32.mrf.mxu0
    %v543 = vpop.f32.mrf.mxu0
    %v544 = vadd.f32 0.0, %v543
    %v545 = vpop.f32.mrf.mxu0
    %546 = vdwg.mxu0
    %v547 = vadd.f32 %v497, %v541
    %v548 = vadd.f32 %v498, %v544
    %v549 = vtanh.pop %v547
    %v550 = vtanh.pop %v548
    %v551 = vxor.u32 %v547, 2147483648
    %v552 = vxor.u32 %v548, 2147483648
    %v553 = vmul.f32 %v551, 1.442695
    %v554 = vpow.pop %v553
    %v555 = vmul.f32 %v552, 1.442695
    %v556 = vpow.pop %v555
    %v557 = vadd.f32 %v554, 1.0
    %v558 = vadd.f32 %v556, 1.0
    %v559 = vrcp.pop %v557
    %v560 = vmul.f32 1.0, %v559
    %v561 = vrcp.pop %v558
    %v562 = vmul.f32 1.0, %v561
    %v563 = vsel %vm136, %v549, %v560
    %v564 = vsel %vm136, %v550, %v562
    %v565 = vmul.f32 %v563, %v482
    %v566 = vmul.f32 %v564, %v483
    %569 = vrot.lane.b32.xlu0 %v563, 64
    %v570 = vpop.permute.xlu0 %569
    %571 = vrot.lane.b32.xlu0 %v564, 64
    %v572 = vpop.permute.xlu0 %571
    %v575 = vmul.f32 %v563, %v570
    %v576 = vmul.f32 %v564, %v572
    %579 = vrot.lane.b32.xlu0 %v575, 32
    %v580 = vpop.permute.xlu0 %579
    %581 = vrot.lane.b32.xlu0 %v576, 32
    %v582 = vpop.permute.xlu0 %581
    %v585 = vadd.f32 %v565, %v580
    %v586 = vadd.f32 %v566, %v582
    %v587 = vtanh.pop %v585
    %v588 = vtanh.pop %v586
    %591 = vrot.lane.b32.xlu0 %v587, 64
    %v592 = vpop.permute.xlu0 %591
    %593 = vrot.lane.b32.xlu0 %v588, 64
    %v594 = vpop.permute.xlu0 %593
    %v597 = vmul.f32 %v563, %v592
    %v598 = vmul.f32 %v564, %v594
    %s599 = scalar_lea.vmem %s0, 80
    %v600 = vld [vmem:[%s599] sm:$0xff]
    %v601 = vld [vmem:[%s599 + $0x8] sm:$0xff]
    %v602 = vpack.c.bf16 %v598, %v597
    %604 = vrot.lane.b32.xlu0 %v602, 32
    %v605 = vpop.permute.xlu0 %604
    %v607 = vsel %vm85, %v605, 0
    %609 = vmatprep.subr.bf16.mxu0 0
    %610 = vmatpush1.bf16.msra.mxu0 0
    %611 = vmatprep.subr.bf16.mxu0 0
    %612 = vmatpush1.bf16.msra.mxu0 0
    %613 = vmatprep.subr.bf16.mxu0 0
    %614 = vmatpush1.bf16.msra.mxu0 0
    %615 = vmatprep.subr.bf16.mxu0 0
    %616 = vmatpush1.bf16.msra.mxu0 0
    %617 = vmatprep.subr.bf16.mxu0 0
    %618 = vmatpush1.bf16.msra.mxu0 0
    %619 = vmatprep.subr.bf16.mxu0 0
    %620 = vmatpush1.bf16.msra.mxu0 0
    %621 = vmatprep.subr.bf16.mxu0 0
    %622 = vmatpush1.bf16.msra.mxu0 %v82
    %623 = vmatprep.subr.bf16.mxu0 0
    %624 = vmatpush1.bf16.msra.mxu0 %v81
    %625 = vmatprep.subr.bf16.mxu0 0
    %626 = vmatpush2.bf16.msra.mxu0 0
    %627 = vmatprep.subr.bf16.mxu0 0
    %628 = vmatpush2.bf16.msra.mxu0 0
    %629 = vmatprep.subr.bf16.mxu0 0
    %630 = vmatpush2.bf16.msra.mxu0 0
    %631 = vmatprep.subr.bf16.mxu0 0
    %632 = vmatpush2.bf16.msra.mxu0 0
    %633 = vmatprep.subr.bf16.mxu0 0
    %634 = vmatpush2.bf16.msra.mxu0 0
    %635 = vmatprep.subr.bf16.mxu0 0
    %636 = vmatpush2.bf16.msra.mxu0 0
    %637 = vmatprep.subr.bf16.mxu0 0
    %638 = vmatpush2.bf16.msra.mxu0 0
    %639 = vmatprep.subr.bf16.mxu0 0
    %640 = vmatpush2.bf16.msra.mxu0 0
    %641 = vmatprep.mubr.bf16.mxu0 0
    %642 = vmatmul.mubr.bf16.gmra.mxu0 %v607
    %v643 = vpop.f32.mrf.mxu0
    %v644 = vadd.f32 0.0, %v643
    %v645 = vpop.f32.mrf.mxu0
    %v646 = vpop.f32.mrf.mxu0
    %v647 = vadd.f32 0.0, %v646
    %v648 = vpop.f32.mrf.mxu0
    %649 = vdwg.mxu0
    %v650 = vadd.f32 %v600, %v644
    %v651 = vadd.f32 %v601, %v647
    %v652 = vtanh.pop %v650
    %v653 = vtanh.pop %v651
    %v654 = vxor.u32 %v650, 2147483648
    %v655 = vxor.u32 %v651, 2147483648
    %v656 = vmul.f32 %v654, 1.442695
    %v657 = vpow.pop %v656
    %v658 = vmul.f32 %v655, 1.442695
    %v659 = vpow.pop %v658
    %v660 = vadd.f32 %v657, 1.0
    %v661 = vadd.f32 %v659, 1.0
    %v662 = vrcp.pop %v660
    %v663 = vmul.f32 1.0, %v662
    %v664 = vrcp.pop %v661
    %v665 = vmul.f32 1.0, %v664
    %v666 = vsel %vm136, %v652, %v663
    %v667 = vsel %vm136, %v653, %v665
    %v668 = vmul.f32 %v666, %v585
    %v669 = vmul.f32 %v667, %v586
    %672 = vrot.lane.b32.xlu0 %v666, 64
    %v673 = vpop.permute.xlu0 %672
    %674 = vrot.lane.b32.xlu0 %v667, 64
    %v675 = vpop.permute.xlu0 %674
    %v678 = vmul.f32 %v666, %v673
    %v679 = vmul.f32 %v667, %v675
    %682 = vrot.lane.b32.xlu0 %v678, 32
    %v683 = vpop.permute.xlu0 %682
    %684 = vrot.lane.b32.xlu0 %v679, 32
    %v685 = vpop.permute.xlu0 %684
    %v688 = vadd.f32 %v668, %v683
    %v689 = vadd.f32 %v669, %v685
    %v690 = vtanh.pop %v688
    %v691 = vtanh.pop %v689
    %694 = vrot.lane.b32.xlu0 %v690, 64
    %v695 = vpop.permute.xlu0 %694
    %696 = vrot.lane.b32.xlu0 %v691, 64
    %v697 = vpop.permute.xlu0 %696
    %v700 = vmul.f32 %v666, %v695
    %v701 = vmul.f32 %v667, %v697
    %v702 = vld [vmem:[%s1] sm:$0x3]
    %v703 = vld [vmem:[%s3] sm:$0xf]
    %v704 = vld [vmem:[%s3 + $0x4] sm:$0xf]
    %v705 = vld [vmem:[%s3 + $0x8] sm:$0xf]
    %v706 = vld [vmem:[%s3 + $0xc] sm:$0xf]
    %v711 = vunpack.c.l.b16 %v703
    %v712 = vunpack.c.l.b16 %v704
    %v713 = vunpack.c.l.b16 %v705
    %v714 = vunpack.c.l.b16 %v706
    %v715 = vpack.c.b16 %v712, %v711
    %v716 = vpack.c.b16 %v714, %v713
    %719 = vmatprep.subr.bf16.mxu0 0
    %720 = vmatpush1.bf16.msra.mxu0 0
    %721 = vmatprep.subr.bf16.mxu0 0
    %722 = vmatpush1.bf16.msra.mxu0 0
    %723 = vmatprep.subr.bf16.mxu0 0
    %724 = vmatpush1.bf16.msra.mxu0 0
    %725 = vmatprep.subr.bf16.mxu0 0
    %726 = vmatpush1.bf16.msra.mxu0 0
    %727 = vmatprep.subr.bf16.mxu0 0
    %728 = vmatpush1.bf16.msra.mxu0 0
    %729 = vmatprep.subr.bf16.mxu0 0
    %730 = vmatpush1.bf16.msra.mxu0 0
    %731 = vmatprep.subr.bf16.mxu0 0
    %732 = vmatpush1.bf16.msra.mxu0 %v716
    %733 = vmatprep.subr.bf16.mxu0 0
    %734 = vmatpush1.bf16.msra.mxu0 %v715
    %735 = vmatprep.subr.bf16.mxu0 0
    %736 = vmatpush2.bf16.msra.mxu0 0
    %737 = vmatprep.subr.bf16.mxu0 0
    %738 = vmatpush2.bf16.msra.mxu0 0
    %739 = vmatprep.subr.bf16.mxu0 0
    %740 = vmatpush2.bf16.msra.mxu0 0
    %741 = vmatprep.subr.bf16.mxu0 0
    %742 = vmatpush2.bf16.msra.mxu0 0
    %743 = vmatprep.subr.bf16.mxu0 0
    %744 = vmatpush2.bf16.msra.mxu0 0
    %745 = vmatprep.subr.bf16.mxu0 0
    %746 = vmatpush2.bf16.msra.mxu0 0
    %747 = vmatprep.subr.bf16.mxu0 0
    %748 = vmatpush2.bf16.msra.mxu0 0
    %749 = vmatprep.subr.bf16.mxu0 0
    %750 = vmatpush2.bf16.msra.mxu0 0
    %751 = vmatprep.mubr.bf16.mxu0 0
    %752 = vmatmul.mubr.bf16.gmra.mxu0 %v87
    %v753 = vpop.f32.mrf.mxu0
    %v754 = vadd.f32 0.0, %v753
    %v755 = vpop.f32.mrf.mxu0
    %v756 = vpop.f32.mrf.mxu0
    %v757 = vpop.f32.mrf.mxu0
    %758 = vdwg.mxu0
    %v759 = vadd.f32 %v702, %v754
    %v760 = vtanh.pop %v759
    %v761 = vxor.u32 %v759, 2147483648
    %v762 = vmul.f32 %v761, 1.442695
    %v763 = vpow.pop %v762
    %v764 = vadd.f32 %v763, 1.0
    %v765 = vrcp.pop %v764
    %v766 = vmul.f32 1.0, %v765
    %v767 = vsel %vm136, %v760, %v766
    %v768 = vmul.f32 %v767, 0.0
    %770 = vrot.lane.b32.xlu0 %v767, 64
    %v771 = vpop.permute.xlu0 %770
    %v773 = vmul.f32 %v767, %v771
    %775 = vrot.lane.b32.xlu0 %v773, 32
    %v776 = vpop.permute.xlu0 %775
    %v778 = vadd.f32 %v768, %v776
    %v779 = vtanh.pop %v778
    %781 = vrot.lane.b32.xlu0 %v779, 64
    %v782 = vpop.permute.xlu0 %781
    %v784 = vmul.f32 %v767, %v782
    %s785 = scalar_lea.vmem %s1, 2
    %v786 = vld [vmem:[%s785] sm:$0x3]
    %v787 = vpack.c.bf16 %v784, %v784
    %789 = vrot.lane.b32.xlu0 %v787, 32
    %v790 = vpop.permute.xlu0 %789
    %v792 = vsel %vm85, %v790, 0
    %794 = vmatprep.subr.bf16.mxu0 0
    %795 = vmatpush1.bf16.msra.mxu0 0
    %796 = vmatprep.subr.bf16.mxu0 0
    %797 = vmatpush1.bf16.msra.mxu0 0
    %798 = vmatprep.subr.bf16.mxu0 0
    %799 = vmatpush1.bf16.msra.mxu0 0
    %800 = vmatprep.subr.bf16.mxu0 0
    %801 = vmatpush1.bf16.msra.mxu0 0
    %802 = vmatprep.subr.bf16.mxu0 0
    %803 = vmatpush1.bf16.msra.mxu0 0
    %804 = vmatprep.subr.bf16.mxu0 0
    %805 = vmatpush1.bf16.msra.mxu0 0
    %806 = vmatprep.subr.bf16.mxu0 0
    %807 = vmatpush1.bf16.msra.mxu0 %v716
    %808 = vmatprep.subr.bf16.mxu0 0
    %809 = vmatpush1.bf16.msra.mxu0 %v715
    %810 = vmatprep.subr.bf16.mxu0 0
    %811 = vmatpush2.bf16.msra.mxu0 0
    %812 = vmatprep.subr.bf16.mxu0 0
    %813 = vmatpush2.bf16.msra.mxu0 0
    %814 = vmatprep.subr.bf16.mxu0 0
    %815 = vmatpush2.bf16.msra.mxu0 0
    %816 = vmatprep.subr.bf16.mxu0 0
    %817 = vmatpush2.bf16.msra.mxu0 0
    %818 = vmatprep.subr.bf16.mxu0 0
    %819 = vmatpush2.bf16.msra.mxu0 0
    %820 = vmatprep.subr.bf16.mxu0 0
    %821 = vmatpush2.bf16.msra.mxu0 0
    %822 = vmatprep.subr.bf16.mxu0 0
    %823 = vmatpush2.bf16.msra.mxu0 0
    %824 = vmatprep.subr.bf16.mxu0 0
    %825 = vmatpush2.bf16.msra.mxu0 0
    %826 = vmatprep.mubr.bf16.mxu0 0
    %827 = vmatmul.mubr.bf16.gmra.mxu0 %v792
    %v828 = vpop.f32.mrf.mxu0
    %v829 = vadd.f32 0.0, %v828
    %v830 = vpop.f32.mrf.mxu0
    %v831 = vpop.f32.mrf.mxu0
    %v832 = vpop.f32.mrf.mxu0
    %833 = vdwg.mxu0
    %v834 = vadd.f32 %v786, %v829
    %v835 = vtanh.pop %v834
    %v836 = vxor.u32 %v834, 2147483648
    %v837 = vmul.f32 %v836, 1.442695
    %v838 = vpow.pop %v837
    %v839 = vadd.f32 %v838, 1.0
    %v840 = vrcp.pop %v839
    %v841 = vmul.f32 1.0, %v840
    %v842 = vsel %vm136, %v835, %v841
    %v843 = vmul.f32 %v842, %v778
    %845 = vrot.lane.b32.xlu0 %v842, 64
    %v846 = vpop.permute.xlu0 %845
    %v848 = vmul.f32 %v842, %v846
    %850 = vrot.lane.b32.xlu0 %v848, 32
    %v851 = vpop.permute.xlu0 %850
    %v853 = vadd.f32 %v843, %v851
    %v854 = vtanh.pop %v853
    %856 = vrot.lane.b32.xlu0 %v854, 64
    %v857 = vpop.permute.xlu0 %856
    %v859 = vmul.f32 %v842, %v857
    %s860 = scalar_lea.vmem %s1, 4
    %v861 = vld [vmem:[%s860] sm:$0x3]
    %v862 = vpack.c.bf16 %v859, %v859
    %864 = vrot.lane.b32.xlu0 %v862, 32
    %v865 = vpop.permute.xlu0 %864
    %v867 = vsel %vm85, %v865, 0
    %869 = vmatprep.subr.bf16.mxu0 0
    %870 = vmatpush1.bf16.msra.mxu0 0
    %871 = vmatprep.subr.bf16.mxu0 0
    %872 = vmatpush1.bf16.msra.mxu0 0
    %873 = vmatprep.subr.bf16.mxu0 0
    %874 = vmatpush1.bf16.msra.mxu0 0
    %875 = vmatprep.subr.bf16.mxu0 0
    %876 = vmatpush1.bf16.msra.mxu0 0
    %877 = vmatprep.subr.bf16.mxu0 0
    %878 = vmatpush1.bf16.msra.mxu0 0
    %879 = vmatprep.subr.bf16.mxu0 0
    %880 = vmatpush1.bf16.msra.mxu0 0
    %881 = vmatprep.subr.bf16.mxu0 0
    %882 = vmatpush1.bf16.msra.mxu0 %v716
    %883 = vmatprep.subr.bf16.mxu0 0
    %884 = vmatpush1.bf16.msra.mxu0 %v715
    %885 = vmatprep.subr.bf16.mxu0 0
    %886 = vmatpush2.bf16.msra.mxu0 0
    %887 = vmatprep.subr.bf16.mxu0 0
    %888 = vmatpush2.bf16.msra.mxu0 0
    %889 = vmatprep.subr.bf16.mxu0 0
    %890 = vmatpush2.bf16.msra.mxu0 0
    %891 = vmatprep.subr.bf16.mxu0 0
    %892 = vmatpush2.bf16.msra.mxu0 0
    %893 = vmatprep.subr.bf16.mxu0 0
    %894 = vmatpush2.bf16.msra.mxu0 0
    %895 = vmatprep.subr.bf16.mxu0 0
    %896 = vmatpush2.bf16.msra.mxu0 0
    %897 = vmatprep.subr.bf16.mxu0 0
    %898 = vmatpush2.bf16.msra.mxu0 0
    %899 = vmatprep.subr.bf16.mxu0 0
    %900 = vmatpush2.bf16.msra.mxu0 0
    %901 = vmatprep.mubr.bf16.mxu0 0
    %902 = vmatmul.mubr.bf16.gmra.mxu0 %v867
    %v903 = vpop.f32.mrf.mxu0
    %v904 = vadd.f32 0.0, %v903
    %v905 = vpop.f32.mrf.mxu0
    %v906 = vpop.f32.mrf.mxu0
    %v907 = vpop.f32.mrf.mxu0
    %908 = vdwg.mxu0
    %v909 = vadd.f32 %v861, %v904
    %v910 = vtanh.pop %v909
    %v911 = vxor.u32 %v909, 2147483648
    %v912 = vmul.f32 %v911, 1.442695
    %v913 = vpow.pop %v912
    %v914 = vadd.f32 %v913, 1.0
    %v915 = vrcp.pop %v914
    %v916 = vmul.f32 1.0, %v915
    %v917 = vsel %vm136, %v910, %v916
    %v918 = vmul.f32 %v917, %v853
    %920 = vrot.lane.b32.xlu0 %v917, 64
    %v921 = vpop.permute.xlu0 %920
    %v923 = vmul.f32 %v917, %v921
    %925 = vrot.lane.b32.xlu0 %v923, 32
    %v926 = vpop.permute.xlu0 %925
    %v928 = vadd.f32 %v918, %v926
    %v929 = vtanh.pop %v928
    %931 = vrot.lane.b32.xlu0 %v929, 64
    %v932 = vpop.permute.xlu0 %931
    %v934 = vmul.f32 %v917, %v932
    %s935 = scalar_lea.vmem %s1, 6
    %v936 = vld [vmem:[%s935] sm:$0x3]
    %v937 = vpack.c.bf16 %v934, %v934
    %939 = vrot.lane.b32.xlu0 %v937, 32
    %v940 = vpop.permute.xlu0 %939
    %v942 = vsel %vm85, %v940, 0
    %944 = vmatprep.subr.bf16.mxu0 0
    %945 = vmatpush1.bf16.msra.mxu0 0
    %946 = vmatprep.subr.bf16.mxu0 0
    %947 = vmatpush1.bf16.msra.mxu0 0
    %948 = vmatprep.subr.bf16.mxu0 0
    %949 = vmatpush1.bf16.msra.mxu0 0
    %950 = vmatprep.subr.bf16.mxu0 0
    %951 = vmatpush1.bf16.msra.mxu0 0
    %952 = vmatprep.subr.bf16.mxu0 0
    %953 = vmatpush1.bf16.msra.mxu0 0
    %954 = vmatprep.subr.bf16.mxu0 0
    %955 = vmatpush1.bf16.msra.mxu0 0
    %956 = vmatprep.subr.bf16.mxu0 0
    %957 = vmatpush1.bf16.msra.mxu0 %v716
    %958 = vmatprep.subr.bf16.mxu0 0
    %959 = vmatpush1.bf16.msra.mxu0 %v715
    %960 = vmatprep.subr.bf16.mxu0 0
    %961 = vmatpush2.bf16.msra.mxu0 0
    %962 = vmatprep.subr.bf16.mxu0 0
    %963 = vmatpush2.bf16.msra.mxu0 0
    %964 = vmatprep.subr.bf16.mxu0 0
    %965 = vmatpush2.bf16.msra.mxu0 0
    %966 = vmatprep.subr.bf16.mxu0 0
    %967 = vmatpush2.bf16.msra.mxu0 0
    %968 = vmatprep.subr.bf16.mxu0 0
    %969 = vmatpush2.bf16.msra.mxu0 0
    %970 = vmatprep.subr.bf16.mxu0 0
    %971 = vmatpush2.bf16.msra.mxu0 0
    %972 = vmatprep.subr.bf16.mxu0 0
    %973 = vmatpush2.bf16.msra.mxu0 0
    %974 = vmatprep.subr.bf16.mxu0 0
    %975 = vmatpush2.bf16.msra.mxu0 0
    %976 = vmatprep.mubr.bf16.mxu0 0
    %977 = vmatmul.mubr.bf16.gmra.mxu0 %v942
    %v978 = vpop.f32.mrf.mxu0
    %v979 = vadd.f32 0.0, %v978
    %v980 = vpop.f32.mrf.mxu0
    %v981 = vpop.f32.mrf.mxu0
    %v982 = vpop.f32.mrf.mxu0
    %983 = vdwg.mxu0
    %v984 = vadd.f32 %v936, %v979
    %v985 = vtanh.pop %v984
    %v986 = vxor.u32 %v984, 2147483648
    %v987 = vmul.f32 %v986, 1.442695
    %v988 = vpow.pop %v987
    %v989 = vadd.f32 %v988, 1.0
    %v990 = vrcp.pop %v989
    %v991 = vmul.f32 1.0, %v990
    %v992 = vsel %vm136, %v985, %v991
    %v993 = vmul.f32 %v992, %v928
    %995 = vrot.lane.b32.xlu0 %v992, 64
    %v996 = vpop.permute.xlu0 %995
    %v998 = vmul.f32 %v992, %v996
    %1000 = vrot.lane.b32.xlu0 %v998, 32
    %v1001 = vpop.permute.xlu0 %1000
    %v1003 = vadd.f32 %v993, %v1001
    %v1004 = vtanh.pop %v1003
    %1006 = vrot.lane.b32.xlu0 %v1004, 64
    %v1007 = vpop.permute.xlu0 %1006
    %v1009 = vmul.f32 %v992, %v1007
    %s1010 = scalar_lea.vmem %s1, 8
    %v1011 = vld [vmem:[%s1010] sm:$0x3]
    %v1012 = vpack.c.bf16 %v1009, %v1009
    %1014 = vrot.lane.b32.xlu0 %v1012, 32
    %v1015 = vpop.permute.xlu0 %1014
    %v1017 = vsel %vm85, %v1015, 0
    %1019 = vmatprep.subr.bf16.mxu0 0
    %1020 = vmatpush1.bf16.msra.mxu0 0
    %1021 = vmatprep.subr.bf16.mxu0 0
    %1022 = vmatpush1.bf16.msra.mxu0 0
    %1023 = vmatprep.subr.bf16.mxu0 0
    %1024 = vmatpush1.bf16.msra.mxu0 0
    %1025 = vmatprep.subr.bf16.mxu0 0
    %1026 = vmatpush1.bf16.msra.mxu0 0
    %1027 = vmatprep.subr.bf16.mxu0 0
    %1028 = vmatpush1.bf16.msra.mxu0 0
    %1029 = vmatprep.subr.bf16.mxu0 0
    %1030 = vmatpush1.bf16.msra.mxu0 0
    %1031 = vmatprep.subr.bf16.mxu0 0
    %1032 = vmatpush1.bf16.msra.mxu0 %v716
    %1033 = vmatprep.subr.bf16.mxu0 0
    %1034 = vmatpush1.bf16.msra.mxu0 %v715
    %1035 = vmatprep.subr.bf16.mxu0 0
    %1036 = vmatpush2.bf16.msra.mxu0 0
    %1037 = vmatprep.subr.bf16.mxu0 0
    %1038 = vmatpush2.bf16.msra.mxu0 0
    %1039 = vmatprep.subr.bf16.mxu0 0
    %1040 = vmatpush2.bf16.msra.mxu0 0
    %1041 = vmatprep.subr.bf16.mxu0 0
    %1042 = vmatpush2.bf16.msra.mxu0 0
    %1043 = vmatprep.subr.bf16.mxu0 0
    %1044 = vmatpush2.bf16.msra.mxu0 0
    %1045 = vmatprep.subr.bf16.mxu0 0
    %1046 = vmatpush2.bf16.msra.mxu0 0
    %1047 = vmatprep.subr.bf16.mxu0 0
    %1048 = vmatpush2.bf16.msra.mxu0 0
    %1049 = vmatprep.subr.bf16.mxu0 0
    %1050 = vmatpush2.bf16.msra.mxu0 0
    %1051 = vmatprep.mubr.bf16.mxu0 0
    %1052 = vmatmul.mubr.bf16.gmra.mxu0 %v1017
    %v1053 = vpop.f32.mrf.mxu0
    %v1054 = vadd.f32 0.0, %v1053
    %v1055 = vpop.f32.mrf.mxu0
    %v1056 = vpop.f32.mrf.mxu0
    %v1057 = vpop.f32.mrf.mxu0
    %1058 = vdwg.mxu0
    %v1059 = vadd.f32 %v1011, %v1054
    %v1060 = vtanh.pop %v1059
    %v1061 = vxor.u32 %v1059, 2147483648
    %v1062 = vmul.f32 %v1061, 1.442695
    %v1063 = vpow.pop %v1062
    %v1064 = vadd.f32 %v1063, 1.0
    %v1065 = vrcp.pop %v1064
    %v1066 = vmul.f32 1.0, %v1065
    %v1067 = vsel %vm136, %v1060, %v1066
    %v1068 = vmul.f32 %v1067, %v1003
    %1070 = vrot.lane.b32.xlu0 %v1067, 64
    %v1071 = vpop.permute.xlu0 %1070
    %v1073 = vmul.f32 %v1067, %v1071
    %1075 = vrot.lane.b32.xlu0 %v1073, 32
    %v1076 = vpop.permute.xlu0 %1075
    %v1078 = vadd.f32 %v1068, %v1076
    %v1079 = vtanh.pop %v1078
    %1081 = vrot.lane.b32.xlu0 %v1079, 64
    %v1082 = vpop.permute.xlu0 %1081
    %v1084 = vmul.f32 %v1067, %v1082
    %v1085 = vpack.c.bf16 %v701, %v700
    %v1086 = vld [vmem:[%s4] sm:$0xff]
    %v1087 = vld [vmem:[%s4 + $0x8] sm:$0xff]
    %v1088 = vld [vmem:[%s4 + $0x10] sm:$0xff]
    %v1089 = vld [vmem:[%s4 + $0x18] sm:$0xff]
    %v1090 = vld [vmem:[%s4 + $0x20] sm:$0xff]
    %v1091 = vld [vmem:[%s4 + $0x28] sm:$0xff]
    %v1092 = vld [vmem:[%s4 + $0x30] sm:$0xff]
    %v1093 = vld [vmem:[%s4 + $0x38] sm:$0xff]
    %1095 = vrot.lane.b32.xlu0 %v1085, 32
    %v1096 = vpop.permute.xlu0 %1095
    %v1105 = vunpack.c.l.b16 %v1086
    %v1106 = vunpack.c.h.b16 %v1086
    %v1107 = vunpack.c.l.b16 %v1087
    %v1108 = vunpack.c.h.b16 %v1087
    %v1109 = vunpack.c.l.b16 %v1088
    %v1110 = vunpack.c.h.b16 %v1088
    %v1111 = vunpack.c.l.b16 %v1089
    %v1112 = vunpack.c.h.b16 %v1089
    %v1113 = vunpack.c.l.b16 %v1090
    %v1114 = vunpack.c.h.b16 %v1090
    %v1115 = vunpack.c.l.b16 %v1091
    %v1116 = vunpack.c.h.b16 %v1091
    %v1117 = vunpack.c.l.b16 %v1092
    %v1118 = vunpack.c.h.b16 %v1092
    %v1119 = vunpack.c.l.b16 %v1093
    %v1120 = vunpack.c.h.b16 %v1093
    %v1121 = vpack.c.b16 %v1109, %v1105
    %v1122 = vpack.c.b16 %v1110, %v1106
    %v1123 = vpack.c.b16 %v1111, %v1107
    %v1124 = vpack.c.b16 %v1112, %v1108
    %v1125 = vpack.c.b16 %v1117, %v1113
    %v1126 = vpack.c.b16 %v1118, %v1114
    %v1127 = vpack.c.b16 %v1119, %v1115
    %v1128 = vpack.c.b16 %v1120, %v1116
    %v1138 = vsel %vm85, %v1096, 0
    %1140 = vmatprep.subr.bf16.mxu0 0
    %1141 = vmatpush1.bf16.msra.mxu0 0
    %1142 = vmatprep.subr.bf16.mxu0 0
    %1143 = vmatpush1.bf16.msra.mxu0 0
    %1144 = vmatprep.subr.bf16.mxu0 0
    %1145 = vmatpush1.bf16.msra.mxu0 0
    %1146 = vmatprep.subr.bf16.mxu0 0
    %1147 = vmatpush1.bf16.msra.mxu0 0
    %1148 = vmatprep.subr.bf16.mxu0 0
    %1149 = vmatpush1.bf16.msra.mxu0 0
    %1150 = vmatprep.subr.bf16.mxu0 0
    %1151 = vmatpush1.bf16.msra.mxu0 0
    %1152 = vmatprep.subr.bf16.mxu0 %v1126
    %1153 = vmatpush1.bf16.msra.mxu0 %v1125
    %1154 = vmatprep.subr.bf16.mxu0 %v1122
    %1155 = vmatpush1.bf16.msra.mxu0 %v1121
    %1156 = vmatprep.subr.bf16.mxu0 0
    %1157 = vmatpush2.bf16.msra.mxu0 0
    %1158 = vmatprep.subr.bf16.mxu0 0
    %1159 = vmatpush2.bf16.msra.mxu0 0
    %1160 = vmatprep.subr.bf16.mxu0 0
    %1161 = vmatpush2.bf16.msra.mxu0 0
    %1162 = vmatprep.subr.bf16.mxu0 0
    %1163 = vmatpush2.bf16.msra.mxu0 0
    %1164 = vmatprep.subr.bf16.mxu0 0
    %1165 = vmatpush2.bf16.msra.mxu0 0
    %1166 = vmatprep.subr.bf16.mxu0 0
    %1167 = vmatpush2.bf16.msra.mxu0 0
    %1168 = vmatprep.subr.bf16.mxu0 0
    %1169 = vmatpush2.bf16.msra.mxu0 0
    %1170 = vmatprep.subr.bf16.mxu0 0
    %1171 = vmatpush2.bf16.msra.mxu0 0
    %1172 = vmatprep.mubr.bf16.mxu0 0
    %1173 = vmatmul.mubr.bf16.gmra.mxu0 %v1138
    %v1174 = vpop.f32.mrf.mxu0
    %v1175 = vadd.f32 0.0, %v1174
    %v1176 = vpop.f32.mrf.mxu0
    %v1177 = vadd.f32 0.0, %v1176
    %v1178 = vpop.f32.mrf.mxu0
    %v1179 = vadd.f32 0.0, %v1178
    %v1180 = vpop.f32.mrf.mxu0
    %v1181 = vadd.f32 0.0, %v1180
    %1182 = vdwg.mxu0
    %1183 = vmatprep.subr.bf16.mxu0 0
    %1184 = vmatpush1.bf16.msra.mxu0 0
    %1185 = vmatprep.subr.bf16.mxu0 0
    %1186 = vmatpush1.bf16.msra.mxu0 0
    %1187 = vmatprep.subr.bf16.mxu0 0
    %1188 = vmatpush1.bf16.msra.mxu0 0
    %1189 = vmatprep.subr.bf16.mxu0 0
    %1190 = vmatpush1.bf16.msra.mxu0 0
    %1191 = vmatprep.subr.bf16.mxu0 0
    %1192 = vmatpush1.bf16.msra.mxu0 0
    %1193 = vmatprep.subr.bf16.mxu0 0
    %1194 = vmatpush1.bf16.msra.mxu0 0
    %1195 = vmatprep.subr.bf16.mxu0 %v1128
    %1196 = vmatpush1.bf16.msra.mxu0 %v1127
    %1197 = vmatprep.subr.bf16.mxu0 %v1124
    %1198 = vmatpush1.bf16.msra.mxu0 %v1123
    %1199 = vmatprep.subr.bf16.mxu0 0
    %1200 = vmatpush2.bf16.msra.mxu0 0
    %1201 = vmatprep.subr.bf16.mxu0 0
    %1202 = vmatpush2.bf16.msra.mxu0 0
    %1203 = vmatprep.subr.bf16.mxu0 0
    %1204 = vmatpush2.bf16.msra.mxu0 0
    %1205 = vmatprep.subr.bf16.mxu0 0
    %1206 = vmatpush2.bf16.msra.mxu0 0
    %1207 = vmatprep.subr.bf16.mxu0 0
    %1208 = vmatpush2.bf16.msra.mxu0 0
    %1209 = vmatprep.subr.bf16.mxu0 0
    %1210 = vmatpush2.bf16.msra.mxu0 0
    %1211 = vmatprep.subr.bf16.mxu0 0
    %1212 = vmatpush2.bf16.msra.mxu0 0
    %1213 = vmatprep.subr.bf16.mxu0 0
    %1214 = vmatpush2.bf16.msra.mxu0 0
    %1215 = vmatprep.mubr.bf16.mxu0 0
    %1216 = vmatmul.mubr.bf16.gmra.mxu0 %v1138
    %v1217 = vpop.f32.mrf.mxu0
    %v1218 = vadd.f32 0.0, %v1217
    %v1219 = vpop.f32.mrf.mxu0
    %v1220 = vadd.f32 0.0, %v1219
    %v1221 = vpop.f32.mrf.mxu0
    %v1222 = vadd.f32 0.0, %v1221
    %v1223 = vpop.f32.mrf.mxu0
    %v1224 = vadd.f32 0.0, %v1223
    %1225 = vdwg.mxu0
    %v1226 = vld [vmem:[%s5] sm:$0xff]
    %v1227 = vld [vmem:[%s5 + $0x8] sm:$0xff]
    %v1228 = vld [vmem:[%s5 + $0x10] sm:$0xff]
    %v1229 = vld [vmem:[%s5 + $0x18] sm:$0xff]
    %v1230 = vadd.f32 %v1175, %v1226
    %v1231 = vadd.f32 %v1177, %v1227
    %v1232 = vadd.f32 %v1218, %v1228
    %v1233 = vadd.f32 %v1220, %v1229
    %v1234 = vadd.f32 %v1179, %v1226
    %v1235 = vadd.f32 %v1181, %v1227
    %v1236 = vadd.f32 %v1222, %v1228
    %v1237 = vadd.f32 %v1224, %v1229
    %v1238 = vpack.c.bf16 %v1084, %v1084
    %v1239 = vld [vmem:[%s6] sm:$0xff]
    %v1240 = vld [vmem:[%s6 + $0x8] sm:$0xff]
    %v1241 = vld [vmem:[%s6 + $0x10] sm:$0xff]
    %v1242 = vld [vmem:[%s6 + $0x18] sm:$0xff]
    %v1243 = vld [vmem:[%s7] sm:$0x3]
    %v1245 = vlaneseq
    %v1246 = vshrl.u32 %v1245, 7
    %v1247 = vsub.s32 0, %v1246
    %v1248 = vrot.slane %v1243, %v1247
    %v1249 = vlaneseq
    %v1250 = vshrl.u32 %v1249, 7
    %v1251 = vsub.s32 1, %v1250
    %v1252 = vrot.slane %v1243, %v1251
    %1256 = vrot.lane.b32.xlu0 %v1238, 32
    %v1257 = vpop.permute.xlu0 %1256
    %v1262 = vunpack.c.l.b16 %v1239
    %v1263 = vunpack.c.h.b16 %v1239
    %v1264 = vunpack.c.l.b16 %v1240
    %v1265 = vunpack.c.h.b16 %v1240
    %v1266 = vunpack.c.l.b16 %v1241
    %v1267 = vunpack.c.h.b16 %v1241
    %v1268 = vunpack.c.l.b16 %v1242
    %v1269 = vunpack.c.h.b16 %v1242
    %v1270 = vpack.c.b16 %v1264, %v1262
    %v1271 = vpack.c.b16 %v1265, %v1263
    %v1272 = vpack.c.b16 %v1268, %v1266
    %v1273 = vpack.c.b16 %v1269, %v1267
    %v1279 = vsel %vm85, %v1257, 0
    %1281 = vmatprep.subr.bf16.mxu0 0
    %1282 = vmatpush1.bf16.msra.mxu0 0
    %1283 = vmatprep.subr.bf16.mxu0 0
    %1284 = vmatpush1.bf16.msra.mxu0 0
    %1285 = vmatprep.subr.bf16.mxu0 0
    %1286 = vmatpush1.bf16.msra.mxu0 0
    %1287 = vmatprep.subr.bf16.mxu0 0
    %1288 = vmatpush1.bf16.msra.mxu0 0
    %1289 = vmatprep.subr.bf16.mxu0 0
    %1290 = vmatpush1.bf16.msra.mxu0 0
    %1291 = vmatprep.subr.bf16.mxu0 0
    %1292 = vmatpush1.bf16.msra.mxu0 0
    %1293 = vmatprep.subr.bf16.mxu0 %v1273
    %1294 = vmatpush1.bf16.msra.mxu0 %v1272
    %1295 = vmatprep.subr.bf16.mxu0 %v1271
    %1296 = vmatpush1.bf16.msra.mxu0 %v1270
    %1297 = vmatprep.subr.bf16.mxu0 0
    %1298 = vmatpush2.bf16.msra.mxu0 0
    %1299 = vmatprep.subr.bf16.mxu0 0
    %1300 = vmatpush2.bf16.msra.mxu0 0
    %1301 = vmatprep.subr.bf16.mxu0 0
    %1302 = vmatpush2.bf16.msra.mxu0 0
    %1303 = vmatprep.subr.bf16.mxu0 0
    %1304 = vmatpush2.bf16.msra.mxu0 0
    %1305 = vmatprep.subr.bf16.mxu0 0
    %1306 = vmatpush2.bf16.msra.mxu0 0
    %1307 = vmatprep.subr.bf16.mxu0 0
    %1308 = vmatpush2.bf16.msra.mxu0 0
    %1309 = vmatprep.subr.bf16.mxu0 0
    %1310 = vmatpush2.bf16.msra.mxu0 0
    %1311 = vmatprep.subr.bf16.mxu0 0
    %1312 = vmatpush2.bf16.msra.mxu0 0
    %1313 = vmatprep.mubr.bf16.mxu0 0
    %1314 = vmatmul.mubr.bf16.gmra.mxu0 %v1279
    %v1315 = vpop.f32.mrf.mxu0
    %v1316 = vadd.f32 %v1248, %v1315
    %v1317 = vpop.f32.mrf.mxu0
    %v1318 = vadd.f32 %v1252, %v1317
    %v1319 = vpop.f32.mrf.mxu0
    %v1320 = vpop.f32.mrf.mxu0
    %1321 = vdwg.mxu0
    %v1324 = vcombine.low %v1316, %v1318
    %v1326 = vunpack.c.l.s4 1966171168
    %v1327 = vunpack.c.0.s8 %v1326
    %v1328 = vlaneseq
    %v1329 = vshrl.u32 %v1328, 7
    %v1330 = vsub.s32 %v1327, %v1329
    %v1331 = vrot.slane %v1324, %v1330
    %v1332 = vcombine.high %v1331, %v1331
    %v1334 = vunpack.c.l.s4 1966171168
    %v1335 = vunpack.c.0.s8 %v1334
    %v1336 = vlaneseq
    %v1337 = vshrl.u32 %v1336, 7
    %v1338 = vsub.s32 %v1335, %v1337
    %v1339 = vrot.slane %v1331, %v1338
    %v1341 = vunpack.c.l.s4 1966171168
    %v1342 = vunpack.c.0.s8 %v1341
    %v1343 = vlaneseq
    %v1344 = vshrl.u32 %v1343, 7
    %v1345 = vsub.s32 %v1342, %v1344
    %v1346 = vrot.slane %v1332, %v1345
    %v1347 = vlaneseq
    %v1348 = vshrl.u32 %v1347, 7
    %v1349 = vsub.s32 0, %v1348
    %v1350 = vrot.slane %v1339, %v1349
    %v1351 = vlaneseq
    %v1352 = vshrl.u32 %v1351, 7
    %v1353 = vsub.s32 1, %v1352
    %v1354 = vrot.slane %v1339, %v1353
    %v1355 = vlaneseq
    %v1356 = vshrl.u32 %v1355, 7
    %v1357 = vsub.s32 0, %v1356
    %v1358 = vrot.slane %v1346, %v1357
    %v1359 = vlaneseq
    %v1360 = vshrl.u32 %v1359, 7
    %v1361 = vsub.s32 1, %v1360
    %v1362 = vrot.slane %v1346, %v1361
    %v1367 = vadd.f32 %v1230, %v1350
    %v1368 = vadd.f32 %v1231, %v1354
    %v1369 = vadd.f32 %v1234, %v1358
    %v1370 = vadd.f32 %v1235, %v1362
    %v1375 = vcombine.low %v1367, %v1368
    %v1376 = vcombine.high %v1367, %v1368
    %v1378 = vunpack.c.l.s4 1966171168
    %v1379 = vunpack.c.0.s8 %v1378
    %v1380 = vlaneseq
    %v1381 = vshrl.u32 %v1380, 7
    %v1382 = vsub.s32 %v1379, %v1381
    %v1383 = vrot.slane %v1375, %v1382
    %v1385 = vunpack.c.l.s4 1966171168
    %v1386 = vunpack.c.0.s8 %v1385
    %v1387 = vlaneseq
    %v1388 = vshrl.u32 %v1387, 7
    %v1389 = vsub.s32 %v1386, %v1388
    %v1390 = vrot.slane %v1376, %v1389
    %v1391 = vcombine.high %v1383, %v1383
    %v1392 = vcombine.high %v1390, %v1390
    %v1394 = vunpack.c.l.s4 1966171168
    %v1395 = vunpack.c.0.s8 %v1394
    %v1396 = vlaneseq
    %v1397 = vshrl.u32 %v1396, 7
    %v1398 = vsub.s32 %v1395, %v1397
    %v1399 = vrot.slane %v1383, %v1398
    %v1401 = vunpack.c.l.s4 1966171168
    %v1402 = vunpack.c.0.s8 %v1401
    %v1403 = vlaneseq
    %v1404 = vshrl.u32 %v1403, 7
    %v1405 = vsub.s32 %v1402, %v1404
    %v1406 = vrot.slane %v1390, %v1405
    %v1408 = vunpack.c.l.s4 1966171168
    %v1409 = vunpack.c.0.s8 %v1408
    %v1410 = vlaneseq
    %v1411 = vshrl.u32 %v1410, 7
    %v1412 = vsub.s32 %v1409, %v1411
    %v1413 = vrot.slane %v1391, %v1412
    %v1415 = vunpack.c.l.s4 1966171168
    %v1416 = vunpack.c.0.s8 %v1415
    %v1417 = vlaneseq
    %v1418 = vshrl.u32 %v1417, 7
    %v1419 = vsub.s32 %v1416, %v1418
    %v1420 = vrot.slane %v1392, %v1419
    %v1421 = vcombine.high %v1399, %v1399
    %v1422 = vcombine.high %v1406, %v1406
    %v1423 = vcombine.high %v1413, %v1413
    %v1424 = vcombine.high %v1420, %v1420
    %v1425 = vcombine.low %v1369, %v1370
    %v1426 = vcombine.high %v1369, %v1370
    %v1428 = vunpack.c.l.s4 1966171168
    %v1429 = vunpack.c.0.s8 %v1428
    %v1430 = vlaneseq
    %v1431 = vshrl.u32 %v1430, 7
    %v1432 = vsub.s32 %v1429, %v1431
    %v1433 = vrot.slane %v1425, %v1432
    %v1435 = vunpack.c.l.s4 1966171168
    %v1436 = vunpack.c.0.s8 %v1435
    %v1437 = vlaneseq
    %v1438 = vshrl.u32 %v1437, 7
    %v1439 = vsub.s32 %v1436, %v1438
    %v1440 = vrot.slane %v1426, %v1439
    %v1441 = vcombine.high %v1433, %v1433
    %v1442 = vcombine.high %v1440, %v1440
    %v1444 = vunpack.c.l.s4 1966171168
    %v1445 = vunpack.c.0.s8 %v1444
    %v1446 = vlaneseq
    %v1447 = vshrl.u32 %v1446, 7
    %v1448 = vsub.s32 %v1445, %v1447
    %v1449 = vrot.slane %v1433, %v1448
    %v1451 = vunpack.c.l.s4 1966171168
    %v1452 = vunpack.c.0.s8 %v1451
    %v1453 = vlaneseq
    %v1454 = vshrl.u32 %v1453, 7
    %v1455 = vsub.s32 %v1452, %v1454
    %v1456 = vrot.slane %v1440, %v1455
    %v1458 = vunpack.c.l.s4 1966171168
    %v1459 = vunpack.c.0.s8 %v1458
    %v1460 = vlaneseq
    %v1461 = vshrl.u32 %v1460, 7
    %v1462 = vsub.s32 %v1459, %v1461
    %v1463 = vrot.slane %v1441, %v1462
    %v1465 = vunpack.c.l.s4 1966171168
    %v1466 = vunpack.c.0.s8 %v1465
    %v1467 = vlaneseq
    %v1468 = vshrl.u32 %v1467, 7
    %v1469 = vsub.s32 %v1466, %v1468
    %v1470 = vrot.slane %v1442, %v1469
    %v1471 = vcombine.high %v1449, %v1449
    %v1472 = vcombine.high %v1456, %v1456
    %v1473 = vcombine.high %v1463, %v1463
    %v1474 = vcombine.high %v1470, %v1470
    %v1475 = vlaneseq
    %v1476 = vshrl.u32 %v1475, 7
    %v1477 = vsub.s32 0, %v1476
    %v1478 = vrot.slane %v1399, %v1477
    %v1479 = vlaneseq
    %v1480 = vshrl.u32 %v1479, 7
    %v1481 = vsub.s32 1, %v1480
    %v1482 = vrot.slane %v1399, %v1481
    %v1483 = vlaneseq
    %v1484 = vshrl.u32 %v1483, 7
    %v1485 = vsub.s32 0, %v1484
    %v1486 = vrot.slane %v1413, %v1485
    %v1487 = vlaneseq
    %v1488 = vshrl.u32 %v1487, 7
    %v1489 = vsub.s32 1, %v1488
    %v1490 = vrot.slane %v1413, %v1489
    %v1491 = vlaneseq
    %v1492 = vshrl.u32 %v1491, 7
    %v1493 = vsub.s32 0, %v1492
    %v1494 = vrot.slane %v1421, %v1493
    %v1495 = vlaneseq
    %v1496 = vshrl.u32 %v1495, 7
    %v1497 = vsub.s32 1, %v1496
    %v1498 = vrot.slane %v1421, %v1497
    %v1499 = vlaneseq
    %v1500 = vshrl.u32 %v1499, 7
    %v1501 = vsub.s32 0, %v1500
    %v1502 = vrot.slane %v1423, %v1501
    %v1503 = vlaneseq
    %v1504 = vshrl.u32 %v1503, 7
    %v1505 = vsub.s32 1, %v1504
    %v1506 = vrot.slane %v1423, %v1505
    %v1507 = vlaneseq
    %v1508 = vshrl.u32 %v1507, 7
    %v1509 = vsub.s32 0, %v1508
    %v1510 = vrot.slane %v1406, %v1509
    %v1511 = vlaneseq
    %v1512 = vshrl.u32 %v1511, 7
    %v1513 = vsub.s32 1, %v1512
    %v1514 = vrot.slane %v1406, %v1513
    %v1515 = vlaneseq
    %v1516 = vshrl.u32 %v1515, 7
    %v1517 = vsub.s32 0, %v1516
    %v1518 = vrot.slane %v1420, %v1517
    %v1519 = vlaneseq
    %v1520 = vshrl.u32 %v1519, 7
    %v1521 = vsub.s32 1, %v1520
    %v1522 = vrot.slane %v1420, %v1521
    %v1523 = vlaneseq
    %v1524 = vshrl.u32 %v1523, 7
    %v1525 = vsub.s32 0, %v1524
    %v1526 = vrot.slane %v1422, %v1525
    %v1527 = vlaneseq
    %v1528 = vshrl.u32 %v1527, 7
    %v1529 = vsub.s32 1, %v1528
    %v1530 = vrot.slane %v1422, %v1529
    %v1531 = vlaneseq
    %v1532 = vshrl.u32 %v1531, 7
    %v1533 = vsub.s32 0, %v1532
    %v1534 = vrot.slane %v1424, %v1533
    %v1535 = vlaneseq
    %v1536 = vshrl.u32 %v1535, 7
    %v1537 = vsub.s32 1, %v1536
    %v1538 = vrot.slane %v1424, %v1537
    %v1539 = vlaneseq
    %v1540 = vshrl.u32 %v1539, 7
    %v1541 = vsub.s32 0, %v1540
    %v1542 = vrot.slane %v1449, %v1541
    %v1543 = vlaneseq
    %v1544 = vshrl.u32 %v1543, 7
    %v1545 = vsub.s32 1, %v1544
    %v1546 = vrot.slane %v1449, %v1545
    %v1547 = vlaneseq
    %v1548 = vshrl.u32 %v1547, 7
    %v1549 = vsub.s32 0, %v1548
    %v1550 = vrot.slane %v1463, %v1549
    %v1551 = vlaneseq
    %v1552 = vshrl.u32 %v1551, 7
    %v1553 = vsub.s32 1, %v1552
    %v1554 = vrot.slane %v1463, %v1553
    %v1555 = vlaneseq
    %v1556 = vshrl.u32 %v1555, 7
    %v1557 = vsub.s32 0, %v1556
    %v1558 = vrot.slane %v1471, %v1557
    %v1559 = vlaneseq
    %v1560 = vshrl.u32 %v1559, 7
    %v1561 = vsub.s32 1, %v1560
    %v1562 = vrot.slane %v1471, %v1561
    %v1563 = vlaneseq
    %v1564 = vshrl.u32 %v1563, 7
    %v1565 = vsub.s32 0, %v1564
    %v1566 = vrot.slane %v1473, %v1565
    %v1567 = vlaneseq
    %v1568 = vshrl.u32 %v1567, 7
    %v1569 = vsub.s32 1, %v1568
    %v1570 = vrot.slane %v1473, %v1569
    %v1571 = vlaneseq
    %v1572 = vshrl.u32 %v1571, 7
    %v1573 = vsub.s32 0, %v1572
    %v1574 = vrot.slane %v1456, %v1573
    %v1575 = vlaneseq
    %v1576 = vshrl.u32 %v1575, 7
    %v1577 = vsub.s32 1, %v1576
    %v1578 = vrot.slane %v1456, %v1577
    %v1579 = vlaneseq
    %v1580 = vshrl.u32 %v1579, 7
    %v1581 = vsub.s32 0, %v1580
    %v1582 = vrot.slane %v1470, %v1581
    %v1583 = vlaneseq
    %v1584 = vshrl.u32 %v1583, 7
    %v1585 = vsub.s32 1, %v1584
    %v1586 = vrot.slane %v1470, %v1585
    %v1587 = vlaneseq
    %v1588 = vshrl.u32 %v1587, 7
    %v1589 = vsub.s32 0, %v1588
    %v1590 = vrot.slane %v1472, %v1589
    %v1591 = vlaneseq
    %v1592 = vshrl.u32 %v1591, 7
    %v1593 = vsub.s32 1, %v1592
    %v1594 = vrot.slane %v1472, %v1593
    %v1595 = vlaneseq
    %v1596 = vshrl.u32 %v1595, 7
    %v1597 = vsub.s32 0, %v1596
    %v1598 = vrot.slane %v1474, %v1597
    %v1599 = vlaneseq
    %v1600 = vshrl.u32 %v1599, 7
    %v1601 = vsub.s32 1, %v1600
    %v1602 = vrot.slane %v1474, %v1601
    %v1635 = vadd.f32 %v1478, %v1232
    %v1636 = vadd.f32 %v1482, %v1233
    %v1637 = vadd.f32 %v1486, %v1232
    %v1638 = vadd.f32 %v1490, %v1233
    %v1639 = vadd.f32 %v1494, %v1232
    %v1640 = vadd.f32 %v1498, %v1233
    %v1641 = vadd.f32 %v1502, %v1232
    %v1642 = vadd.f32 %v1506, %v1233
    %v1643 = vadd.f32 %v1510, %v1232
    %v1644 = vadd.f32 %v1514, %v1233
    %v1645 = vadd.f32 %v1518, %v1232
    %v1646 = vadd.f32 %v1522, %v1233
    %v1647 = vadd.f32 %v1526, %v1232
    %v1648 = vadd.f32 %v1530, %v1233
    %v1649 = vadd.f32 %v1534, %v1232
    %v1650 = vadd.f32 %v1538, %v1233
    %v1651 = vadd.f32 %v1542, %v1236
    %v1652 = vadd.f32 %v1546, %v1237
    %v1653 = vadd.f32 %v1550, %v1236
    %v1654 = vadd.f32 %v1554, %v1237
    %v1655 = vadd.f32 %v1558, %v1236
    %v1656 = vadd.f32 %v1562, %v1237
    %v1657 = vadd.f32 %v1566, %v1236
    %v1658 = vadd.f32 %v1570, %v1237
    %v1659 = vadd.f32 %v1574, %v1236
    %v1660 = vadd.f32 %v1578, %v1237
    %v1661 = vadd.f32 %v1582, %v1236
    %v1662 = vadd.f32 %v1586, %v1237
    %v1663 = vadd.f32 %v1590, %v1236
    %v1664 = vadd.f32 %v1594, %v1237
    %v1665 = vadd.f32 %v1598, %v1236
    %v1666 = vadd.f32 %v1602, %v1237
    %v1667 = vmax.f32 %v1635, 0.0
    %v1668 = vmax.f32 %v1636, 0.0
    %v1669 = vmax.f32 %v1637, 0.0
    %v1670 = vmax.f32 %v1638, 0.0
    %v1671 = vmax.f32 %v1639, 0.0
    %v1672 = vmax.f32 %v1640, 0.0
    %v1673 = vmax.f32 %v1641, 0.0
    %v1674 = vmax.f32 %v1642, 0.0
    %v1675 = vmax.f32 %v1643, 0.0
    %v1676 = vmax.f32 %v1644, 0.0
    %v1677 = vmax.f32 %v1645, 0.0
    %v1678 = vmax.f32 %v1646, 0.0
    %v1679 = vmax.f32 %v1647, 0.0
    %v1680 = vmax.f32 %v1648, 0.0
    %v1681 = vmax.f32 %v1649, 0.0
    %v1682 = vmax.f32 %v1650, 0.0
    %v1683 = vmax.f32 %v1651, 0.0
    %v1684 = vmax.f32 %v1652, 0.0
    %v1685 = vmax.f32 %v1653, 0.0
    %v1686 = vmax.f32 %v1654, 0.0
    %v1687 = vmax.f32 %v1655, 0.0
    %v1688 = vmax.f32 %v1656, 0.0
    %v1689 = vmax.f32 %v1657, 0.0
    %v1690 = vmax.f32 %v1658, 0.0
    %v1691 = vmax.f32 %v1659, 0.0
    %v1692 = vmax.f32 %v1660, 0.0
    %v1693 = vmax.f32 %v1661, 0.0
    %v1694 = vmax.f32 %v1662, 0.0
    %v1695 = vmax.f32 %v1663, 0.0
    %v1696 = vmax.f32 %v1664, 0.0
    %v1697 = vmax.f32 %v1665, 0.0
    %v1698 = vmax.f32 %v1666, 0.0
    %v1699 = vpack.c.bf16 %v1669, %v1667
    %v1700 = vpack.c.bf16 %v1670, %v1668
    %v1701 = vpack.c.bf16 %v1673, %v1671
    %v1702 = vpack.c.bf16 %v1674, %v1672
    %v1703 = vpack.c.bf16 %v1677, %v1675
    %v1704 = vpack.c.bf16 %v1678, %v1676
    %v1705 = vpack.c.bf16 %v1681, %v1679
    %v1706 = vpack.c.bf16 %v1682, %v1680
    %v1707 = vpack.c.bf16 %v1685, %v1683
    %v1708 = vpack.c.bf16 %v1686, %v1684
    %v1709 = vpack.c.bf16 %v1689, %v1687
    %v1710 = vpack.c.bf16 %v1690, %v1688
    %v1711 = vpack.c.bf16 %v1693, %v1691
    %v1712 = vpack.c.bf16 %v1694, %v1692
    %v1713 = vpack.c.bf16 %v1697, %v1695
    %v1714 = vpack.c.bf16 %v1698, %v1696
    %v1715 = vld [vmem:[%s8] sm:$0xff]
    %v1716 = vld [vmem:[%s8 + $0x8] sm:$0xff]
    %v1717 = vld [vmem:[%s8 + $0x10] sm:$0xff]
    %v1718 = vld [vmem:[%s8 + $0x18] sm:$0xff]
    %v1719 = vld [vmem:[%s8 + $0x20] sm:$0xff]
    %v1720 = vld [vmem:[%s8 + $0x28] sm:$0xff]
    %v1721 = vld [vmem:[%s8 + $0x30] sm:$0xff]
    %v1722 = vld [vmem:[%s8 + $0x38] sm:$0xff]
    %v1723 = vld [vmem:[%s8 + $0x40] sm:$0xff]
    %v1724 = vld [vmem:[%s8 + $0x48] sm:$0xff]
    %v1725 = vld [vmem:[%s8 + $0x50] sm:$0xff]
    %v1726 = vld [vmem:[%s8 + $0x58] sm:$0xff]
    %v1727 = vld [vmem:[%s8 + $0x60] sm:$0xff]
    %v1728 = vld [vmem:[%s8 + $0x68] sm:$0xff]
    %v1729 = vld [vmem:[%s8 + $0x70] sm:$0xff]
    %v1730 = vld [vmem:[%s8 + $0x78] sm:$0xff]
    %v1731 = vld [vmem:[%s8 + $0x80] sm:$0xff]
    %v1732 = vld [vmem:[%s8 + $0x88] sm:$0xff]
    %v1733 = vld [vmem:[%s8 + $0x90] sm:$0xff]
    %v1734 = vld [vmem:[%s8 + $0x98] sm:$0xff]
    %v1735 = vld [vmem:[%s8 + $0xa0] sm:$0xff]
    %v1736 = vld [vmem:[%s8 + $0xa8] sm:$0xff]
    %v1737 = vld [vmem:[%s8 + $0xb0] sm:$0xff]
    %v1738 = vld [vmem:[%s8 + $0xb8] sm:$0xff]
    %v1739 = vld [vmem:[%s8 + $0xc0] sm:$0xff]
    %v1740 = vld [vmem:[%s8 + $0xc8] sm:$0xff]
    %v1741 = vld [vmem:[%s8 + $0xd0] sm:$0xff]
    %v1742 = vld [vmem:[%s8 + $0xd8] sm:$0xff]
    %v1743 = vld [vmem:[%s8 + $0xe0] sm:$0xff]
    %v1744 = vld [vmem:[%s8 + $0xe8] sm:$0xff]
    %v1745 = vld [vmem:[%s8 + $0xf0] sm:$0xff]
    %v1746 = vld [vmem:[%s8 + $0xf8] sm:$0xff]
    %v1747 = vld [vmem:[%s9] sm:$0x3]
    %v1749 = vlaneseq
    %v1750 = vshrl.u32 %v1749, 7
    %v1751 = vsub.s32 0, %v1750
    %v1752 = vrot.slane %v1747, %v1751
    %v1753 = vlaneseq
    %v1754 = vshrl.u32 %v1753, 7
    %v1755 = vsub.s32 1, %v1754
    %v1756 = vrot.slane %v1747, %v1755
    %v1791 = vunpack.c.l.b16 %v1715
    %v1792 = vunpack.c.h.b16 %v1715
    %v1793 = vunpack.c.l.b16 %v1716
    %v1794 = vunpack.c.h.b16 %v1716
    %v1795 = vunpack.c.l.b16 %v1717
    %v1796 = vunpack.c.h.b16 %v1717
    %v1797 = vunpack.c.l.b16 %v1718
    %v1798 = vunpack.c.h.b16 %v1718
    %v1799 = vunpack.c.l.b16 %v1719
    %v1800 = vunpack.c.h.b16 %v1719
    %v1801 = vunpack.c.l.b16 %v1720
    %v1802 = vunpack.c.h.b16 %v1720
    %v1803 = vunpack.c.l.b16 %v1721
    %v1804 = vunpack.c.h.b16 %v1721
    %v1805 = vunpack.c.l.b16 %v1722
    %v1806 = vunpack.c.h.b16 %v1722
    %v1807 = vunpack.c.l.b16 %v1723
    %v1808 = vunpack.c.h.b16 %v1723
    %v1809 = vunpack.c.l.b16 %v1724
    %v1810 = vunpack.c.h.b16 %v1724
    %v1811 = vunpack.c.l.b16 %v1725
    %v1812 = vunpack.c.h.b16 %v1725
    %v1813 = vunpack.c.l.b16 %v1726
    %v1814 = vunpack.c.h.b16 %v1726
    %v1815 = vunpack.c.l.b16 %v1727
    %v1816 = vunpack.c.h.b16 %v1727
    %v1817 = vunpack.c.l.b16 %v1728
    %v1818 = vunpack.c.h.b16 %v1728
    %v1819 = vunpack.c.l.b16 %v1729
    %v1820 = vunpack.c.h.b16 %v1729
    %v1821 = vunpack.c.l.b16 %v1730
    %v1822 = vunpack.c.h.b16 %v1730
    %v1823 = vunpack.c.l.b16 %v1731
    %v1824 = vunpack.c.h.b16 %v1731
    %v1825 = vunpack.c.l.b16 %v1732
    %v1826 = vunpack.c.h.b16 %v1732
    %v1827 = vunpack.c.l.b16 %v1733
    %v1828 = vunpack.c.h.b16 %v1733
    %v1829 = vunpack.c.l.b16 %v1734
    %v1830 = vunpack.c.h.b16 %v1734
    %v1831 = vunpack.c.l.b16 %v1735
    %v1832 = vunpack.c.h.b16 %v1735
    %v1833 = vunpack.c.l.b16 %v1736
    %v1834 = vunpack.c.h.b16 %v1736
    %v1835 = vunpack.c.l.b16 %v1737
    %v1836 = vunpack.c.h.b16 %v1737
    %v1837 = vunpack.c.l.b16 %v1738
    %v1838 = vunpack.c.h.b16 %v1738
    %v1839 = vunpack.c.l.b16 %v1739
    %v1840 = vunpack.c.h.b16 %v1739
    %v1841 = vunpack.c.l.b16 %v1740
    %v1842 = vunpack.c.h.b16 %v1740
    %v1843 = vunpack.c.l.b16 %v1741
    %v1844 = vunpack.c.h.b16 %v1741
    %v1845 = vunpack.c.l.b16 %v1742
    %v1846 = vunpack.c.h.b16 %v1742
    %v1847 = vunpack.c.l.b16 %v1743
    %v1848 = vunpack.c.h.b16 %v1743
    %v1849 = vunpack.c.l.b16 %v1744
    %v1850 = vunpack.c.h.b16 %v1744
    %v1851 = vunpack.c.l.b16 %v1745
    %v1852 = vunpack.c.h.b16 %v1745
    %v1853 = vunpack.c.l.b16 %v1746
    %v1854 = vunpack.c.h.b16 %v1746
    %v1855 = vpack.c.b16 %v1793, %v1791
    %v1856 = vpack.c.b16 %v1794, %v1792
    %v1857 = vpack.c.b16 %v1797, %v1795
    %v1858 = vpack.c.b16 %v1798, %v1796
    %v1859 = vpack.c.b16 %v1801, %v1799
    %v1860 = vpack.c.b16 %v1802, %v1800
    %v1861 = vpack.c.b16 %v1805, %v1803
    %v1862 = vpack.c.b16 %v1806, %v1804
    %v1863 = vpack.c.b16 %v1809, %v1807
    %v1864 = vpack.c.b16 %v1810, %v1808
    %v1865 = vpack.c.b16 %v1813, %v1811
    %v1866 = vpack.c.b16 %v1814, %v1812
    %v1867 = vpack.c.b16 %v1817, %v1815
    %v1868 = vpack.c.b16 %v1818, %v1816
    %v1869 = vpack.c.b16 %v1821, %v1819
    %v1870 = vpack.c.b16 %v1822, %v1820
    %v1871 = vpack.c.b16 %v1825, %v1823
    %v1872 = vpack.c.b16 %v1826, %v1824
    %v1873 = vpack.c.b16 %v1829, %v1827
    %v1874 = vpack.c.b16 %v1830, %v1828
    %v1875 = vpack.c.b16 %v1833, %v1831
    %v1876 = vpack.c.b16 %v1834, %v1832
    %v1877 = vpack.c.b16 %v1837, %v1835
    %v1878 = vpack.c.b16 %v1838, %v1836
    %v1879 = vpack.c.b16 %v1841, %v1839
    %v1880 = vpack.c.b16 %v1842, %v1840
    %v1881 = vpack.c.b16 %v1845, %v1843
    %v1882 = vpack.c.b16 %v1846, %v1844
    %v1883 = vpack.c.b16 %v1849, %v1847
    %v1884 = vpack.c.b16 %v1850, %v1848
    %v1885 = vpack.c.b16 %v1853, %v1851
    %v1886 = vpack.c.b16 %v1854, %v1852
    %1919 = vmatprep.subr.bf16.mxu0 %v1870
    %1920 = vmatpush1.bf16.msra.mxu0 %v1869
    %1921 = vmatprep.subr.bf16.mxu0 %v1868
    %1922 = vmatpush1.bf16.msra.mxu0 %v1867
    %1923 = vmatprep.subr.bf16.mxu0 %v1866
    %1924 = vmatpush1.bf16.msra.mxu0 %v1865
    %1925 = vmatprep.subr.bf16.mxu0 %v1864
    %1926 = vmatpush1.bf16.msra.mxu0 %v1863
    %1927 = vmatprep.subr.bf16.mxu0 %v1862
    %1928 = vmatpush1.bf16.msra.mxu0 %v1861
    %1929 = vmatprep.subr.bf16.mxu0 %v1860
    %1930 = vmatpush1.bf16.msra.mxu0 %v1859
    %1931 = vmatprep.subr.bf16.mxu0 %v1858
    %1932 = vmatpush1.bf16.msra.mxu0 %v1857
    %1933 = vmatprep.subr.bf16.mxu0 %v1856
    %1934 = vmatpush1.bf16.msra.mxu0 %v1855
    %1935 = vmatprep.subr.bf16.mxu0 %v1886
    %1936 = vmatpush2.bf16.msra.mxu0 %v1885
    %1937 = vmatprep.subr.bf16.mxu0 %v1884
    %1938 = vmatpush2.bf16.msra.mxu0 %v1883
    %1939 = vmatprep.subr.bf16.mxu0 %v1882
    %1940 = vmatpush2.bf16.msra.mxu0 %v1881
    %1941 = vmatprep.subr.bf16.mxu0 %v1880
    %1942 = vmatpush2.bf16.msra.mxu0 %v1879
    %1943 = vmatprep.subr.bf16.mxu0 %v1878
    %1944 = vmatpush2.bf16.msra.mxu0 %v1877
    %1945 = vmatprep.subr.bf16.mxu0 %v1876
    %1946 = vmatpush2.bf16.msra.mxu0 %v1875
    %1947 = vmatprep.subr.bf16.mxu0 %v1874
    %1948 = vmatpush2.bf16.msra.mxu0 %v1873
    %1949 = vmatprep.subr.bf16.mxu0 %v1872
    %1950 = vmatpush2.bf16.msra.mxu0 %v1871
    %1951 = vmatprep.mubr.bf16.mxu0 %v1700
    %1952 = vmatmul.mubr.bf16.gmra.mxu0 %v1699
    %v1953 = vpop.f32.mrf.mxu0
    %v1954 = vadd.f32 %v1752, %v1953
    %v1955 = vpop.f32.mrf.mxu0
    %v1956 = vadd.f32 %v1756, %v1955
    %v1957 = vpop.f32.mrf.mxu0
    %v1958 = vadd.f32 %v1752, %v1957
    %v1959 = vpop.f32.mrf.mxu0
    %v1960 = vadd.f32 %v1756, %v1959
    %1961 = vmatprep.mubr.bf16.mxu0 %v1702
    %1962 = vmatmul.mubr.bf16.gmra.mxu0 %v1701
    %v1963 = vpop.f32.mrf.mxu0
    %v1964 = vadd.f32 %v1752, %v1963
    %v1965 = vpop.f32.mrf.mxu0
    %v1966 = vadd.f32 %v1756, %v1965
    %v1967 = vpop.f32.mrf.mxu0
    %v1968 = vadd.f32 %v1752, %v1967
    %v1969 = vpop.f32.mrf.mxu0
    %v1970 = vadd.f32 %v1756, %v1969
    %1971 = vmatprep.mubr.bf16.mxu0 %v1704
    %1972 = vmatmul.mubr.bf16.gmra.mxu0 %v1703
    %v1973 = vpop.f32.mrf.mxu0
    %v1974 = vadd.f32 %v1752, %v1973
    %v1975 = vpop.f32.mrf.mxu0
    %v1976 = vadd.f32 %v1756, %v1975
    %v1977 = vpop.f32.mrf.mxu0
    %v1978 = vadd.f32 %v1752, %v1977
    %v1979 = vpop.f32.mrf.mxu0
    %v1980 = vadd.f32 %v1756, %v1979
    %1981 = vmatprep.mubr.bf16.mxu0 %v1706
    %1982 = vmatmul.mubr.bf16.gmra.mxu0 %v1705
    %v1983 = vpop.f32.mrf.mxu0
    %v1984 = vadd.f32 %v1752, %v1983
    %v1985 = vpop.f32.mrf.mxu0
    %v1986 = vadd.f32 %v1756, %v1985
    %v1987 = vpop.f32.mrf.mxu0
    %v1988 = vadd.f32 %v1752, %v1987
    %v1989 = vpop.f32.mrf.mxu0
    %v1990 = vadd.f32 %v1756, %v1989
    %1991 = vmatprep.mubr.bf16.mxu0 %v1708
    %1992 = vmatmul.mubr.bf16.gmra.mxu0 %v1707
    %v1993 = vpop.f32.mrf.mxu0
    %v1994 = vadd.f32 %v1752, %v1993
    %v1995 = vpop.f32.mrf.mxu0
    %v1996 = vadd.f32 %v1756, %v1995
    %v1997 = vpop.f32.mrf.mxu0
    %v1998 = vadd.f32 %v1752, %v1997
    %v1999 = vpop.f32.mrf.mxu0
    %v2000 = vadd.f32 %v1756, %v1999
    %2001 = vmatprep.mubr.bf16.mxu0 %v1710
    %2002 = vmatmul.mubr.bf16.gmra.mxu0 %v1709
    %v2003 = vpop.f32.mrf.mxu0
    %v2004 = vadd.f32 %v1752, %v2003
    %v2005 = vpop.f32.mrf.mxu0
    %v2006 = vadd.f32 %v1756, %v2005
    %v2007 = vpop.f32.mrf.mxu0
    %v2008 = vadd.f32 %v1752, %v2007
    %v2009 = vpop.f32.mrf.mxu0
    %v2010 = vadd.f32 %v1756, %v2009
    %2011 = vmatprep.mubr.bf16.mxu0 %v1712
    %2012 = vmatmul.mubr.bf16.gmra.mxu0 %v1711
    %v2013 = vpop.f32.mrf.mxu0
    %v2014 = vadd.f32 %v1752, %v2013
    %v2015 = vpop.f32.mrf.mxu0
    %v2016 = vadd.f32 %v1756, %v2015
    %v2017 = vpop.f32.mrf.mxu0
    %v2018 = vadd.f32 %v1752, %v2017
    %v2019 = vpop.f32.mrf.mxu0
    %v2020 = vadd.f32 %v1756, %v2019
    %2021 = vmatprep.mubr.bf16.mxu0 %v1714
    %2022 = vmatmul.mubr.bf16.gmra.mxu0 %v1713
    %v2023 = vpop.f32.mrf.mxu0
    %v2024 = vadd.f32 %v1752, %v2023
    %v2025 = vpop.f32.mrf.mxu0
    %v2026 = vadd.f32 %v1756, %v2025
    %v2027 = vpop.f32.mrf.mxu0
    %v2028 = vadd.f32 %v1752, %v2027
    %v2029 = vpop.f32.mrf.mxu0
    %v2030 = vadd.f32 %v1756, %v2029
    %2031 = vdwg.mxu0
    %v2032 = vmax.f32 %v1954, 0.0
    %v2033 = vmax.f32 %v1956, 0.0
    %v2034 = vmax.f32 %v1958, 0.0
    %v2035 = vmax.f32 %v1960, 0.0
    %v2036 = vmax.f32 %v1964, 0.0
    %v2037 = vmax.f32 %v1966, 0.0
    %v2038 = vmax.f32 %v1968, 0.0
    %v2039 = vmax.f32 %v1970, 0.0
    %v2040 = vmax.f32 %v1974, 0.0
    %v2041 = vmax.f32 %v1976, 0.0
    %v2042 = vmax.f32 %v1978, 0.0
    %v2043 = vmax.f32 %v1980, 0.0
    %v2044 = vmax.f32 %v1984, 0.0
    %v2045 = vmax.f32 %v1986, 0.0
    %v2046 = vmax.f32 %v1988, 0.0
    %v2047 = vmax.f32 %v1990, 0.0
    %v2048 = vmax.f32 %v1994, 0.0
    %v2049 = vmax.f32 %v1996, 0.0
    %v2050 = vmax.f32 %v1998, 0.0
    %v2051 = vmax.f32 %v2000, 0.0
    %v2052 = vmax.f32 %v2004, 0.0
    %v2053 = vmax.f32 %v2006, 0.0
    %v2054 = vmax.f32 %v2008, 0.0
    %v2055 = vmax.f32 %v2010, 0.0
    %v2056 = vmax.f32 %v2014, 0.0
    %v2057 = vmax.f32 %v2016, 0.0
    %v2058 = vmax.f32 %v2018, 0.0
    %v2059 = vmax.f32 %v2020, 0.0
    %v2060 = vmax.f32 %v2024, 0.0
    %v2061 = vmax.f32 %v2026, 0.0
    %v2062 = vmax.f32 %v2028, 0.0
    %v2063 = vmax.f32 %v2030, 0.0
    %v2064 = vpack.c.bf16 %v2034, %v2032
    %v2065 = vpack.c.bf16 %v2035, %v2033
    %v2066 = vpack.c.bf16 %v2038, %v2036
    %v2067 = vpack.c.bf16 %v2039, %v2037
    %v2068 = vpack.c.bf16 %v2042, %v2040
    %v2069 = vpack.c.bf16 %v2043, %v2041
    %v2070 = vpack.c.bf16 %v2046, %v2044
    %v2071 = vpack.c.bf16 %v2047, %v2045
    %v2072 = vpack.c.bf16 %v2050, %v2048
    %v2073 = vpack.c.bf16 %v2051, %v2049
    %v2074 = vpack.c.bf16 %v2054, %v2052
    %v2075 = vpack.c.bf16 %v2055, %v2053
    %v2076 = vpack.c.bf16 %v2058, %v2056
    %v2077 = vpack.c.bf16 %v2059, %v2057
    %v2078 = vpack.c.bf16 %v2062, %v2060
    %v2079 = vpack.c.bf16 %v2063, %v2061
    %v2080 = vld [vmem:[%s10] sm:$0xff]
    %v2081 = vld [vmem:[%s10 + $0x8] sm:$0xff]
    %v2082 = vld [vmem:[%s10 + $0x10] sm:$0xff]
    %v2083 = vld [vmem:[%s10 + $0x18] sm:$0xff]
    %v2084 = vld [vmem:[%s10 + $0x20] sm:$0xff]
    %v2085 = vld [vmem:[%s10 + $0x28] sm:$0xff]
    %v2086 = vld [vmem:[%s10 + $0x30] sm:$0xff]
    %v2087 = vld [vmem:[%s10 + $0x38] sm:$0xff]
    %v2088 = vld [vmem:[%s10 + $0x40] sm:$0xff]
    %v2089 = vld [vmem:[%s10 + $0x48] sm:$0xff]
    %v2090 = vld [vmem:[%s10 + $0x50] sm:$0xff]
    %v2091 = vld [vmem:[%s10 + $0x58] sm:$0xff]
    %v2092 = vld [vmem:[%s10 + $0x60] sm:$0xff]
    %v2093 = vld [vmem:[%s10 + $0x68] sm:$0xff]
    %v2094 = vld [vmem:[%s10 + $0x70] sm:$0xff]
    %v2095 = vld [vmem:[%s10 + $0x78] sm:$0xff]
    %v2096 = vld [vmem:[%s10 + $0x80] sm:$0xff]
    %v2097 = vld [vmem:[%s10 + $0x88] sm:$0xff]
    %v2098 = vld [vmem:[%s10 + $0x90] sm:$0xff]
    %v2099 = vld [vmem:[%s10 + $0x98] sm:$0xff]
    %v2100 = vld [vmem:[%s10 + $0xa0] sm:$0xff]
    %v2101 = vld [vmem:[%s10 + $0xa8] sm:$0xff]
    %v2102 = vld [vmem:[%s10 + $0xb0] sm:$0xff]
    %v2103 = vld [vmem:[%s10 + $0xb8] sm:$0xff]
    %v2104 = vld [vmem:[%s10 + $0xc0] sm:$0xff]
    %v2105 = vld [vmem:[%s10 + $0xc8] sm:$0xff]
    %v2106 = vld [vmem:[%s10 + $0xd0] sm:$0xff]
    %v2107 = vld [vmem:[%s10 + $0xd8] sm:$0xff]
    %v2108 = vld [vmem:[%s10 + $0xe0] sm:$0xff]
    %v2109 = vld [vmem:[%s10 + $0xe8] sm:$0xff]
    %v2110 = vld [vmem:[%s10 + $0xf0] sm:$0xff]
    %v2111 = vld [vmem:[%s10 + $0xf8] sm:$0xff]
    %v2112 = vld [vmem:[%s11] sm:$0x3]
    %v2114 = vlaneseq
    %v2115 = vshrl.u32 %v2114, 7
    %v2116 = vsub.s32 0, %v2115
    %v2117 = vrot.slane %v2112, %v2116
    %v2118 = vlaneseq
    %v2119 = vshrl.u32 %v2118, 7
    %v2120 = vsub.s32 1, %v2119
    %v2121 = vrot.slane %v2112, %v2120
    %v2156 = vunpack.c.l.b16 %v2080
    %v2157 = vunpack.c.h.b16 %v2080
    %v2158 = vunpack.c.l.b16 %v2081
    %v2159 = vunpack.c.h.b16 %v2081
    %v2160 = vunpack.c.l.b16 %v2082
    %v2161 = vunpack.c.h.b16 %v2082
    %v2162 = vunpack.c.l.b16 %v2083
    %v2163 = vunpack.c.h.b16 %v2083
    %v2164 = vunpack.c.l.b16 %v2084
    %v2165 = vunpack.c.h.b16 %v2084
    %v2166 = vunpack.c.l.b16 %v2085
    %v2167 = vunpack.c.h.b16 %v2085
    %v2168 = vunpack.c.l.b16 %v2086
    %v2169 = vunpack.c.h.b16 %v2086
    %v2170 = vunpack.c.l.b16 %v2087
    %v2171 = vunpack.c.h.b16 %v2087
    %v2172 = vunpack.c.l.b16 %v2088
    %v2173 = vunpack.c.h.b16 %v2088
    %v2174 = vunpack.c.l.b16 %v2089
    %v2175 = vunpack.c.h.b16 %v2089
    %v2176 = vunpack.c.l.b16 %v2090
    %v2177 = vunpack.c.h.b16 %v2090
    %v2178 = vunpack.c.l.b16 %v2091
    %v2179 = vunpack.c.h.b16 %v2091
    %v2180 = vunpack.c.l.b16 %v2092
    %v2181 = vunpack.c.h.b16 %v2092
    %v2182 = vunpack.c.l.b16 %v2093
    %v2183 = vunpack.c.h.b16 %v2093
    %v2184 = vunpack.c.l.b16 %v2094
    %v2185 = vunpack.c.h.b16 %v2094
    %v2186 = vunpack.c.l.b16 %v2095
    %v2187 = vunpack.c.h.b16 %v2095
    %v2188 = vunpack.c.l.b16 %v2096
    %v2189 = vunpack.c.h.b16 %v2096
    %v2190 = vunpack.c.l.b16 %v2097
    %v2191 = vunpack.c.h.b16 %v2097
    %v2192 = vunpack.c.l.b16 %v2098
    %v2193 = vunpack.c.h.b16 %v2098
    %v2194 = vunpack.c.l.b16 %v2099
    %v2195 = vunpack.c.h.b16 %v2099
    %v2196 = vunpack.c.l.b16 %v2100
    %v2197 = vunpack.c.h.b16 %v2100
    %v2198 = vunpack.c.l.b16 %v2101
    %v2199 = vunpack.c.h.b16 %v2101
    %v2200 = vunpack.c.l.b16 %v2102
    %v2201 = vunpack.c.h.b16 %v2102
    %v2202 = vunpack.c.l.b16 %v2103
    %v2203 = vunpack.c.h.b16 %v2103
    %v2204 = vunpack.c.l.b16 %v2104
    %v2205 = vunpack.c.h.b16 %v2104
    %v2206 = vunpack.c.l.b16 %v2105
    %v2207 = vunpack.c.h.b16 %v2105
    %v2208 = vunpack.c.l.b16 %v2106
    %v2209 = vunpack.c.h.b16 %v2106
    %v2210 = vunpack.c.l.b16 %v2107
    %v2211 = vunpack.c.h.b16 %v2107
    %v2212 = vunpack.c.l.b16 %v2108
    %v2213 = vunpack.c.h.b16 %v2108
    %v2214 = vunpack.c.l.b16 %v2109
    %v2215 = vunpack.c.h.b16 %v2109
    %v2216 = vunpack.c.l.b16 %v2110
    %v2217 = vunpack.c.h.b16 %v2110
    %v2218 = vunpack.c.l.b16 %v2111
    %v2219 = vunpack.c.h.b16 %v2111
    %v2220 = vpack.c.b16 %v2158, %v2156
    %v2221 = vpack.c.b16 %v2159, %v2157
    %v2222 = vpack.c.b16 %v2162, %v2160
    %v2223 = vpack.c.b16 %v2163, %v2161
    %v2224 = vpack.c.b16 %v2166, %v2164
    %v2225 = vpack.c.b16 %v2167, %v2165
    %v2226 = vpack.c.b16 %v2170, %v2168
    %v2227 = vpack.c.b16 %v2171, %v2169
    %v2228 = vpack.c.b16 %v2174, %v2172
    %v2229 = vpack.c.b16 %v2175, %v2173
    %v2230 = vpack.c.b16 %v2178, %v2176
    %v2231 = vpack.c.b16 %v2179, %v2177
    %v2232 = vpack.c.b16 %v2182, %v2180
    %v2233 = vpack.c.b16 %v2183, %v2181
    %v2234 = vpack.c.b16 %v2186, %v2184
    %v2235 = vpack.c.b16 %v2187, %v2185
    %v2236 = vpack.c.b16 %v2190, %v2188
    %v2237 = vpack.c.b16 %v2191, %v2189
    %v2238 = vpack.c.b16 %v2194, %v2192
    %v2239 = vpack.c.b16 %v2195, %v2193
    %v2240 = vpack.c.b16 %v2198, %v2196
    %v2241 = vpack.c.b16 %v2199, %v2197
    %v2242 = vpack.c.b16 %v2202, %v2200
    %v2243 = vpack.c.b16 %v2203, %v2201
    %v2244 = vpack.c.b16 %v2206, %v2204
    %v2245 = vpack.c.b16 %v2207, %v2205
    %v2246 = vpack.c.b16 %v2210, %v2208
    %v2247 = vpack.c.b16 %v2211, %v2209
    %v2248 = vpack.c.b16 %v2214, %v2212
    %v2249 = vpack.c.b16 %v2215, %v2213
    %v2250 = vpack.c.b16 %v2218, %v2216
    %v2251 = vpack.c.b16 %v2219, %v2217
    %2284 = vmatprep.subr.bf16.mxu0 %v2235
    %2285 = vmatpush1.bf16.msra.mxu0 %v2234
    %2286 = vmatprep.subr.bf16.mxu0 %v2233
    %2287 = vmatpush1.bf16.msra.mxu0 %v2232
    %2288 = vmatprep.subr.bf16.mxu0 %v2231
    %2289 = vmatpush1.bf16.msra.mxu0 %v2230
    %2290 = vmatprep.subr.bf16.mxu0 %v2229
    %2291 = vmatpush1.bf16.msra.mxu0 %v2228
    %2292 = vmatprep.subr.bf16.mxu0 %v2227
    %2293 = vmatpush1.bf16.msra.mxu0 %v2226
    %2294 = vmatprep.subr.bf16.mxu0 %v2225
    %2295 = vmatpush1.bf16.msra.mxu0 %v2224
    %2296 = vmatprep.subr.bf16.mxu0 %v2223
    %2297 = vmatpush1.bf16.msra.mxu0 %v2222
    %2298 = vmatprep.subr.bf16.mxu0 %v2221
    %2299 = vmatpush1.bf16.msra.mxu0 %v2220
    %2300 = vmatprep.subr.bf16.mxu0 %v2251
    %2301 = vmatpush2.bf16.msra.mxu0 %v2250
    %2302 = vmatprep.subr.bf16.mxu0 %v2249
    %2303 = vmatpush2.bf16.msra.mxu0 %v2248
    %2304 = vmatprep.subr.bf16.mxu0 %v2247
    %2305 = vmatpush2.bf16.msra.mxu0 %v2246
    %2306 = vmatprep.subr.bf16.mxu0 %v2245
    %2307 = vmatpush2.bf16.msra.mxu0 %v2244
    %2308 = vmatprep.subr.bf16.mxu0 %v2243
    %2309 = vmatpush2.bf16.msra.mxu0 %v2242
    %2310 = vmatprep.subr.bf16.mxu0 %v2241
    %2311 = vmatpush2.bf16.msra.mxu0 %v2240
    %2312 = vmatprep.subr.bf16.mxu0 %v2239
    %2313 = vmatpush2.bf16.msra.mxu0 %v2238
    %2314 = vmatprep.subr.bf16.mxu0 %v2237
    %2315 = vmatpush2.bf16.msra.mxu0 %v2236
    %2316 = vmatprep.mubr.bf16.mxu0 %v2065
    %2317 = vmatmul.mubr.bf16.gmra.mxu0 %v2064
    %v2318 = vpop.f32.mrf.mxu0
    %v2319 = vadd.f32 %v2117, %v2318
    %v2320 = vpop.f32.mrf.mxu0
    %v2321 = vadd.f32 %v2121, %v2320
    %v2322 = vpop.f32.mrf.mxu0
    %v2323 = vadd.f32 %v2117, %v2322
    %v2324 = vpop.f32.mrf.mxu0
    %v2325 = vadd.f32 %v2121, %v2324
    %2326 = vmatprep.mubr.bf16.mxu0 %v2067
    %2327 = vmatmul.mubr.bf16.gmra.mxu0 %v2066
    %v2328 = vpop.f32.mrf.mxu0
    %v2329 = vadd.f32 %v2117, %v2328
    %v2330 = vpop.f32.mrf.mxu0
    %v2331 = vadd.f32 %v2121, %v2330
    %v2332 = vpop.f32.mrf.mxu0
    %v2333 = vadd.f32 %v2117, %v2332
    %v2334 = vpop.f32.mrf.mxu0
    %v2335 = vadd.f32 %v2121, %v2334
    %2336 = vmatprep.mubr.bf16.mxu0 %v2069
    %2337 = vmatmul.mubr.bf16.gmra.mxu0 %v2068
    %v2338 = vpop.f32.mrf.mxu0
    %v2339 = vadd.f32 %v2117, %v2338
    %v2340 = vpop.f32.mrf.mxu0
    %v2341 = vadd.f32 %v2121, %v2340
    %v2342 = vpop.f32.mrf.mxu0
    %v2343 = vadd.f32 %v2117, %v2342
    %v2344 = vpop.f32.mrf.mxu0
    %v2345 = vadd.f32 %v2121, %v2344
    %2346 = vmatprep.mubr.bf16.mxu0 %v2071
    %2347 = vmatmul.mubr.bf16.gmra.mxu0 %v2070
    %v2348 = vpop.f32.mrf.mxu0
    %v2349 = vadd.f32 %v2117, %v2348
    %v2350 = vpop.f32.mrf.mxu0
    %v2351 = vadd.f32 %v2121, %v2350
    %v2352 = vpop.f32.mrf.mxu0
    %v2353 = vadd.f32 %v2117, %v2352
    %v2354 = vpop.f32.mrf.mxu0
    %v2355 = vadd.f32 %v2121, %v2354
    %2356 = vmatprep.mubr.bf16.mxu0 %v2073
    %2357 = vmatmul.mubr.bf16.gmra.mxu0 %v2072
    %v2358 = vpop.f32.mrf.mxu0
    %v2359 = vadd.f32 %v2117, %v2358
    %v2360 = vpop.f32.mrf.mxu0
    %v2361 = vadd.f32 %v2121, %v2360
    %v2362 = vpop.f32.mrf.mxu0
    %v2363 = vadd.f32 %v2117, %v2362
    %v2364 = vpop.f32.mrf.mxu0
    %v2365 = vadd.f32 %v2121, %v2364
    %2366 = vmatprep.mubr.bf16.mxu0 %v2075
    %2367 = vmatmul.mubr.bf16.gmra.mxu0 %v2074
    %v2368 = vpop.f32.mrf.mxu0
    %v2369 = vadd.f32 %v2117, %v2368
    %v2370 = vpop.f32.mrf.mxu0
    %v2371 = vadd.f32 %v2121, %v2370
    %v2372 = vpop.f32.mrf.mxu0
    %v2373 = vadd.f32 %v2117, %v2372
    %v2374 = vpop.f32.mrf.mxu0
    %v2375 = vadd.f32 %v2121, %v2374
    %2376 = vmatprep.mubr.bf16.mxu0 %v2077
    %2377 = vmatmul.mubr.bf16.gmra.mxu0 %v2076
    %v2378 = vpop.f32.mrf.mxu0
    %v2379 = vadd.f32 %v2117, %v2378
    %v2380 = vpop.f32.mrf.mxu0
    %v2381 = vadd.f32 %v2121, %v2380
    %v2382 = vpop.f32.mrf.mxu0
    %v2383 = vadd.f32 %v2117, %v2382
    %v2384 = vpop.f32.mrf.mxu0
    %v2385 = vadd.f32 %v2121, %v2384
    %2386 = vmatprep.mubr.bf16.mxu0 %v2079
    %2387 = vmatmul.mubr.bf16.gmra.mxu0 %v2078
    %v2388 = vpop.f32.mrf.mxu0
    %v2389 = vadd.f32 %v2117, %v2388
    %v2390 = vpop.f32.mrf.mxu0
    %v2391 = vadd.f32 %v2121, %v2390
    %v2392 = vpop.f32.mrf.mxu0
    %v2393 = vadd.f32 %v2117, %v2392
    %v2394 = vpop.f32.mrf.mxu0
    %v2395 = vadd.f32 %v2121, %v2394
    %2396 = vdwg.mxu0
    %v2397 = vmax.f32 %v2319, 0.0
    %v2398 = vmax.f32 %v2321, 0.0
    %v2399 = vmax.f32 %v2323, 0.0
    %v2400 = vmax.f32 %v2325, 0.0
    %v2401 = vmax.f32 %v2329, 0.0
    %v2402 = vmax.f32 %v2331, 0.0
    %v2403 = vmax.f32 %v2333, 0.0
    %v2404 = vmax.f32 %v2335, 0.0
    %v2405 = vmax.f32 %v2339, 0.0
    %v2406 = vmax.f32 %v2341, 0.0
    %v2407 = vmax.f32 %v2343, 0.0
    %v2408 = vmax.f32 %v2345, 0.0
    %v2409 = vmax.f32 %v2349, 0.0
    %v2410 = vmax.f32 %v2351, 0.0
    %v2411 = vmax.f32 %v2353, 0.0
    %v2412 = vmax.f32 %v2355, 0.0
    %v2413 = vmax.f32 %v2359, 0.0
    %v2414 = vmax.f32 %v2361, 0.0
    %v2415 = vmax.f32 %v2363, 0.0
    %v2416 = vmax.f32 %v2365, 0.0
    %v2417 = vmax.f32 %v2369, 0.0
    %v2418 = vmax.f32 %v2371, 0.0
    %v2419 = vmax.f32 %v2373, 0.0
    %v2420 = vmax.f32 %v2375, 0.0
    %v2421 = vmax.f32 %v2379, 0.0
    %v2422 = vmax.f32 %v2381, 0.0
    %v2423 = vmax.f32 %v2383, 0.0
    %v2424 = vmax.f32 %v2385, 0.0
    %v2425 = vmax.f32 %v2389, 0.0
    %v2426 = vmax.f32 %v2391, 0.0
    %v2427 = vmax.f32 %v2393, 0.0
    %v2428 = vmax.f32 %v2395, 0.0
    %v2429 = vpack.c.bf16 %v2399, %v2397
    %v2430 = vpack.c.bf16 %v2400, %v2398
    %v2431 = vpack.c.bf16 %v2403, %v2401
    %v2432 = vpack.c.bf16 %v2404, %v2402
    %v2433 = vpack.c.bf16 %v2407, %v2405
    %v2434 = vpack.c.bf16 %v2408, %v2406
    %v2435 = vpack.c.bf16 %v2411, %v2409
    %v2436 = vpack.c.bf16 %v2412, %v2410
    %v2437 = vpack.c.bf16 %v2415, %v2413
    %v2438 = vpack.c.bf16 %v2416, %v2414
    %v2439 = vpack.c.bf16 %v2419, %v2417
    %v2440 = vpack.c.bf16 %v2420, %v2418
    %v2441 = vpack.c.bf16 %v2423, %v2421
    %v2442 = vpack.c.bf16 %v2424, %v2422
    %v2443 = vpack.c.bf16 %v2427, %v2425
    %v2444 = vpack.c.bf16 %v2428, %v2426
    %v2445 = vld [vmem:[%s12] sm:$0xff]
    %v2446 = vld [vmem:[%s12 + $0x8] sm:$0xff]
    %v2447 = vld [vmem:[%s12 + $0x10] sm:$0xff]
    %v2448 = vld [vmem:[%s12 + $0x18] sm:$0xff]
    %v2449 = vld [vmem:[%s12 + $0x20] sm:$0xff]
    %v2450 = vld [vmem:[%s12 + $0x28] sm:$0xff]
    %v2451 = vld [vmem:[%s12 + $0x30] sm:$0xff]
    %v2452 = vld [vmem:[%s12 + $0x38] sm:$0xff]
    %v2453 = vld [vmem:[%s12 + $0x40] sm:$0xff]
    %v2454 = vld [vmem:[%s12 + $0x48] sm:$0xff]
    %v2455 = vld [vmem:[%s12 + $0x50] sm:$0xff]
    %v2456 = vld [vmem:[%s12 + $0x58] sm:$0xff]
    %v2457 = vld [vmem:[%s12 + $0x60] sm:$0xff]
    %v2458 = vld [vmem:[%s12 + $0x68] sm:$0xff]
    %v2459 = vld [vmem:[%s12 + $0x70] sm:$0xff]
    %v2460 = vld [vmem:[%s12 + $0x78] sm:$0xff]
    %v2461 = vld [vmem:[%s12 + $0x80] sm:$0xff]
    %v2462 = vld [vmem:[%s12 + $0x88] sm:$0xff]
    %v2463 = vld [vmem:[%s12 + $0x90] sm:$0xff]
    %v2464 = vld [vmem:[%s12 + $0x98] sm:$0xff]
    %v2465 = vld [vmem:[%s12 + $0xa0] sm:$0xff]
    %v2466 = vld [vmem:[%s12 + $0xa8] sm:$0xff]
    %v2467 = vld [vmem:[%s12 + $0xb0] sm:$0xff]
    %v2468 = vld [vmem:[%s12 + $0xb8] sm:$0xff]
    %v2469 = vld [vmem:[%s12 + $0xc0] sm:$0xff]
    %v2470 = vld [vmem:[%s12 + $0xc8] sm:$0xff]
    %v2471 = vld [vmem:[%s12 + $0xd0] sm:$0xff]
    %v2472 = vld [vmem:[%s12 + $0xd8] sm:$0xff]
    %v2473 = vld [vmem:[%s12 + $0xe0] sm:$0xff]
    %v2474 = vld [vmem:[%s12 + $0xe8] sm:$0xff]
    %v2475 = vld [vmem:[%s12 + $0xf0] sm:$0xff]
    %v2476 = vld [vmem:[%s12 + $0xf8] sm:$0xff]
    %v2477 = vld [vmem:[%s13] sm:$0x3]
    %v2479 = vlaneseq
    %v2480 = vshrl.u32 %v2479, 7
    %v2481 = vsub.s32 0, %v2480
    %v2482 = vrot.slane %v2477, %v2481
    %v2483 = vlaneseq
    %v2484 = vshrl.u32 %v2483, 7
    %v2485 = vsub.s32 1, %v2484
    %v2486 = vrot.slane %v2477, %v2485
    %v2521 = vunpack.c.l.b16 %v2445
    %v2522 = vunpack.c.h.b16 %v2445
    %v2523 = vunpack.c.l.b16 %v2446
    %v2524 = vunpack.c.h.b16 %v2446
    %v2525 = vunpack.c.l.b16 %v2447
    %v2526 = vunpack.c.h.b16 %v2447
    %v2527 = vunpack.c.l.b16 %v2448
    %v2528 = vunpack.c.h.b16 %v2448
    %v2529 = vunpack.c.l.b16 %v2449
    %v2530 = vunpack.c.h.b16 %v2449
    %v2531 = vunpack.c.l.b16 %v2450
    %v2532 = vunpack.c.h.b16 %v2450
    %v2533 = vunpack.c.l.b16 %v2451
    %v2534 = vunpack.c.h.b16 %v2451
    %v2535 = vunpack.c.l.b16 %v2452
    %v2536 = vunpack.c.h.b16 %v2452
    %v2537 = vunpack.c.l.b16 %v2453
    %v2538 = vunpack.c.h.b16 %v2453
    %v2539 = vunpack.c.l.b16 %v2454
    %v2540 = vunpack.c.h.b16 %v2454
    %v2541 = vunpack.c.l.b16 %v2455
    %v2542 = vunpack.c.h.b16 %v2455
    %v2543 = vunpack.c.l.b16 %v2456
    %v2544 = vunpack.c.h.b16 %v2456
    %v2545 = vunpack.c.l.b16 %v2457
    %v2546 = vunpack.c.h.b16 %v2457
    %v2547 = vunpack.c.l.b16 %v2458
    %v2548 = vunpack.c.h.b16 %v2458
    %v2549 = vunpack.c.l.b16 %v2459
    %v2550 = vunpack.c.h.b16 %v2459
    %v2551 = vunpack.c.l.b16 %v2460
    %v2552 = vunpack.c.h.b16 %v2460
    %v2553 = vunpack.c.l.b16 %v2461
    %v2554 = vunpack.c.h.b16 %v2461
    %v2555 = vunpack.c.l.b16 %v2462
    %v2556 = vunpack.c.h.b16 %v2462
    %v2557 = vunpack.c.l.b16 %v2463
    %v2558 = vunpack.c.h.b16 %v2463
    %v2559 = vunpack.c.l.b16 %v2464
    %v2560 = vunpack.c.h.b16 %v2464
    %v2561 = vunpack.c.l.b16 %v2465
    %v2562 = vunpack.c.h.b16 %v2465
    %v2563 = vunpack.c.l.b16 %v2466
    %v2564 = vunpack.c.h.b16 %v2466
    %v2565 = vunpack.c.l.b16 %v2467
    %v2566 = vunpack.c.h.b16 %v2467
    %v2567 = vunpack.c.l.b16 %v2468
    %v2568 = vunpack.c.h.b16 %v2468
    %v2569 = vunpack.c.l.b16 %v2469
    %v2570 = vunpack.c.h.b16 %v2469
    %v2571 = vunpack.c.l.b16 %v2470
    %v2572 = vunpack.c.h.b16 %v2470
    %v2573 = vunpack.c.l.b16 %v2471
    %v2574 = vunpack.c.h.b16 %v2471
    %v2575 = vunpack.c.l.b16 %v2472
    %v2576 = vunpack.c.h.b16 %v2472
    %v2577 = vunpack.c.l.b16 %v2473
    %v2578 = vunpack.c.h.b16 %v2473
    %v2579 = vunpack.c.l.b16 %v2474
    %v2580 = vunpack.c.h.b16 %v2474
    %v2581 = vunpack.c.l.b16 %v2475
    %v2582 = vunpack.c.h.b16 %v2475
    %v2583 = vunpack.c.l.b16 %v2476
    %v2584 = vunpack.c.h.b16 %v2476
    %v2585 = vpack.c.b16 %v2523, %v2521
    %v2586 = vpack.c.b16 %v2524, %v2522
    %v2587 = vpack.c.b16 %v2527, %v2525
    %v2588 = vpack.c.b16 %v2528, %v2526
    %v2589 = vpack.c.b16 %v2531, %v2529
    %v2590 = vpack.c.b16 %v2532, %v2530
    %v2591 = vpack.c.b16 %v2535, %v2533
    %v2592 = vpack.c.b16 %v2536, %v2534
    %v2593 = vpack.c.b16 %v2539, %v2537
    %v2594 = vpack.c.b16 %v2540, %v2538
    %v2595 = vpack.c.b16 %v2543, %v2541
    %v2596 = vpack.c.b16 %v2544, %v2542
    %v2597 = vpack.c.b16 %v2547, %v2545
    %v2598 = vpack.c.b16 %v2548, %v2546
    %v2599 = vpack.c.b16 %v2551, %v2549
    %v2600 = vpack.c.b16 %v2552, %v2550
    %v2601 = vpack.c.b16 %v2555, %v2553
    %v2602 = vpack.c.b16 %v2556, %v2554
    %v2603 = vpack.c.b16 %v2559, %v2557
    %v2604 = vpack.c.b16 %v2560, %v2558
    %v2605 = vpack.c.b16 %v2563, %v2561
    %v2606 = vpack.c.b16 %v2564, %v2562
    %v2607 = vpack.c.b16 %v2567, %v2565
    %v2608 = vpack.c.b16 %v2568, %v2566
    %v2609 = vpack.c.b16 %v2571, %v2569
    %v2610 = vpack.c.b16 %v2572, %v2570
    %v2611 = vpack.c.b16 %v2575, %v2573
    %v2612 = vpack.c.b16 %v2576, %v2574
    %v2613 = vpack.c.b16 %v2579, %v2577
    %v2614 = vpack.c.b16 %v2580, %v2578
    %v2615 = vpack.c.b16 %v2583, %v2581
    %v2616 = vpack.c.b16 %v2584, %v2582
    %2649 = vmatprep.subr.bf16.mxu0 %v2600
    %2650 = vmatpush1.bf16.msra.mxu0 %v2599
    %2651 = vmatprep.subr.bf16.mxu0 %v2598
    %2652 = vmatpush1.bf16.msra.mxu0 %v2597
    %2653 = vmatprep.subr.bf16.mxu0 %v2596
    %2654 = vmatpush1.bf16.msra.mxu0 %v2595
    %2655 = vmatprep.subr.bf16.mxu0 %v2594
    %2656 = vmatpush1.bf16.msra.mxu0 %v2593
    %2657 = vmatprep.subr.bf16.mxu0 %v2592
    %2658 = vmatpush1.bf16.msra.mxu0 %v2591
    %2659 = vmatprep.subr.bf16.mxu0 %v2590
    %2660 = vmatpush1.bf16.msra.mxu0 %v2589
    %2661 = vmatprep.subr.bf16.mxu0 %v2588
    %2662 = vmatpush1.bf16.msra.mxu0 %v2587
    %2663 = vmatprep.subr.bf16.mxu0 %v2586
    %2664 = vmatpush1.bf16.msra.mxu0 %v2585
    %2665 = vmatprep.subr.bf16.mxu0 %v2616
    %2666 = vmatpush2.bf16.msra.mxu0 %v2615
    %2667 = vmatprep.subr.bf16.mxu0 %v2614
    %2668 = vmatpush2.bf16.msra.mxu0 %v2613
    %2669 = vmatprep.subr.bf16.mxu0 %v2612
    %2670 = vmatpush2.bf16.msra.mxu0 %v2611
    %2671 = vmatprep.subr.bf16.mxu0 %v2610
    %2672 = vmatpush2.bf16.msra.mxu0 %v2609
    %2673 = vmatprep.subr.bf16.mxu0 %v2608
    %2674 = vmatpush2.bf16.msra.mxu0 %v2607
    %2675 = vmatprep.subr.bf16.mxu0 %v2606
    %2676 = vmatpush2.bf16.msra.mxu0 %v2605
    %2677 = vmatprep.subr.bf16.mxu0 %v2604
    %2678 = vmatpush2.bf16.msra.mxu0 %v2603
    %2679 = vmatprep.subr.bf16.mxu0 %v2602
    %2680 = vmatpush2.bf16.msra.mxu0 %v2601
    %2681 = vmatprep.mubr.bf16.mxu0 %v2430
    %2682 = vmatmul.mubr.bf16.gmra.mxu0 %v2429
    %v2683 = vpop.f32.mrf.mxu0
    %v2684 = vadd.f32 %v2482, %v2683
    %v2685 = vpop.f32.mrf.mxu0
    %v2686 = vadd.f32 %v2486, %v2685
    %v2687 = vpop.f32.mrf.mxu0
    %v2688 = vadd.f32 %v2482, %v2687
    %v2689 = vpop.f32.mrf.mxu0
    %v2690 = vadd.f32 %v2486, %v2689
    %2691 = vmatprep.mubr.bf16.mxu0 %v2432
    %2692 = vmatmul.mubr.bf16.gmra.mxu0 %v2431
    %v2693 = vpop.f32.mrf.mxu0
    %v2694 = vadd.f32 %v2482, %v2693
    %v2695 = vpop.f32.mrf.mxu0
    %v2696 = vadd.f32 %v2486, %v2695
    %v2697 = vpop.f32.mrf.mxu0
    %v2698 = vadd.f32 %v2482, %v2697
    %v2699 = vpop.f32.mrf.mxu0
    %v2700 = vadd.f32 %v2486, %v2699
    %2701 = vmatprep.mubr.bf16.mxu0 %v2434
    %2702 = vmatmul.mubr.bf16.gmra.mxu0 %v2433
    %v2703 = vpop.f32.mrf.mxu0
    %v2704 = vadd.f32 %v2482, %v2703
    %v2705 = vpop.f32.mrf.mxu0
    %v2706 = vadd.f32 %v2486, %v2705
    %v2707 = vpop.f32.mrf.mxu0
    %v2708 = vadd.f32 %v2482, %v2707
    %v2709 = vpop.f32.mrf.mxu0
    %v2710 = vadd.f32 %v2486, %v2709
    %2711 = vmatprep.mubr.bf16.mxu0 %v2436
    %2712 = vmatmul.mubr.bf16.gmra.mxu0 %v2435
    %v2713 = vpop.f32.mrf.mxu0
    %v2714 = vadd.f32 %v2482, %v2713
    %v2715 = vpop.f32.mrf.mxu0
    %v2716 = vadd.f32 %v2486, %v2715
    %v2717 = vpop.f32.mrf.mxu0
    %v2718 = vadd.f32 %v2482, %v2717
    %v2719 = vpop.f32.mrf.mxu0
    %v2720 = vadd.f32 %v2486, %v2719
    %2721 = vmatprep.mubr.bf16.mxu0 %v2438
    %2722 = vmatmul.mubr.bf16.gmra.mxu0 %v2437
    %v2723 = vpop.f32.mrf.mxu0
    %v2724 = vadd.f32 %v2482, %v2723
    %v2725 = vpop.f32.mrf.mxu0
    %v2726 = vadd.f32 %v2486, %v2725
    %v2727 = vpop.f32.mrf.mxu0
    %v2728 = vadd.f32 %v2482, %v2727
    %v2729 = vpop.f32.mrf.mxu0
    %v2730 = vadd.f32 %v2486, %v2729
    %2731 = vmatprep.mubr.bf16.mxu0 %v2440
    %2732 = vmatmul.mubr.bf16.gmra.mxu0 %v2439
    %v2733 = vpop.f32.mrf.mxu0
    %v2734 = vadd.f32 %v2482, %v2733
    %v2735 = vpop.f32.mrf.mxu0
    %v2736 = vadd.f32 %v2486, %v2735
    %v2737 = vpop.f32.mrf.mxu0
    %v2738 = vadd.f32 %v2482, %v2737
    %v2739 = vpop.f32.mrf.mxu0
    %v2740 = vadd.f32 %v2486, %v2739
    %2741 = vmatprep.mubr.bf16.mxu0 %v2442
    %2742 = vmatmul.mubr.bf16.gmra.mxu0 %v2441
    %v2743 = vpop.f32.mrf.mxu0
    %v2744 = vadd.f32 %v2482, %v2743
    %v2745 = vpop.f32.mrf.mxu0
    %v2746 = vadd.f32 %v2486, %v2745
    %v2747 = vpop.f32.mrf.mxu0
    %v2748 = vadd.f32 %v2482, %v2747
    %v2749 = vpop.f32.mrf.mxu0
    %v2750 = vadd.f32 %v2486, %v2749
    %2751 = vmatprep.mubr.bf16.mxu0 %v2444
    %2752 = vmatmul.mubr.bf16.gmra.mxu0 %v2443
    %v2753 = vpop.f32.mrf.mxu0
    %v2754 = vadd.f32 %v2482, %v2753
    %v2755 = vpop.f32.mrf.mxu0
    %v2756 = vadd.f32 %v2486, %v2755
    %v2757 = vpop.f32.mrf.mxu0
    %v2758 = vadd.f32 %v2482, %v2757
    %v2759 = vpop.f32.mrf.mxu0
    %v2760 = vadd.f32 %v2486, %v2759
    %2761 = vdwg.mxu0
    %v2762 = vmax.f32 %v2684, 0.0
    %v2763 = vmax.f32 %v2686, 0.0
    %v2764 = vmax.f32 %v2688, 0.0
    %v2765 = vmax.f32 %v2690, 0.0
    %v2766 = vmax.f32 %v2694, 0.0
    %v2767 = vmax.f32 %v2696, 0.0
    %v2768 = vmax.f32 %v2698, 0.0
    %v2769 = vmax.f32 %v2700, 0.0
    %v2770 = vmax.f32 %v2704, 0.0
    %v2771 = vmax.f32 %v2706, 0.0
    %v2772 = vmax.f32 %v2708, 0.0
    %v2773 = vmax.f32 %v2710, 0.0
    %v2774 = vmax.f32 %v2714, 0.0
    %v2775 = vmax.f32 %v2716, 0.0
    %v2776 = vmax.f32 %v2718, 0.0
    %v2777 = vmax.f32 %v2720, 0.0
    %v2778 = vmax.f32 %v2724, 0.0
    %v2779 = vmax.f32 %v2726, 0.0
    %v2780 = vmax.f32 %v2728, 0.0
    %v2781 = vmax.f32 %v2730, 0.0
    %v2782 = vmax.f32 %v2734, 0.0
    %v2783 = vmax.f32 %v2736, 0.0
    %v2784 = vmax.f32 %v2738, 0.0
    %v2785 = vmax.f32 %v2740, 0.0
    %v2786 = vmax.f32 %v2744, 0.0
    %v2787 = vmax.f32 %v2746, 0.0
    %v2788 = vmax.f32 %v2748, 0.0
    %v2789 = vmax.f32 %v2750, 0.0
    %v2790 = vmax.f32 %v2754, 0.0
    %v2791 = vmax.f32 %v2756, 0.0
    %v2792 = vmax.f32 %v2758, 0.0
    %v2793 = vmax.f32 %v2760, 0.0
    %v2794 = vadd.f32 %v2762, %v2764
    %v2795 = vadd.f32 %v2794, %v2766
    %v2796 = vadd.f32 %v2795, %v2768
    %v2797 = vadd.f32 %v2796, %v2770
    %v2798 = vadd.f32 %v2797, %v2772
    %v2799 = vadd.f32 %v2798, %v2774
    %v2800 = vadd.f32 %v2799, %v2776
    %v2801 = vrot.slane %v2800, 4
    %v2802 = vadd.f32 %v2800, %v2801
    %v2803 = vrot.slane %v2802, 2
    %v2804 = vadd.f32 %v2802, %v2803
    %v2805 = vrot.slane %v2804, 1
    %v2806 = vadd.f32 %v2804, %v2805
    %v2807 = vadd.f32 %v2763, %v2765
    %v2808 = vadd.f32 %v2807, %v2767
    %v2809 = vadd.f32 %v2808, %v2769
    %v2810 = vadd.f32 %v2809, %v2771
    %v2811 = vadd.f32 %v2810, %v2773
    %v2812 = vadd.f32 %v2811, %v2775
    %v2813 = vadd.f32 %v2812, %v2777
    %v2814 = vrot.slane %v2813, 4
    %v2815 = vadd.f32 %v2813, %v2814
    %v2816 = vrot.slane %v2815, 2
    %v2817 = vadd.f32 %v2815, %v2816
    %v2818 = vrot.slane %v2817, 1
    %v2819 = vadd.f32 %v2817, %v2818
    %v2820 = vadd.f32 %v2778, %v2780
    %v2821 = vadd.f32 %v2820, %v2782
    %v2822 = vadd.f32 %v2821, %v2784
    %v2823 = vadd.f32 %v2822, %v2786
    %v2824 = vadd.f32 %v2823, %v2788
    %v2825 = vadd.f32 %v2824, %v2790
    %v2826 = vadd.f32 %v2825, %v2792
    %v2827 = vrot.slane %v2826, 4
    %v2828 = vadd.f32 %v2826, %v2827
    %v2829 = vrot.slane %v2828, 2
    %v2830 = vadd.f32 %v2828, %v2829
    %v2831 = vrot.slane %v2830, 1
    %v2832 = vadd.f32 %v2830, %v2831
    %v2833 = vadd.f32 %v2779, %v2781
    %v2834 = vadd.f32 %v2833, %v2783
    %v2835 = vadd.f32 %v2834, %v2785
    %v2836 = vadd.f32 %v2835, %v2787
    %v2837 = vadd.f32 %v2836, %v2789
    %v2838 = vadd.f32 %v2837, %v2791
    %v2839 = vadd.f32 %v2838, %v2793
    %v2840 = vrot.slane %v2839, 4
    %v2841 = vadd.f32 %v2839, %v2840
    %v2842 = vrot.slane %v2841, 2
    %v2843 = vadd.f32 %v2841, %v2842
    %v2844 = vrot.slane %v2843, 1
    %v2845 = vadd.f32 %v2843, %v2844
    %v2846 = vpack.c.bf16 %v2806, %v2806
    %v2847 = vpack.c.bf16 %v2819, %v2819
    %v2848 = vpack.c.bf16 %v2832, %v2832
    %v2849 = vpack.c.bf16 %v2845, %v2845
    %v2850 = vld [vmem:[%s14] sm:$0xff]
    %v2851 = vld [vmem:[%s14 + $0x8] sm:$0xff]
    %v2852 = vld [vmem:[%s14 + $0x10] sm:$0xff]
    %v2853 = vld [vmem:[%s14 + $0x18] sm:$0xff]
    %v2854 = vld [vmem:[%s14 + $0x20] sm:$0xff]
    %v2855 = vld [vmem:[%s14 + $0x28] sm:$0xff]
    %v2856 = vld [vmem:[%s14 + $0x30] sm:$0xff]
    %v2857 = vld [vmem:[%s14 + $0x38] sm:$0xff]
    %v2858 = vld [vmem:[%s14 + $0x40] sm:$0xff]
    %v2859 = vld [vmem:[%s14 + $0x48] sm:$0xff]
    %v2860 = vld [vmem:[%s14 + $0x50] sm:$0xff]
    %v2861 = vld [vmem:[%s14 + $0x58] sm:$0xff]
    %v2862 = vld [vmem:[%s14 + $0x60] sm:$0xff]
    %v2863 = vld [vmem:[%s14 + $0x68] sm:$0xff]
    %v2864 = vld [vmem:[%s14 + $0x70] sm:$0xff]
    %v2865 = vld [vmem:[%s14 + $0x78] sm:$0xff]
    %v2866 = vld [vmem:[%s14 + $0x80] sm:$0xff]
    %v2867 = vld [vmem:[%s14 + $0x88] sm:$0xff]
    %v2868 = vld [vmem:[%s14 + $0x90] sm:$0xff]
    %v2869 = vld [vmem:[%s14 + $0x98] sm:$0xff]
    %v2870 = vld [vmem:[%s14 + $0xa0] sm:$0xff]
    %v2871 = vld [vmem:[%s14 + $0xa8] sm:$0xff]
    %v2872 = vld [vmem:[%s14 + $0xb0] sm:$0xff]
    %v2873 = vld [vmem:[%s14 + $0xb8] sm:$0xff]
    %v2874 = vld [vmem:[%s14 + $0xc0] sm:$0xff]
    %v2875 = vld [vmem:[%s14 + $0xc8] sm:$0xff]
    %v2876 = vld [vmem:[%s14 + $0xd0] sm:$0xff]
    %v2877 = vld [vmem:[%s14 + $0xd8] sm:$0xff]
    %v2878 = vld [vmem:[%s14 + $0xe0] sm:$0xff]
    %v2879 = vld [vmem:[%s14 + $0xe8] sm:$0xff]
    %v2880 = vld [vmem:[%s14 + $0xf0] sm:$0xff]
    %v2881 = vld [vmem:[%s14 + $0xf8] sm:$0xff]
    %v2882 = vld [vmem:[%s15] sm:$0x3]
    %v2884 = vlaneseq
    %v2885 = vshrl.u32 %v2884, 7
    %v2886 = vsub.s32 0, %v2885
    %v2887 = vrot.slane %v2882, %v2886
    %v2888 = vlaneseq
    %v2889 = vshrl.u32 %v2888, 7
    %v2890 = vsub.s32 1, %v2889
    %v2891 = vrot.slane %v2882, %v2890
    %v2898 = vunpack.c.l.b16 %v2846
    %v2899 = vunpack.c.l.b16 %v2847
    %v2900 = vunpack.c.l.b16 %v2848
    %v2901 = vunpack.c.l.b16 %v2849
    %vm2902 = vcmask 1041409
    %v2903 = vsel %vm2902, %v2900, %v2898
    %v2904 = vsel %vm2902, %v2901, %v2899
    %v2905 = vpack.c.b16 %v2903, %v2903
    %v2906 = vpack.c.b16 %v2904, %v2904
    %v2941 = vunpack.c.l.b16 %v2850
    %v2942 = vunpack.c.h.b16 %v2850
    %v2943 = vunpack.c.l.b16 %v2851
    %v2944 = vunpack.c.h.b16 %v2851
    %v2945 = vunpack.c.l.b16 %v2852
    %v2946 = vunpack.c.h.b16 %v2852
    %v2947 = vunpack.c.l.b16 %v2853
    %v2948 = vunpack.c.h.b16 %v2853
    %v2949 = vunpack.c.l.b16 %v2854
    %v2950 = vunpack.c.h.b16 %v2854
    %v2951 = vunpack.c.l.b16 %v2855
    %v2952 = vunpack.c.h.b16 %v2855
    %v2953 = vunpack.c.l.b16 %v2856
    %v2954 = vunpack.c.h.b16 %v2856
    %v2955 = vunpack.c.l.b16 %v2857
    %v2956 = vunpack.c.h.b16 %v2857
    %v2957 = vunpack.c.l.b16 %v2858
    %v2958 = vunpack.c.h.b16 %v2858
    %v2959 = vunpack.c.l.b16 %v2859
    %v2960 = vunpack.c.h.b16 %v2859
    %v2961 = vunpack.c.l.b16 %v2860
    %v2962 = vunpack.c.h.b16 %v2860
    %v2963 = vunpack.c.l.b16 %v2861
    %v2964 = vunpack.c.h.b16 %v2861
    %v2965 = vunpack.c.l.b16 %v2862
    %v2966 = vunpack.c.h.b16 %v2862
    %v2967 = vunpack.c.l.b16 %v2863
    %v2968 = vunpack.c.h.b16 %v2863
    %v2969 = vunpack.c.l.b16 %v2864
    %v2970 = vunpack.c.h.b16 %v2864
    %v2971 = vunpack.c.l.b16 %v2865
    %v2972 = vunpack.c.h.b16 %v2865
    %v2973 = vunpack.c.l.b16 %v2866
    %v2974 = vunpack.c.h.b16 %v2866
    %v2975 = vunpack.c.l.b16 %v2867
    %v2976 = vunpack.c.h.b16 %v2867
    %v2977 = vunpack.c.l.b16 %v2868
    %v2978 = vunpack.c.h.b16 %v2868
    %v2979 = vunpack.c.l.b16 %v2869
    %v2980 = vunpack.c.h.b16 %v2869
    %v2981 = vunpack.c.l.b16 %v2870
    %v2982 = vunpack.c.h.b16 %v2870
    %v2983 = vunpack.c.l.b16 %v2871
    %v2984 = vunpack.c.h.b16 %v2871
    %v2985 = vunpack.c.l.b16 %v2872
    %v2986 = vunpack.c.h.b16 %v2872
    %v2987 = vunpack.c.l.b16 %v2873
    %v2988 = vunpack.c.h.b16 %v2873
    %v2989 = vunpack.c.l.b16 %v2874
    %v2990 = vunpack.c.h.b16 %v2874
    %v2991 = vunpack.c.l.b16 %v2875
    %v2992 = vunpack.c.h.b16 %v2875
    %v2993 = vunpack.c.l.b16 %v2876
    %v2994 = vunpack.c.h.b16 %v2876
    %v2995 = vunpack.c.l.b16 %v2877
    %v2996 = vunpack.c.h.b16 %v2877
    %v2997 = vunpack.c.l.b16 %v2878
    %v2998 = vunpack.c.h.b16 %v2878
    %v2999 = vunpack.c.l.b16 %v2879
    %v3000 = vunpack.c.h.b16 %v2879
    %v3001 = vunpack.c.l.b16 %v2880
    %v3002 = vunpack.c.h.b16 %v2880
    %v3003 = vunpack.c.l.b16 %v2881
    %v3004 = vunpack.c.h.b16 %v2881
    %v3005 = vpack.c.b16 %v2943, %v2941
    %v3006 = vpack.c.b16 %v2944, %v2942
    %v3007 = vpack.c.b16 %v2947, %v2945
    %v3008 = vpack.c.b16 %v2948, %v2946
    %v3009 = vpack.c.b16 %v2951, %v2949
    %v3010 = vpack.c.b16 %v2952, %v2950
    %v3011 = vpack.c.b16 %v2955, %v2953
    %v3012 = vpack.c.b16 %v2956, %v2954
    %v3013 = vpack.c.b16 %v2959, %v2957
    %v3014 = vpack.c.b16 %v2960, %v2958
    %v3015 = vpack.c.b16 %v2963, %v2961
    %v3016 = vpack.c.b16 %v2964, %v2962
    %v3017 = vpack.c.b16 %v2967, %v2965
    %v3018 = vpack.c.b16 %v2968, %v2966
    %v3019 = vpack.c.b16 %v2971, %v2969
    %v3020 = vpack.c.b16 %v2972, %v2970
    %v3021 = vpack.c.b16 %v2975, %v2973
    %v3022 = vpack.c.b16 %v2976, %v2974
    %v3023 = vpack.c.b16 %v2979, %v2977
    %v3024 = vpack.c.b16 %v2980, %v2978
    %v3025 = vpack.c.b16 %v2983, %v2981
    %v3026 = vpack.c.b16 %v2984, %v2982
    %v3027 = vpack.c.b16 %v2987, %v2985
    %v3028 = vpack.c.b16 %v2988, %v2986
    %v3029 = vpack.c.b16 %v2991, %v2989
    %v3030 = vpack.c.b16 %v2992, %v2990
    %v3031 = vpack.c.b16 %v2995, %v2993
    %v3032 = vpack.c.b16 %v2996, %v2994
    %v3033 = vpack.c.b16 %v2999, %v2997
    %v3034 = vpack.c.b16 %v3000, %v2998
    %v3035 = vpack.c.b16 %v3003, %v3001
    %v3036 = vpack.c.b16 %v3004, %v3002
    %3069 = vmatprep.subr.bf16.mxu0 %v3020
    %3070 = vmatpush1.bf16.msra.mxu0 %v3019
    %3071 = vmatprep.subr.bf16.mxu0 %v3018
    %3072 = vmatpush1.bf16.msra.mxu0 %v3017
    %3073 = vmatprep.subr.bf16.mxu0 %v3016
    %3074 = vmatpush1.bf16.msra.mxu0 %v3015
    %3075 = vmatprep.subr.bf16.mxu0 %v3014
    %3076 = vmatpush1.bf16.msra.mxu0 %v3013
    %3077 = vmatprep.subr.bf16.mxu0 %v3012
    %3078 = vmatpush1.bf16.msra.mxu0 %v3011
    %3079 = vmatprep.subr.bf16.mxu0 %v3010
    %3080 = vmatpush1.bf16.msra.mxu0 %v3009
    %3081 = vmatprep.subr.bf16.mxu0 %v3008
    %3082 = vmatpush1.bf16.msra.mxu0 %v3007
    %3083 = vmatprep.subr.bf16.mxu0 %v3006
    %3084 = vmatpush1.bf16.msra.mxu0 %v3005
    %3085 = vmatprep.subr.bf16.mxu0 %v3036
    %3086 = vmatpush2.bf16.msra.mxu0 %v3035
    %3087 = vmatprep.subr.bf16.mxu0 %v3034
    %3088 = vmatpush2.bf16.msra.mxu0 %v3033
    %3089 = vmatprep.subr.bf16.mxu0 %v3032
    %3090 = vmatpush2.bf16.msra.mxu0 %v3031
    %3091 = vmatprep.subr.bf16.mxu0 %v3030
    %3092 = vmatpush2.bf16.msra.mxu0 %v3029
    %3093 = vmatprep.subr.bf16.mxu0 %v3028
    %3094 = vmatpush2.bf16.msra.mxu0 %v3027
    %3095 = vmatprep.subr.bf16.mxu0 %v3026
    %3096 = vmatpush2.bf16.msra.mxu0 %v3025
    %3097 = vmatprep.subr.bf16.mxu0 %v3024
    %3098 = vmatpush2.bf16.msra.mxu0 %v3023
    %3099 = vmatprep.subr.bf16.mxu0 %v3022
    %3100 = vmatpush2.bf16.msra.mxu0 %v3021
    %3101 = vmatprep.mubr.bf16.mxu0 %v2906
    %3102 = vmatmul.mubr.bf16.gmra.mxu0 %v2905
    %v3103 = vpop.f32.mrf.mxu0
    %v3104 = vadd.f32 %v2887, %v3103
    %v3105 = vpop.f32.mrf.mxu0
    %v3106 = vadd.f32 %v2891, %v3105
    %v3107 = vpop.f32.mrf.mxu0
    %v3108 = vpop.f32.mrf.mxu0
    %3109 = vdwg.mxu0
    %v3110 = vmax.f32 %v3104, 0.0
    %v3111 = vmax.f32 %v3106, 0.0
    %v3112 = vpack.c.bf16 %v3110, %v3110
    %v3113 = vpack.c.bf16 %v3111, %v3111
    %v3114 = vld [vmem:[%s16] sm:$0xff]
    %v3115 = vld [vmem:[%s16 + $0x8] sm:$0xff]
    %v3116 = vld [vmem:[%s16 + $0x10] sm:$0xff]
    %v3117 = vld [vmem:[%s16 + $0x18] sm:$0xff]
    %v3118 = vld [vmem:[%s16 + $0x20] sm:$0xff]
    %v3119 = vld [vmem:[%s16 + $0x28] sm:$0xff]
    %v3120 = vld [vmem:[%s16 + $0x30] sm:$0xff]
    %v3121 = vld [vmem:[%s16 + $0x38] sm:$0xff]
    %v3122 = vld [vmem:[%s16 + $0x40] sm:$0xff]
    %v3123 = vld [vmem:[%s16 + $0x48] sm:$0xff]
    %v3124 = vld [vmem:[%s16 + $0x50] sm:$0xff]
    %v3125 = vld [vmem:[%s16 + $0x58] sm:$0xff]
    %v3126 = vld [vmem:[%s16 + $0x60] sm:$0xff]
    %v3127 = vld [vmem:[%s16 + $0x68] sm:$0xff]
    %v3128 = vld [vmem:[%s16 + $0x70] sm:$0xff]
    %v3129 = vld [vmem:[%s16 + $0x78] sm:$0xff]
    %v3130 = vld [vmem:[%s16 + $0x80] sm:$0xff]
    %v3131 = vld [vmem:[%s16 + $0x88] sm:$0xff]
    %v3132 = vld [vmem:[%s16 + $0x90] sm:$0xff]
    %v3133 = vld [vmem:[%s16 + $0x98] sm:$0xff]
    %v3134 = vld [vmem:[%s16 + $0xa0] sm:$0xff]
    %v3135 = vld [vmem:[%s16 + $0xa8] sm:$0xff]
    %v3136 = vld [vmem:[%s16 + $0xb0] sm:$0xff]
    %v3137 = vld [vmem:[%s16 + $0xb8] sm:$0xff]
    %v3138 = vld [vmem:[%s16 + $0xc0] sm:$0xff]
    %v3139 = vld [vmem:[%s16 + $0xc8] sm:$0xff]
    %v3140 = vld [vmem:[%s16 + $0xd0] sm:$0xff]
    %v3141 = vld [vmem:[%s16 + $0xd8] sm:$0xff]
    %v3142 = vld [vmem:[%s16 + $0xe0] sm:$0xff]
    %v3143 = vld [vmem:[%s16 + $0xe8] sm:$0xff]
    %v3144 = vld [vmem:[%s16 + $0xf0] sm:$0xff]
    %v3145 = vld [vmem:[%s16 + $0xf8] sm:$0xff]
    %v3146 = vld [vmem:[%s16 + $0x100] sm:$0xff]
    %v3147 = vld [vmem:[%s16 + $0x108] sm:$0xff]
    %v3148 = vld [vmem:[%s16 + $0x110] sm:$0xff]
    %v3149 = vld [vmem:[%s16 + $0x118] sm:$0xff]
    %v3150 = vld [vmem:[%s16 + $0x120] sm:$0xff]
    %v3151 = vld [vmem:[%s16 + $0x128] sm:$0xff]
    %v3152 = vld [vmem:[%s16 + $0x130] sm:$0xff]
    %v3153 = vld [vmem:[%s16 + $0x138] sm:$0xff]
    %v3154 = vld [vmem:[%s16 + $0x140] sm:$0xff]
    %v3155 = vld [vmem:[%s16 + $0x148] sm:$0xff]
    %v3156 = vld [vmem:[%s16 + $0x150] sm:$0xff]
    %v3157 = vld [vmem:[%s16 + $0x158] sm:$0xff]
    %v3158 = vld [vmem:[%s16 + $0x160] sm:$0xff]
    %v3159 = vld [vmem:[%s16 + $0x168] sm:$0xff]
    %v3160 = vld [vmem:[%s16 + $0x170] sm:$0xff]
    %v3161 = vld [vmem:[%s16 + $0x178] sm:$0xff]
    %v3162 = vld [vmem:[%s16 + $0x180] sm:$0xff]
    %v3163 = vld [vmem:[%s16 + $0x188] sm:$0xff]
    %v3164 = vld [vmem:[%s16 + $0x190] sm:$0xff]
    %v3165 = vld [vmem:[%s16 + $0x198] sm:$0xff]
    %v3166 = vld [vmem:[%s16 + $0x1a0] sm:$0xff]
    %v3167 = vld [vmem:[%s16 + $0x1a8] sm:$0xff]
    %v3168 = vld [vmem:[%s16 + $0x1b0] sm:$0xff]
    %v3169 = vld [vmem:[%s16 + $0x1b8] sm:$0xff]
    %v3170 = vld [vmem:[%s16 + $0x1c0] sm:$0xff]
    %v3171 = vld [vmem:[%s16 + $0x1c8] sm:$0xff]
    %v3172 = vld [vmem:[%s16 + $0x1d0] sm:$0xff]
    %v3173 = vld [vmem:[%s16 + $0x1d8] sm:$0xff]
    %v3174 = vld [vmem:[%s16 + $0x1e0] sm:$0xff]
    %v3175 = vld [vmem:[%s16 + $0x1e8] sm:$0xff]
    %v3176 = vld [vmem:[%s16 + $0x1f0] sm:$0xff]
    %v3177 = vld [vmem:[%s16 + $0x1f8] sm:$0xff]
    %v3178 = vld [vmem:[%s17] sm:$0xf]
    %v3180 = vlaneseq
    %v3181 = vshrl.u32 %v3180, 7
    %v3182 = vsub.s32 0, %v3181
    %v3183 = vrot.slane %v3178, %v3182
    %v3184 = vlaneseq
    %v3185 = vshrl.u32 %v3184, 7
    %v3186 = vsub.s32 1, %v3185
    %v3187 = vrot.slane %v3178, %v3186
    %v3188 = vlaneseq
    %v3189 = vshrl.u32 %v3188, 7
    %v3190 = vsub.s32 2, %v3189
    %v3191 = vrot.slane %v3178, %v3190
    %v3192 = vlaneseq
    %v3193 = vshrl.u32 %v3192, 7
    %v3194 = vsub.s32 3, %v3193
    %v3195 = vrot.slane %v3178, %v3194
    %v3264 = vunpack.c.l.b16 %v3114
    %v3265 = vunpack.c.h.b16 %v3114
    %v3266 = vunpack.c.l.b16 %v3115
    %v3267 = vunpack.c.h.b16 %v3115
    %v3268 = vunpack.c.l.b16 %v3116
    %v3269 = vunpack.c.h.b16 %v3116
    %v3270 = vunpack.c.l.b16 %v3117
    %v3271 = vunpack.c.h.b16 %v3117
    %v3272 = vunpack.c.l.b16 %v3118
    %v3273 = vunpack.c.h.b16 %v3118
    %v3274 = vunpack.c.l.b16 %v3119
    %v3275 = vunpack.c.h.b16 %v3119
    %v3276 = vunpack.c.l.b16 %v3120
    %v3277 = vunpack.c.h.b16 %v3120
    %v3278 = vunpack.c.l.b16 %v3121
    %v3279 = vunpack.c.h.b16 %v3121
    %v3280 = vunpack.c.l.b16 %v3122
    %v3281 = vunpack.c.h.b16 %v3122
    %v3282 = vunpack.c.l.b16 %v3123
    %v3283 = vunpack.c.h.b16 %v3123
    %v3284 = vunpack.c.l.b16 %v3124
    %v3285 = vunpack.c.h.b16 %v3124
    %v3286 = vunpack.c.l.b16 %v3125
    %v3287 = vunpack.c.h.b16 %v3125
    %v3288 = vunpack.c.l.b16 %v3126
    %v3289 = vunpack.c.h.b16 %v3126
    %v3290 = vunpack.c.l.b16 %v3127
    %v3291 = vunpack.c.h.b16 %v3127
    %v3292 = vunpack.c.l.b16 %v3128
    %v3293 = vunpack.c.h.b16 %v3128
    %v3294 = vunpack.c.l.b16 %v3129
    %v3295 = vunpack.c.h.b16 %v3129
    %v3296 = vunpack.c.l.b16 %v3130
    %v3297 = vunpack.c.h.b16 %v3130
    %v3298 = vunpack.c.l.b16 %v3131
    %v3299 = vunpack.c.h.b16 %v3131
    %v3300 = vunpack.c.l.b16 %v3132
    %v3301 = vunpack.c.h.b16 %v3132
    %v3302 = vunpack.c.l.b16 %v3133
    %v3303 = vunpack.c.h.b16 %v3133
    %v3304 = vunpack.c.l.b16 %v3134
    %v3305 = vunpack.c.h.b16 %v3134
    %v3306 = vunpack.c.l.b16 %v3135
    %v3307 = vunpack.c.h.b16 %v3135
    %v3308 = vunpack.c.l.b16 %v3136
    %v3309 = vunpack.c.h.b16 %v3136
    %v3310 = vunpack.c.l.b16 %v3137
    %v3311 = vunpack.c.h.b16 %v3137
    %v3312 = vunpack.c.l.b16 %v3138
    %v3313 = vunpack.c.h.b16 %v3138
    %v3314 = vunpack.c.l.b16 %v3139
    %v3315 = vunpack.c.h.b16 %v3139
    %v3316 = vunpack.c.l.b16 %v3140
    %v3317 = vunpack.c.h.b16 %v3140
    %v3318 = vunpack.c.l.b16 %v3141
    %v3319 = vunpack.c.h.b16 %v3141
    %v3320 = vunpack.c.l.b16 %v3142
    %v3321 = vunpack.c.h.b16 %v3142
    %v3322 = vunpack.c.l.b16 %v3143
    %v3323 = vunpack.c.h.b16 %v3143
    %v3324 = vunpack.c.l.b16 %v3144
    %v3325 = vunpack.c.h.b16 %v3144
    %v3326 = vunpack.c.l.b16 %v3145
    %v3327 = vunpack.c.h.b16 %v3145
    %v3328 = vunpack.c.l.b16 %v3146
    %v3329 = vunpack.c.h.b16 %v3146
    %v3330 = vunpack.c.l.b16 %v3147
    %v3331 = vunpack.c.h.b16 %v3147
    %v3332 = vunpack.c.l.b16 %v3148
    %v3333 = vunpack.c.h.b16 %v3148
    %v3334 = vunpack.c.l.b16 %v3149
    %v3335 = vunpack.c.h.b16 %v3149
    %v3336 = vunpack.c.l.b16 %v3150
    %v3337 = vunpack.c.h.b16 %v3150
    %v3338 = vunpack.c.l.b16 %v3151
    %v3339 = vunpack.c.h.b16 %v3151
    %v3340 = vunpack.c.l.b16 %v3152
    %v3341 = vunpack.c.h.b16 %v3152
    %v3342 = vunpack.c.l.b16 %v3153
    %v3343 = vunpack.c.h.b16 %v3153
    %v3344 = vunpack.c.l.b16 %v3154
    %v3345 = vunpack.c.h.b16 %v3154
    %v3346 = vunpack.c.l.b16 %v3155
    %v3347 = vunpack.c.h.b16 %v3155
    %v3348 = vunpack.c.l.b16 %v3156
    %v3349 = vunpack.c.h.b16 %v3156
    %v3350 = vunpack.c.l.b16 %v3157
    %v3351 = vunpack.c.h.b16 %v3157
    %v3352 = vunpack.c.l.b16 %v3158
    %v3353 = vunpack.c.h.b16 %v3158
    %v3354 = vunpack.c.l.b16 %v3159
    %v3355 = vunpack.c.h.b16 %v3159
    %v3356 = vunpack.c.l.b16 %v3160
    %v3357 = vunpack.c.h.b16 %v3160
    %v3358 = vunpack.c.l.b16 %v3161
    %v3359 = vunpack.c.h.b16 %v3161
    %v3360 = vunpack.c.l.b16 %v3162
    %v3361 = vunpack.c.h.b16 %v3162
    %v3362 = vunpack.c.l.b16 %v3163
    %v3363 = vunpack.c.h.b16 %v3163
    %v3364 = vunpack.c.l.b16 %v3164
    %v3365 = vunpack.c.h.b16 %v3164
    %v3366 = vunpack.c.l.b16 %v3165
    %v3367 = vunpack.c.h.b16 %v3165
    %v3368 = vunpack.c.l.b16 %v3166
    %v3369 = vunpack.c.h.b16 %v3166
    %v3370 = vunpack.c.l.b16 %v3167
    %v3371 = vunpack.c.h.b16 %v3167
    %v3372 = vunpack.c.l.b16 %v3168
    %v3373 = vunpack.c.h.b16 %v3168
    %v3374 = vunpack.c.l.b16 %v3169
    %v3375 = vunpack.c.h.b16 %v3169
    %v3376 = vunpack.c.l.b16 %v3170
    %v3377 = vunpack.c.h.b16 %v3170
    %v3378 = vunpack.c.l.b16 %v3171
    %v3379 = vunpack.c.h.b16 %v3171
    %v3380 = vunpack.c.l.b16 %v3172
    %v3381 = vunpack.c.h.b16 %v3172
    %v3382 = vunpack.c.l.b16 %v3173
    %v3383 = vunpack.c.h.b16 %v3173
    %v3384 = vunpack.c.l.b16 %v3174
    %v3385 = vunpack.c.h.b16 %v3174
    %v3386 = vunpack.c.l.b16 %v3175
    %v3387 = vunpack.c.h.b16 %v3175
    %v3388 = vunpack.c.l.b16 %v3176
    %v3389 = vunpack.c.h.b16 %v3176
    %v3390 = vunpack.c.l.b16 %v3177
    %v3391 = vunpack.c.h.b16 %v3177
    %v3392 = vpack.c.b16 %v3268, %v3264
    %v3393 = vpack.c.b16 %v3269, %v3265
    %v3394 = vpack.c.b16 %v3270, %v3266
    %v3395 = vpack.c.b16 %v3271, %v3267
    %v3396 = vpack.c.b16 %v3276, %v3272
    %v3397 = vpack.c.b16 %v3277, %v3273
    %v3398 = vpack.c.b16 %v3278, %v3274
    %v3399 = vpack.c.b16 %v3279, %v3275
    %v3400 = vpack.c.b16 %v3284, %v3280
    %v3401 = vpack.c.b16 %v3285, %v3281
    %v3402 = vpack.c.b16 %v3286, %v3282
    %v3403 = vpack.c.b16 %v3287, %v3283
    %v3404 = vpack.c.b16 %v3292, %v3288
    %v3405 = vpack.c.b16 %v3293, %v3289
    %v3406 = vpack.c.b16 %v3294, %v3290
    %v3407 = vpack.c.b16 %v3295, %v3291
    %v3408 = vpack.c.b16 %v3300, %v3296
    %v3409 = vpack.c.b16 %v3301, %v3297
    %v3410 = vpack.c.b16 %v3302, %v3298
    %v3411 = vpack.c.b16 %v3303, %v3299
    %v3412 = vpack.c.b16 %v3308, %v3304
    %v3413 = vpack.c.b16 %v3309, %v3305
    %v3414 = vpack.c.b16 %v3310, %v3306
    %v3415 = vpack.c.b16 %v3311, %v3307
    %v3416 = vpack.c.b16 %v3316, %v3312
    %v3417 = vpack.c.b16 %v3317, %v3313
    %v3418 = vpack.c.b16 %v3318, %v3314
    %v3419 = vpack.c.b16 %v3319, %v3315
    %v3420 = vpack.c.b16 %v3324, %v3320
    %v3421 = vpack.c.b16 %v3325, %v3321
    %v3422 = vpack.c.b16 %v3326, %v3322
    %v3423 = vpack.c.b16 %v3327, %v3323
    %v3424 = vpack.c.b16 %v3332, %v3328
    %v3425 = vpack.c.b16 %v3333, %v3329
    %v3426 = vpack.c.b16 %v3334, %v3330
    %v3427 = vpack.c.b16 %v3335, %v3331
    %v3428 = vpack.c.b16 %v3340, %v3336
    %v3429 = vpack.c.b16 %v3341, %v3337
    %v3430 = vpack.c.b16 %v3342, %v3338
    %v3431 = vpack.c.b16 %v3343, %v3339
    %v3432 = vpack.c.b16 %v3348, %v3344
    %v3433 = vpack.c.b16 %v3349, %v3345
    %v3434 = vpack.c.b16 %v3350, %v3346
    %v3435 = vpack.c.b16 %v3351, %v3347
    %v3436 = vpack.c.b16 %v3356, %v3352
    %v3437 = vpack.c.b16 %v3357, %v3353
    %v3438 = vpack.c.b16 %v3358, %v3354
    %v3439 = vpack.c.b16 %v3359, %v3355
    %v3440 = vpack.c.b16 %v3364, %v3360
    %v3441 = vpack.c.b16 %v3365, %v3361
    %v3442 = vpack.c.b16 %v3366, %v3362
    %v3443 = vpack.c.b16 %v3367, %v3363
    %v3444 = vpack.c.b16 %v3372, %v3368
    %v3445 = vpack.c.b16 %v3373, %v3369
    %v3446 = vpack.c.b16 %v3374, %v3370
    %v3447 = vpack.c.b16 %v3375, %v3371
    %v3448 = vpack.c.b16 %v3380, %v3376
    %v3449 = vpack.c.b16 %v3381, %v3377
    %v3450 = vpack.c.b16 %v3382, %v3378
    %v3451 = vpack.c.b16 %v3383, %v3379
    %v3452 = vpack.c.b16 %v3388, %v3384
    %v3453 = vpack.c.b16 %v3389, %v3385
    %v3454 = vpack.c.b16 %v3390, %v3386
    %v3455 = vpack.c.b16 %v3391, %v3387
    %3520 = vmatprep.subr.bf16.mxu0 %v3421
    %3521 = vmatpush1.bf16.msra.mxu0 %v3420
    %3522 = vmatprep.subr.bf16.mxu0 %v3417
    %3523 = vmatpush1.bf16.msra.mxu0 %v3416
    %3524 = vmatprep.subr.bf16.mxu0 %v3413
    %3525 = vmatpush1.bf16.msra.mxu0 %v3412
    %3526 = vmatprep.subr.bf16.mxu0 %v3409
    %3527 = vmatpush1.bf16.msra.mxu0 %v3408
    %3528 = vmatprep.subr.bf16.mxu0 %v3405
    %3529 = vmatpush1.bf16.msra.mxu0 %v3404
    %3530 = vmatprep.subr.bf16.mxu0 %v3401
    %3531 = vmatpush1.bf16.msra.mxu0 %v3400
    %3532 = vmatprep.subr.bf16.mxu0 %v3397
    %3533 = vmatpush1.bf16.msra.mxu0 %v3396
    %3534 = vmatprep.subr.bf16.mxu0 %v3393
    %3535 = vmatpush1.bf16.msra.mxu0 %v3392
    %3536 = vmatprep.subr.bf16.mxu0 %v3453
    %3537 = vmatpush2.bf16.msra.mxu0 %v3452
    %3538 = vmatprep.subr.bf16.mxu0 %v3449
    %3539 = vmatpush2.bf16.msra.mxu0 %v3448
    %3540 = vmatprep.subr.bf16.mxu0 %v3445
    %3541 = vmatpush2.bf16.msra.mxu0 %v3444
    %3542 = vmatprep.subr.bf16.mxu0 %v3441
    %3543 = vmatpush2.bf16.msra.mxu0 %v3440
    %3544 = vmatprep.subr.bf16.mxu0 %v3437
    %3545 = vmatpush2.bf16.msra.mxu0 %v3436
    %3546 = vmatprep.subr.bf16.mxu0 %v3433
    %3547 = vmatpush2.bf16.msra.mxu0 %v3432
    %3548 = vmatprep.subr.bf16.mxu0 %v3429
    %3549 = vmatpush2.bf16.msra.mxu0 %v3428
    %3550 = vmatprep.subr.bf16.mxu0 %v3425
    %3551 = vmatpush2.bf16.msra.mxu0 %v3424
    %3552 = vmatprep.mubr.bf16.mxu0 %v3113
    %3553 = vmatmul.mubr.bf16.gmra.mxu0 %v3112
    %v3554 = vpop.f32.mrf.mxu0
    %v3555 = vadd.f32 %v3183, %v3554
    %v3556 = vpop.f32.mrf.mxu0
    %v3557 = vadd.f32 %v3187, %v3556
    %v3558 = vpop.f32.mrf.mxu0
    %v3559 = vpop.f32.mrf.mxu0
    %3560 = vdwg.mxu0
    %3561 = vmatprep.subr.bf16.mxu0 %v3423
    %3562 = vmatpush1.bf16.msra.mxu0 %v3422
    %3563 = vmatprep.subr.bf16.mxu0 %v3419
    %3564 = vmatpush1.bf16.msra.mxu0 %v3418
    %3565 = vmatprep.subr.bf16.mxu0 %v3415
    %3566 = vmatpush1.bf16.msra.mxu0 %v3414
    %3567 = vmatprep.subr.bf16.mxu0 %v3411
    %3568 = vmatpush1.bf16.msra.mxu0 %v3410
    %3569 = vmatprep.subr.bf16.mxu0 %v3407
    %3570 = vmatpush1.bf16.msra.mxu0 %v3406
    %3571 = vmatprep.subr.bf16.mxu0 %v3403
    %3572 = vmatpush1.bf16.msra.mxu0 %v3402
    %3573 = vmatprep.subr.bf16.mxu0 %v3399
    %3574 = vmatpush1.bf16.msra.mxu0 %v3398
    %3575 = vmatprep.subr.bf16.mxu0 %v3395
    %3576 = vmatpush1.bf16.msra.mxu0 %v3394
    %3577 = vmatprep.subr.bf16.mxu0 %v3455
    %3578 = vmatpush2.bf16.msra.mxu0 %v3454
    %3579 = vmatprep.subr.bf16.mxu0 %v3451
    %3580 = vmatpush2.bf16.msra.mxu0 %v3450
    %3581 = vmatprep.subr.bf16.mxu0 %v3447
    %3582 = vmatpush2.bf16.msra.mxu0 %v3446
    %3583 = vmatprep.subr.bf16.mxu0 %v3443
    %3584 = vmatpush2.bf16.msra.mxu0 %v3442
    %3585 = vmatprep.subr.bf16.mxu0 %v3439
    %3586 = vmatpush2.bf16.msra.mxu0 %v3438
    %3587 = vmatprep.subr.bf16.mxu0 %v3435
    %3588 = vmatpush2.bf16.msra.mxu0 %v3434
    %3589 = vmatprep.subr.bf16.mxu0 %v3431
    %3590 = vmatpush2.bf16.msra.mxu0 %v3430
    %3591 = vmatprep.subr.bf16.mxu0 %v3427
    %3592 = vmatpush2.bf16.msra.mxu0 %v3426
    %3593 = vmatprep.mubr.bf16.mxu0 %v3113
    %3594 = vmatmul.mubr.bf16.gmra.mxu0 %v3112
    %v3595 = vpop.f32.mrf.mxu0
    %v3596 = vadd.f32 %v3191, %v3595
    %v3597 = vpop.f32.mrf.mxu0
    %v3598 = vadd.f32 %v3195, %v3597
    %v3599 = vpop.f32.mrf.mxu0
    %v3600 = vpop.f32.mrf.mxu0
    %3601 = vdwg.mxu0
    %v3602 = vmax.f32 %v3555, 0.0
    %v3603 = vmax.f32 %v3557, 0.0
    %v3604 = vmax.f32 %v3596, 0.0
    %v3605 = vmax.f32 %v3598, 0.0
    %v3606 = vpack.c.bf16 %v3602, %v3602
    %v3607 = vpack.c.bf16 %v3603, %v3603
    %v3608 = vpack.c.bf16 %v3604, %v3604
    %v3609 = vpack.c.bf16 %v3605, %v3605
    %v3610 = vld [vmem:[%s18] sm:$0xf]
    %v3611 = vld [vmem:[%s18 + $0x4] sm:$0xf]
    %v3612 = vld [vmem:[%s18 + $0x8] sm:$0xf]
    %v3613 = vld [vmem:[%s18 + $0xc] sm:$0xf]
    %v3614 = vld [vmem:[%s18 + $0x10] sm:$0xf]
    %v3615 = vld [vmem:[%s18 + $0x14] sm:$0xf]
    %v3616 = vld [vmem:[%s18 + $0x18] sm:$0xf]
    %v3617 = vld [vmem:[%s18 + $0x1c] sm:$0xf]
    %v3618 = vld [vmem:[%s18 + $0x20] sm:$0xf]
    %v3619 = vld [vmem:[%s18 + $0x24] sm:$0xf]
    %v3620 = vld [vmem:[%s18 + $0x28] sm:$0xf]
    %v3621 = vld [vmem:[%s18 + $0x2c] sm:$0xf]
    %v3622 = vld [vmem:[%s18 + $0x30] sm:$0xf]
    %v3623 = vld [vmem:[%s18 + $0x34] sm:$0xf]
    %v3624 = vld [vmem:[%s18 + $0x38] sm:$0xf]
    %v3625 = vld [vmem:[%s18 + $0x3c] sm:$0xf]
    %v3626 = vld [vmem:[%s18 + $0x40] sm:$0xf]
    %v3627 = vld [vmem:[%s18 + $0x44] sm:$0xf]
    %v3628 = vld [vmem:[%s18 + $0x48] sm:$0xf]
    %v3629 = vld [vmem:[%s18 + $0x4c] sm:$0xf]
    %v3630 = vld [vmem:[%s18 + $0x50] sm:$0xf]
    %v3631 = vld [vmem:[%s18 + $0x54] sm:$0xf]
    %v3632 = vld [vmem:[%s18 + $0x58] sm:$0xf]
    %v3633 = vld [vmem:[%s18 + $0x5c] sm:$0xf]
    %v3634 = vld [vmem:[%s18 + $0x60] sm:$0xf]
    %v3635 = vld [vmem:[%s18 + $0x64] sm:$0xf]
    %v3636 = vld [vmem:[%s18 + $0x68] sm:$0xf]
    %v3637 = vld [vmem:[%s18 + $0x6c] sm:$0xf]
    %v3638 = vld [vmem:[%s18 + $0x70] sm:$0xf]
    %v3639 = vld [vmem:[%s18 + $0x74] sm:$0xf]
    %v3640 = vld [vmem:[%s18 + $0x78] sm:$0xf]
    %v3641 = vld [vmem:[%s18 + $0x7c] sm:$0xf]
    %v3642 = vld [vmem:[%s18 + $0x80] sm:$0xf]
    %v3643 = vld [vmem:[%s18 + $0x84] sm:$0xf]
    %v3644 = vld [vmem:[%s18 + $0x88] sm:$0xf]
    %v3645 = vld [vmem:[%s18 + $0x8c] sm:$0xf]
    %v3646 = vld [vmem:[%s18 + $0x90] sm:$0xf]
    %v3647 = vld [vmem:[%s18 + $0x94] sm:$0xf]
    %v3648 = vld [vmem:[%s18 + $0x98] sm:$0xf]
    %v3649 = vld [vmem:[%s18 + $0x9c] sm:$0xf]
    %v3650 = vld [vmem:[%s18 + $0xa0] sm:$0xf]
    %v3651 = vld [vmem:[%s18 + $0xa4] sm:$0xf]
    %v3652 = vld [vmem:[%s18 + $0xa8] sm:$0xf]
    %v3653 = vld [vmem:[%s18 + $0xac] sm:$0xf]
    %v3654 = vld [vmem:[%s18 + $0xb0] sm:$0xf]
    %v3655 = vld [vmem:[%s18 + $0xb4] sm:$0xf]
    %v3656 = vld [vmem:[%s18 + $0xb8] sm:$0xf]
    %v3657 = vld [vmem:[%s18 + $0xbc] sm:$0xf]
    %v3658 = vld [vmem:[%s18 + $0xc0] sm:$0xf]
    %v3659 = vld [vmem:[%s18 + $0xc4] sm:$0xf]
    %v3660 = vld [vmem:[%s18 + $0xc8] sm:$0xf]
    %v3661 = vld [vmem:[%s18 + $0xcc] sm:$0xf]
    %v3662 = vld [vmem:[%s18 + $0xd0] sm:$0xf]
    %v3663 = vld [vmem:[%s18 + $0xd4] sm:$0xf]
    %v3664 = vld [vmem:[%s18 + $0xd8] sm:$0xf]
    %v3665 = vld [vmem:[%s18 + $0xdc] sm:$0xf]
    %v3666 = vld [vmem:[%s18 + $0xe0] sm:$0xf]
    %v3667 = vld [vmem:[%s18 + $0xe4] sm:$0xf]
    %v3668 = vld [vmem:[%s18 + $0xe8] sm:$0xf]
    %v3669 = vld [vmem:[%s18 + $0xec] sm:$0xf]
    %v3670 = vld [vmem:[%s18 + $0xf0] sm:$0xf]
    %v3671 = vld [vmem:[%s18 + $0xf4] sm:$0xf]
    %v3672 = vld [vmem:[%s18 + $0xf8] sm:$0xf]
    %v3673 = vld [vmem:[%s18 + $0xfc] sm:$0xf]
    %v3674 = vld [vmem:[%s19] sm:$0x1]
    %v3676 = vlaneseq
    %v3677 = vshrl.u32 %v3676, 7
    %v3678 = vsub.s32 0, %v3677
    %v3679 = vrot.slane %v3674, %v3678
    %v3745 = vunpack.c.l.b16 %v3610
    %v3746 = vunpack.c.l.b16 %v3611
    %v3747 = vunpack.c.l.b16 %v3612
    %v3748 = vunpack.c.l.b16 %v3613
    %v3749 = vunpack.c.l.b16 %v3614
    %v3750 = vunpack.c.l.b16 %v3615
    %v3751 = vunpack.c.l.b16 %v3616
    %v3752 = vunpack.c.l.b16 %v3617
    %v3753 = vunpack.c.l.b16 %v3618
    %v3754 = vunpack.c.l.b16 %v3619
    %v3755 = vunpack.c.l.b16 %v3620
    %v3756 = vunpack.c.l.b16 %v3621
    %v3757 = vunpack.c.l.b16 %v3622
    %v3758 = vunpack.c.l.b16 %v3623
    %v3759 = vunpack.c.l.b16 %v3624
    %v3760 = vunpack.c.l.b16 %v3625
    %v3761 = vunpack.c.l.b16 %v3626
    %v3762 = vunpack.c.l.b16 %v3627
    %v3763 = vunpack.c.l.b16 %v3628
    %v3764 = vunpack.c.l.b16 %v3629
    %v3765 = vunpack.c.l.b16 %v3630
    %v3766 = vunpack.c.l.b16 %v3631
    %v3767 = vunpack.c.l.b16 %v3632
    %v3768 = vunpack.c.l.b16 %v3633
    %v3769 = vunpack.c.l.b16 %v3634
    %v3770 = vunpack.c.l.b16 %v3635
    %v3771 = vunpack.c.l.b16 %v3636
    %v3772 = vunpack.c.l.b16 %v3637
    %v3773 = vunpack.c.l.b16 %v3638
    %v3774 = vunpack.c.l.b16 %v3639
    %v3775 = vunpack.c.l.b16 %v3640
    %v3776 = vunpack.c.l.b16 %v3641
    %v3777 = vunpack.c.l.b16 %v3642
    %v3778 = vunpack.c.l.b16 %v3643
    %v3779 = vunpack.c.l.b16 %v3644
    %v3780 = vunpack.c.l.b16 %v3645
    %v3781 = vunpack.c.l.b16 %v3646
    %v3782 = vunpack.c.l.b16 %v3647
    %v3783 = vunpack.c.l.b16 %v3648
    %v3784 = vunpack.c.l.b16 %v3649
    %v3785 = vunpack.c.l.b16 %v3650
    %v3786 = vunpack.c.l.b16 %v3651
    %v3787 = vunpack.c.l.b16 %v3652
    %v3788 = vunpack.c.l.b16 %v3653
    %v3789 = vunpack.c.l.b16 %v3654
    %v3790 = vunpack.c.l.b16 %v3655
    %v3791 = vunpack.c.l.b16 %v3656
    %v3792 = vunpack.c.l.b16 %v3657
    %v3793 = vunpack.c.l.b16 %v3658
    %v3794 = vunpack.c.l.b16 %v3659
    %v3795 = vunpack.c.l.b16 %v3660
    %v3796 = vunpack.c.l.b16 %v3661
    %v3797 = vunpack.c.l.b16 %v3662
    %v3798 = vunpack.c.l.b16 %v3663
    %v3799 = vunpack.c.l.b16 %v3664
    %v3800 = vunpack.c.l.b16 %v3665
    %v3801 = vunpack.c.l.b16 %v3666
    %v3802 = vunpack.c.l.b16 %v3667
    %v3803 = vunpack.c.l.b16 %v3668
    %v3804 = vunpack.c.l.b16 %v3669
    %v3805 = vunpack.c.l.b16 %v3670
    %v3806 = vunpack.c.l.b16 %v3671
    %v3807 = vunpack.c.l.b16 %v3672
    %v3808 = vunpack.c.l.b16 %v3673
    %v3809 = vpack.c.b16 %v3746, %v3745
    %v3810 = vpack.c.b16 %v3748, %v3747
    %v3811 = vpack.c.b16 %v3750, %v3749
    %v3812 = vpack.c.b16 %v3752, %v3751
    %v3813 = vpack.c.b16 %v3754, %v3753
    %v3814 = vpack.c.b16 %v3756, %v3755
    %v3815 = vpack.c.b16 %v3758, %v3757
    %v3816 = vpack.c.b16 %v3760, %v3759
    %v3817 = vpack.c.b16 %v3762, %v3761
    %v3818 = vpack.c.b16 %v3764, %v3763
    %v3819 = vpack.c.b16 %v3766, %v3765
    %v3820 = vpack.c.b16 %v3768, %v3767
    %v3821 = vpack.c.b16 %v3770, %v3769
    %v3822 = vpack.c.b16 %v3772, %v3771
    %v3823 = vpack.c.b16 %v3774, %v3773
    %v3824 = vpack.c.b16 %v3776, %v3775
    %v3825 = vpack.c.b16 %v3778, %v3777
    %v3826 = vpack.c.b16 %v3780, %v3779
    %v3827 = vpack.c.b16 %v3782, %v3781
    %v3828 = vpack.c.b16 %v3784, %v3783
    %v3829 = vpack.c.b16 %v3786, %v3785
    %v3830 = vpack.c.b16 %v3788, %v3787
    %v3831 = vpack.c.b16 %v3790, %v3789
    %v3832 = vpack.c.b16 %v3792, %v3791
    %v3833 = vpack.c.b16 %v3794, %v3793
    %v3834 = vpack.c.b16 %v3796, %v3795
    %v3835 = vpack.c.b16 %v3798, %v3797
    %v3836 = vpack.c.b16 %v3800, %v3799
    %v3837 = vpack.c.b16 %v3802, %v3801
    %v3838 = vpack.c.b16 %v3804, %v3803
    %v3839 = vpack.c.b16 %v3806, %v3805
    %v3840 = vpack.c.b16 %v3808, %v3807
    %3873 = vmatprep.subr.bf16.mxu0 0
    %3874 = vmatpush1.bf16.msra.mxu0 %v3816
    %3875 = vmatprep.subr.bf16.mxu0 0
    %3876 = vmatpush1.bf16.msra.mxu0 %v3815
    %3877 = vmatprep.subr.bf16.mxu0 0
    %3878 = vmatpush1.bf16.msra.mxu0 %v3814
    %3879 = vmatprep.subr.bf16.mxu0 0
    %3880 = vmatpush1.bf16.msra.mxu0 %v3813
    %3881 = vmatprep.subr.bf16.mxu0 0
    %3882 = vmatpush1.bf16.msra.mxu0 %v3812
    %3883 = vmatprep.subr.bf16.mxu0 0
    %3884 = vmatpush1.bf16.msra.mxu0 %v3811
    %3885 = vmatprep.subr.bf16.mxu0 0
    %3886 = vmatpush1.bf16.msra.mxu0 %v3810
    %3887 = vmatprep.subr.bf16.mxu0 0
    %3888 = vmatpush1.bf16.msra.mxu0 %v3809
    %3889 = vmatprep.subr.bf16.mxu0 0
    %3890 = vmatpush2.bf16.msra.mxu0 %v3824
    %3891 = vmatprep.subr.bf16.mxu0 0
    %3892 = vmatpush2.bf16.msra.mxu0 %v3823
    %3893 = vmatprep.subr.bf16.mxu0 0
    %3894 = vmatpush2.bf16.msra.mxu0 %v3822
    %3895 = vmatprep.subr.bf16.mxu0 0
    %3896 = vmatpush2.bf16.msra.mxu0 %v3821
    %3897 = vmatprep.subr.bf16.mxu0 0
    %3898 = vmatpush2.bf16.msra.mxu0 %v3820
    %3899 = vmatprep.subr.bf16.mxu0 0
    %3900 = vmatpush2.bf16.msra.mxu0 %v3819
    %3901 = vmatprep.subr.bf16.mxu0 0
    %3902 = vmatpush2.bf16.msra.mxu0 %v3818
    %3903 = vmatprep.subr.bf16.mxu0 0
    %3904 = vmatpush2.bf16.msra.mxu0 %v3817
    %3905 = vmatprep.mubr.bf16.mxu0 %v3607
    %3906 = vmatmul.mubr.bf16.gmra.mxu0 %v3606
    %v3907 = vpop.f32.mrf.mxu0
    %v3908 = vadd.f32 %v3679, %v3907
    %v3909 = vpop.f32.mrf.mxu0
    %v3910 = vpop.f32.mrf.mxu0
    %v3911 = vpop.f32.mrf.mxu0
    %3912 = vdwg.mxu0
    %3913 = vmatprep.subr.bf16.mxu0 0
    %3914 = vmatpush1.bf16.msra.mxu0 %v3832
    %3915 = vmatprep.subr.bf16.mxu0 0
    %3916 = vmatpush1.bf16.msra.mxu0 %v3831
    %3917 = vmatprep.subr.bf16.mxu0 0
    %3918 = vmatpush1.bf16.msra.mxu0 %v3830
    %3919 = vmatprep.subr.bf16.mxu0 0
    %3920 = vmatpush1.bf16.msra.mxu0 %v3829
    %3921 = vmatprep.subr.bf16.mxu0 0
    %3922 = vmatpush1.bf16.msra.mxu0 %v3828
    %3923 = vmatprep.subr.bf16.mxu0 0
    %3924 = vmatpush1.bf16.msra.mxu0 %v3827
    %3925 = vmatprep.subr.bf16.mxu0 0
    %3926 = vmatpush1.bf16.msra.mxu0 %v3826
    %3927 = vmatprep.subr.bf16.mxu0 0
    %3928 = vmatpush1.bf16.msra.mxu0 %v3825
    %3929 = vmatprep.subr.bf16.mxu0 0
    %3930 = vmatpush2.bf16.msra.mxu0 %v3840
    %3931 = vmatprep.subr.bf16.mxu0 0
    %3932 = vmatpush2.bf16.msra.mxu0 %v3839
    %3933 = vmatprep.subr.bf16.mxu0 0
    %3934 = vmatpush2.bf16.msra.mxu0 %v3838
    %3935 = vmatprep.subr.bf16.mxu0 0
    %3936 = vmatpush2.bf16.msra.mxu0 %v3837
    %3937 = vmatprep.subr.bf16.mxu0 0
    %3938 = vmatpush2.bf16.msra.mxu0 %v3836
    %3939 = vmatprep.subr.bf16.mxu0 0
    %3940 = vmatpush2.bf16.msra.mxu0 %v3835
    %3941 = vmatprep.subr.bf16.mxu0 0
    %3942 = vmatpush2.bf16.msra.mxu0 %v3834
    %3943 = vmatprep.subr.bf16.mxu0 0
    %3944 = vmatpush2.bf16.msra.mxu0 %v3833
    %3945 = vmatprep.mubr.bf16.mxu0 %v3609
    %3946 = vmatmul.mubr.bf16.gmra.mxu0 %v3608
    %v3947 = vpop.f32.mrf.mxu0
    %v3948 = vadd.f32 %v3908, %v3947
    %v3949 = vpop.f32.mrf.mxu0
    %v3950 = vpop.f32.mrf.mxu0
    %v3951 = vpop.f32.mrf.mxu0
    %3952 = vdwg.mxu0
    %3953 = vst [vmem:[#allocation2] sm:$0x3] %v3948
    // Predicated region
    $region82: #{relation_net_forward.1} parent=1 // pred_check
      _
    $region83: #{relation_net_forward.1} parent=1 // pred_check_branch
      %3955 = sbr.rel (0) target = $region85
    $region84: #{relation_net_forward.1} parent=1 // pred_region
      %s3957 = ssub.s32 32, 32
      %3958 = vsyncadd [#allocation3], %s3957
      %s3960 = sshll.u32 [#allocation2], 4
      %s3961 = int_to_ptr.vmem [resolvable:$true] %s3960
      %3963 = dma.vmem_to_hbm [thread:$0]  %s3961, 32, %s20, [#allocation3]
    $region85: #{relation_net_forward.1} parent=1 // pred_fallthru
      _
    // Predicated region
    $region86: #{relation_net_forward.1} parent=1 // pred_check
      _
    $region87: #{relation_net_forward.1} parent=1 // pred_check_branch
      %3965 = sbr.rel (0) target = $region89
    $region88: #{relation_net_forward.1} parent=1 // pred_region
      %3966 = dma.done [#allocation3], 32
    $region89: #{relation_net_forward.1} parent=1 // pred_fallthru
      _
    %3967 = vsyncpa [#allocation3], 1

</llo_original>
